<compile_context>
chip_gen: v7x
topology: tpu7x:2x2x1
jax: 0.10.0
libtpu: 0.0.40
codegen_flags: <defaults>
</compile_context>

<pallas_src>
import functools

import jax
import jax.numpy as jnp
from jax import lax
from jax.experimental import pallas as pl
from jax.experimental.pallas import tpu as pltpu

LANE = 128
_BN_EPS = 1e-5
_VMEM_LIMIT = 48 * 1024 * 1024   # explicit scoped-VMEM limit, safe on v5e/v6e/v7x


def _ceil_to(v, m):
    return ((v + m - 1) // m) * m


def _pad_axis(a, axis, new_size, value=0.0):
    pad = new_size - a.shape[axis]
    if pad == 0:
        return a
    widths = [(0, 0)] * a.ndim
    widths[axis] = (0, pad)
    return jnp.pad(a, widths, constant_values=value)


def _pick_tm(n_p, cin_p, cout_p, budget=30 * 1024 * 1024):
    """Largest row tile (multiple of 128 dividing n_p) whose per-step working
    set (double-buffered adj tile + resident x + y tile + weights) fits budget."""
    for tm in (1024, 512, 256, 128):
        if n_p % tm:
            continue
        est = (2 * tm * n_p * 2          # adj row tile, bf16, double buffered
               + 2 * n_p * cin_p * 2     # resident activations, bf16
               + 2 * tm * cout_p * 2     # y row tile, bf16
               + 2 * tm * LANE * 4       # rowsum tile (lane-padded f32)
               + 4 * cin_p * cout_p * 2  # W_rel + W_root, bf16
               + 4 * tm * cout_p * 4)    # f32 intermediates headroom
        if est <= budget:
            return tm
    return 128


# ---------------------------------------------------------------------------
# Kernel 1: [producer-BN affine] + DenseSAGEConv + ReLU + BN partial sums.
# Grid = (batch, node-row-tile); both axes "parallel".
# ---------------------------------------------------------------------------
def _sage_conv_relu_stats_kernel(adj_ref, rs_ref, x_ref, scale_ref, shift_ref,
                                 wrel_ref, wroot_ref, bias_ref,
                                 y_ref, s1_ref, s2_ref, *, tm, n_real):
    m = pl.program_id(1)
    row0 = pl.multiple_of(m * tm, tm)

    scale = scale_ref[...]                                    # (1, C) f32
    shift = shift_ref[...]                                    # (1, C) f32

    # Aggregation path. The per-channel producer-BN affine commutes with the
    # row-mixing matmul: adj_n @ (x*a + 1 t) == (adj_n @ x)*a + rowsum(adj_n)*t,
    # so the raw bf16 activations go straight to the MXU and the affine is
    # fixed up with the precomputed rowsum (== deg/clamp(deg,1); 0 on padding).
    aggx = jnp.dot(adj_ref[...], x_ref[...],
                   preferred_element_type=jnp.float32)        # (TM, C) f32
    agg = aggx * scale + rs_ref[...] * shift                  # (TM, C)

    # Root path: only this row tile's activations, affine applied directly.
    xt = x_ref[pl.ds(row0, tm), :].astype(jnp.float32) * scale + shift

    # Two accumulating MXU dots (no (TM, 2C) concat materialized).
    out = (jnp.dot(agg.astype(jnp.bfloat16), wrel_ref[...],
                   preferred_element_type=jnp.float32)
           + jnp.dot(xt.astype(jnp.bfloat16), wroot_ref[...],
                     preferred_element_type=jnp.float32)
           + bias_ref[...])
    y = jnp.maximum(out, 0.0)                                 # fused .relu()

    y_ref[...] = y.astype(y_ref.dtype)                        # bf16 activation store

    # Per-row-tile BatchNorm partial sums, padded node rows masked out
    # (taken from the f32 values, before the bf16 cast).
    rows = row0 + lax.broadcasted_iota(jnp.int32, y.shape, 0)
    valid = jnp.where(rows < n_real, 1.0, 0.0)
    ym = y * valid
    s1_ref[...] = jnp.sum(ym, axis=0, keepdims=True)
    s2_ref[...] = jnp.sum(ym * y, axis=0, keepdims=True)


def dense_sage_conv_relu_stats(adj_norm, rs, x, scale, shift, w_rel, w_root,
                               bias, *, tm, n_real):
    B, n_p, C = x.shape
    Hp = w_rel.shape[1]
    n_tiles = n_p // tm
    kernel = functools.partial(_sage_conv_relu_stats_kernel, tm=tm, n_real=n_real)
    return pl.pallas_call(
        kernel,
        out_shape=(jax.ShapeDtypeStruct((B, n_p, Hp), jnp.bfloat16),
                   jax.ShapeDtypeStruct((B * n_tiles, 1, Hp), jnp.float32),
                   jax.ShapeDtypeStruct((B * n_tiles, 1, Hp), jnp.float32)),
        grid=(B, n_tiles),
        in_specs=[
            pl.BlockSpec((None, tm, n_p), lambda b, m: (b, m, 0)),   # adj_norm row tile (bf16)
            pl.BlockSpec((None, tm, 1), lambda b, m: (b, m, 0)),     # rowsum(adj_norm) tile
            pl.BlockSpec((None, n_p, C), lambda b, m: (b, 0, 0)),    # activations (resident over m)
            pl.BlockSpec((1, C), lambda b, m: (0, 0)),               # producer BN scale
            pl.BlockSpec((1, C), lambda b, m: (0, 0)),               # producer BN shift
            pl.BlockSpec((C, Hp), lambda b, m: (0, 0)),              # W_rel (bf16)
            pl.BlockSpec((C, Hp), lambda b, m: (0, 0)),              # W_root (bf16)
            pl.BlockSpec((1, Hp), lambda b, m: (0, 0)),              # bias
        ],
        out_specs=(
            pl.BlockSpec((None, tm, Hp), lambda b, m: (b, m, 0)),
            pl.BlockSpec((None, 1, Hp), lambda b, m: (b * n_tiles + m, 0, 0)),
            pl.BlockSpec((None, 1, Hp), lambda b, m: (b * n_tiles + m, 0, 0)),
        ),
        compiler_params=pltpu.CompilerParams(
            dimension_semantics=("parallel", "parallel"),
            vmem_limit_bytes=_VMEM_LIMIT),
    )(adj_norm, rs, x, scale, shift, w_rel, w_root, bias)


# ---------------------------------------------------------------------------
# Kernel 2: final Linear + ReLU with the concat AND the three BN affines fused
# (three accumulating dots against row-slices of the linear weight).
# ---------------------------------------------------------------------------
def _fused_bn_linear_relu_kernel(x1_ref, a1_ref, t1_ref, x2_ref, a2_ref, t2_ref,
                                 x3_ref, a3_ref, t3_ref, w1_ref, w2_ref, w3_ref,
                                 bias_ref, o_ref):
    def term(xr, ar, tr, wr):
        xn = (xr[...].astype(jnp.float32) * ar[...] + tr[...]).astype(jnp.bfloat16)
        return jnp.dot(xn, wr[...], preferred_element_type=jnp.float32)

    acc = term(x1_ref, a1_ref, t1_ref, w1_ref)
    acc = acc + term(x2_ref, a2_ref, t2_ref, w2_ref)
    acc = acc + term(x3_ref, a3_ref, t3_ref, w3_ref)
    o_ref[...] = jnp.maximum(acc + bias_ref[...], 0.0)


def fused_bn_linear_relu(xs, scales, shifts, ws, bias, *, tm):
    (x1, x2, x3), (a1, a2, a3), (t1, t2, t3), (w1, w2, w3) = xs, scales, shifts, ws
    B, n_p, H1 = x1.shape
    H2, H3 = x2.shape[-1], x3.shape[-1]
    Op = w1.shape[1]
    n_tiles = n_p // tm
    return pl.pallas_call(
        _fused_bn_linear_relu_kernel,
        out_shape=jax.ShapeDtypeStruct((B, n_p, Op), jnp.float32),
        grid=(B, n_tiles),
        in_specs=[
            pl.BlockSpec((None, tm, H1), lambda b, m: (b, m, 0)),
            pl.BlockSpec((1, H1), lambda b, m: (0, 0)),
            pl.BlockSpec((1, H1), lambda b, m: (0, 0)),
            pl.BlockSpec((None, tm, H2), lambda b, m: (b, m, 0)),
            pl.BlockSpec((1, H2), lambda b, m: (0, 0)),
            pl.BlockSpec((1, H2), lambda b, m: (0, 0)),
            pl.BlockSpec((None, tm, H3), lambda b, m: (b, m, 0)),
            pl.BlockSpec((1, H3), lambda b, m: (0, 0)),
            pl.BlockSpec((1, H3), lambda b, m: (0, 0)),
            pl.BlockSpec((H1, Op), lambda b, m: (0, 0)),
            pl.BlockSpec((H2, Op), lambda b, m: (0, 0)),
            pl.BlockSpec((H3, Op), lambda b, m: (0, 0)),
            pl.BlockSpec((1, Op), lambda b, m: (0, 0)),
        ],
        out_specs=pl.BlockSpec((None, tm, Op), lambda b, m: (b, m, 0)),
        compiler_params=pltpu.CompilerParams(
            dimension_semantics=("parallel", "parallel"),
            vmem_limit_bytes=_VMEM_LIMIT),
    )(x1, a1, t1, x2, a2, t2, x3, a3, t3, w1, w2, w3, bias)


# ---------------------------------------------------------------------------
# BN statistics finisher: tiny reduction in XLA, biased variance, eps=1e-5.
# ---------------------------------------------------------------------------
def _bn_scale_shift(ssum, ssq, count, gamma_p, beta_p):
    s = jnp.sum(ssum, axis=(0, 1))
    sq = jnp.sum(ssq, axis=(0, 1))
    mean = s / count
    var = jnp.maximum(sq / count - mean * mean, 0.0)
    inv = lax.rsqrt(var + _BN_EPS)
    scale = gamma_p * inv
    shift = beta_p - mean * scale
    return scale.reshape(1, -1), shift.reshape(1, -1)


# ---------------------------------------------------------------------------
# Parameters: original shapes first, then device-ready padded form.
# ---------------------------------------------------------------------------
def init_params(key, in_channels, hidden_channels, out_channels):
    ks = jax.random.split(key, 8)

    def lin_w(k, fan_in, fan_out):
        return (jax.random.normal(k, (fan_in, fan_out), jnp.float32)
                / jnp.sqrt(jnp.float32(fan_in)))

    lin_in = 2 * hidden_channels + out_channels
    return {
        # each conv: (W_rel (Cin,Cout), b (Cout,), W_root (Cin,Cout))
        "conv1": (lin_w(ks[0], in_channels, hidden_channels),
                  jnp.zeros((hidden_channels,), jnp.float32),
                  lin_w(ks[1], in_channels, hidden_channels)),
        "conv2": (lin_w(ks[2], hidden_channels, hidden_channels),
                  jnp.zeros((hidden_channels,), jnp.float32),
                  lin_w(ks[3], hidden_channels, hidden_channels)),
        "conv3": (lin_w(ks[4], hidden_channels, out_channels),
                  jnp.zeros((out_channels,), jnp.float32),
                  lin_w(ks[5], hidden_channels, out_channels)),
        "bn1": (jnp.ones((hidden_channels,), jnp.float32),
                jnp.zeros((hidden_channels,), jnp.float32)),
        "bn2": (jnp.ones((hidden_channels,), jnp.float32),
                jnp.zeros((hidden_channels,), jnp.float32)),
        "bn3": (jnp.ones((out_channels,), jnp.float32),
                jnp.zeros((out_channels,), jnp.float32)),
        "lin": (lin_w(ks[6], lin_in, out_channels),
                jax.random.normal(ks[7], (out_channels,), jnp.float32) * 0.01),
    }


def prepare_params(params, in_channels, hidden_channels, out_channels):
    """Pad channel dims to lane-dense multiples of 128; bf16 weights; split lin W."""
    cin_p = _ceil_to(in_channels, LANE)
    h_p = _ceil_to(hidden_channels, LANE)
    o_p = _ceil_to(out_channels, LANE)

    def conv_pack(w_rel, b, w_root, ci_p, co_p):
        wr = _pad_axis(_pad_axis(w_rel, 0, ci_p), 1, co_p).astype(jnp.bfloat16)
        wt = _pad_axis(_pad_axis(w_root, 0, ci_p), 1, co_p).astype(jnp.bfloat16)
        bias = _pad_axis(b, 0, co_p).reshape(1, co_p)
        return wr, wt, bias

    def bn_pack(gamma, beta, co_p):
        return (_pad_axis(gamma, 0, co_p, value=1.0),
                _pad_axis(beta, 0, co_p, value=0.0))

    h = hidden_channels
    w_lin, b_lin = params["lin"]
    pack_w = lambda w, ci_p: _pad_axis(_pad_axis(w, 0, ci_p), 1, o_p).astype(jnp.bfloat16)

    return {
        "conv1": conv_pack(*params["conv1"], cin_p, h_p),
        "conv2": conv_pack(*params["conv2"], h_p, h_p),
        "conv3": conv_pack(*params["conv3"], h_p, o_p),
        "bn1": bn_pack(*params["bn1"], h_p),
        "bn2": bn_pack(*params["bn2"], h_p),
        "bn3": bn_pack(*params["bn3"], o_p),
        "lin": (pack_w(w_lin[:h], h_p), pack_w(w_lin[h:2 * h], h_p),
                pack_w(w_lin[2 * h:], o_p), _pad_axis(b_lin, 0, o_p).reshape(1, o_p)),
    }


# ---------------------------------------------------------------------------
# Full forward (mask=None path of GCN.forward, dense adjacency).
# ---------------------------------------------------------------------------
def gcn_forward(prep, x, adj, out_channels):
    B, N, _ = x.shape
    cin_p = prep["conv1"][0].shape[0]
    h_p = prep["conv2"][0].shape[0]
    o_p = prep["conv3"][0].shape[1]
    n_p = _ceil_to(N, LANE)                        # tile/lane-dense node count

    # One-time preprocessing shared by all three conv layers:
    #   (adj @ x)/clamp(deg,1) == (adj/clamp(deg,1)) @ x ; cast the (B,N,N)
    #   stream to bf16; keep rowsum(adj_norm) (= deg/clamp(deg,1), 0 on padded
    #   or isolated rows) so the producer-BN shift folds into the aggregation.
    deg = jnp.sum(adj, axis=-1, keepdims=True)
    inv = 1.0 / jnp.maximum(deg, 1.0)
    adj_norm = _pad_axis(_pad_axis((adj * inv).astype(jnp.bfloat16), 1, n_p), 2, n_p)
    rs = _pad_axis(deg * inv, 1, n_p)                              # (B, n_p, 1) f32
    x0 = _pad_axis(_pad_axis(x, 2, cin_p), 1, n_p).astype(jnp.bfloat16)

    tm = _pick_tm(n_p, max(cin_p, h_p), max(h_p, o_p))
    conv = functools.partial(dense_sage_conv_relu_stats, tm=tm, n_real=N)

    count = jnp.float32(B * N)                     # real node count only
    id_scale = jnp.ones((1, cin_p), jnp.float32)
    id_shift = jnp.zeros((1, cin_p), jnp.float32)

    # Layer 1 (no producer BN -> identity affine).
    y1, s1, q1 = conv(adj_norm, rs, x0, id_scale, id_shift, *prep["conv1"])
    sc1, sh1 = _bn_scale_shift(s1, q1, count, *prep["bn1"])

    # Layers 2/3: the previous layer's BN is applied inside the consumer kernel.
    y2, s2, q2 = conv(adj_norm, rs, y1, sc1, sh1, *prep["conv2"])
    sc2, sh2 = _bn_scale_shift(s2, q2, count, *prep["bn2"])

    y3, s3, q3 = conv(adj_norm, rs, y2, sc2, sh2, *prep["conv3"])
    sc3, sh3 = _bn_scale_shift(s3, q3, count, *prep["bn3"])

    # cat([x1, x2, x3], -1) -> Linear -> relu, concat + all three BNs fused in.
    w1, w2, w3, b = prep["lin"]
    out_p = fused_bn_linear_relu((y1, y2, y3), (sc1, sc2, sc3), (sh1, sh2, sh3),
                                 (w1, w2, w3), b, tm=tm)
    return out_p[:, :N, :out_channels]             # drop node/channel padding


if __name__ == "__main__":
    B, N = 2, 8                          # batch of dense graphs, 8 nodes each
    in_c, hid_c, out_c = 4, 32, 16

    key = jax.random.PRNGKey(0)
    kx, ka, kp = jax.random.split(key, 3)

    x = jax.random.normal(kx, (B, N, in_c), jnp.float32)
    adj = (jax.random.uniform(ka, (B, N, N)) > 0.5).astype(jnp.float32)
    adj = jnp.maximum(adj, jnp.swapaxes(adj, 1, 2))   # symmetric dense adjacency

    params = init_params(kp, in_c, hid_c, out_c)
    prep = prepare_params(params, in_c, hid_c, out_c)

    fwd = jax.jit(functools.partial(gcn_forward, out_channels=out_c))
    out = fwd(prep, x, adj)
    jax.block_until_ready(out)
    assert out.shape == (B, N, out_c) and out.dtype == jnp.float32
    print("KERNEL_OK")
</pallas_src>

<mosaic_0001>
module attributes {stable_mosaic.version = 11 : i64} {
  func.func @_sage_conv_relu_stats_kernel(%arg0: i32, %arg1: i32, %arg2: memref<1x128x128xbf16, #tpu.memory_space<vmem>>, %arg3: memref<1x128x1xf32, #tpu.memory_space<vmem>>, %arg4: memref<1x128x128xbf16, #tpu.memory_space<vmem>>, %arg5: memref<1x128xf32, #tpu.memory_space<vmem>>, %arg6: memref<1x128xf32, #tpu.memory_space<vmem>>, %arg7: memref<128x128xbf16, #tpu.memory_space<vmem>>, %arg8: memref<128x128xbf16, #tpu.memory_space<vmem>>, %arg9: memref<1x128xf32, #tpu.memory_space<vmem>>, %arg10: memref<1x128x128xbf16, #tpu.memory_space<vmem>>, %arg11: memref<1x1x128xf32, #tpu.memory_space<vmem>>, %arg12: memref<1x1x128xf32, #tpu.memory_space<vmem>>) attributes {dimension_semantics = [#tpu.dimension_semantics<parallel>, #tpu.dimension_semantics<parallel>], iteration_bounds = array<i64: 2, 1>, scalar_prefetch = 0 : i64, scratch_operands = 0 : i64, tpu.core_type = #tpu.core_type<tc>, window_params = [{transform_indices = @transform_0, window_bounds = array<i64: 1, 128, 128>}, {transform_indices = @transform_1, window_bounds = array<i64: 1, 128, 1>}, {transform_indices = @transform_2, window_bounds = array<i64: 1, 128, 128>}, {pipeline_mode = #tpu.pipeline_mode<synchronous>, transform_indices = @transform_3, window_bounds = array<i64: 1, 128>}, {pipeline_mode = #tpu.pipeline_mode<synchronous>, transform_indices = @transform_4, window_bounds = array<i64: 1, 128>}, {pipeline_mode = #tpu.pipeline_mode<synchronous>, transform_indices = @transform_5, window_bounds = array<i64: 128, 128>}, {pipeline_mode = #tpu.pipeline_mode<synchronous>, transform_indices = @transform_6, window_bounds = array<i64: 128, 128>}, {pipeline_mode = #tpu.pipeline_mode<synchronous>, transform_indices = @transform_7, window_bounds = array<i64: 1, 128>}, {transform_indices = @transform_8, window_bounds = array<i64: 1, 128, 128>}, {transform_indices = @transform_9, window_bounds = array<i64: 1, 1, 128>}, {transform_indices = @transform_10, window_bounds = array<i64: 1, 1, 128>}]} {
    %c128_i32 = arith.constant 128 : i32
    %0 = arith.muli %arg1, %c128_i32 : i32
    %1 = tpu.assume_multiple %0, 128 : i32
    %c0 = arith.constant 0 : index
    %c0_0 = arith.constant 0 : index
    %2 = vector.load %arg5[%c0, %c0_0] : memref<1x128xf32, #tpu.memory_space<vmem>>, vector<1x128xf32>
    %c0_1 = arith.constant 0 : index
    %c0_2 = arith.constant 0 : index
    %3 = vector.load %arg6[%c0_1, %c0_2] : memref<1x128xf32, #tpu.memory_space<vmem>>, vector<1x128xf32>
    %c0_3 = arith.constant 0 : index
    %c0_4 = arith.constant 0 : index
    %c0_5 = arith.constant 0 : index
    %4 = vector.load %arg2[%c0_3, %c0_4, %c0_5] : memref<1x128x128xbf16, #tpu.memory_space<vmem>>, vector<1x128x128xbf16>
    %5 = vector.shape_cast %4 : vector<1x128x128xbf16> to vector<128x128xbf16>
    %c0_6 = arith.constant 0 : index
    %c0_7 = arith.constant 0 : index
    %c0_8 = arith.constant 0 : index
    %6 = vector.load %arg4[%c0_6, %c0_7, %c0_8] : memref<1x128x128xbf16, #tpu.memory_space<vmem>>, vector<1x128x128xbf16>
    %7 = vector.shape_cast %6 : vector<1x128x128xbf16> to vector<128x128xbf16>
    %cst = arith.constant dense<0.000000e+00> : vector<128x128xf32>
    %8 = tpu.matmul %5, %7, %cst {dimension_numbers = #tpu.dot_dimension_numbers<[1], [0], [0], [1], [0, 0, 1, 1], [], []>} : vector<128x128xbf16>, vector<128x128xbf16>, vector<128x128xf32> -> vector<128x128xf32>
    %9 = vector.broadcast %2 : vector<1x128xf32> to vector<128x128xf32>
    %10 = arith.mulf %8, %9 : vector<128x128xf32>
    %c0_9 = arith.constant 0 : index
    %c0_10 = arith.constant 0 : index
    %c0_11 = arith.constant 0 : index
    %11 = vector.load %arg3[%c0_9, %c0_10, %c0_11] : memref<1x128x1xf32, #tpu.memory_space<vmem>>, vector<1x128x1xf32>
    %12 = vector.shape_cast %11 : vector<1x128x1xf32> to vector<128x1xf32>
    %13 = vector.broadcast %12 : vector<128x1xf32> to vector<128x128xf32>
    %14 = vector.broadcast %3 : vector<1x128xf32> to vector<128x128xf32>
    %15 = arith.mulf %13, %14 : vector<128x128xf32>
    %16 = arith.addf %10, %15 : vector<128x128xf32>
    %c0_12 = arith.constant 0 : index
    %17 = arith.index_cast %1 : i32 to index
    %c0_13 = arith.constant 0 : index
    %18 = vector.load %arg4[%c0_12, %17, %c0_13] : memref<1x128x128xbf16, #tpu.memory_space<vmem>>, vector<1x128x128xbf16>
    %19 = vector.shape_cast %18 : vector<1x128x128xbf16> to vector<128x128xbf16>
    %20 = arith.extf %19 : vector<128x128xbf16> to vector<128x128xf32>
    %21 = vector.broadcast %2 : vector<1x128xf32> to vector<128x128xf32>
    %22 = arith.mulf %20, %21 : vector<128x128xf32>
    %23 = vector.broadcast %3 : vector<1x128xf32> to vector<128x128xf32>
    %24 = arith.addf %22, %23 : vector<128x128xf32>
    %25 = arith.truncf %16 : vector<128x128xf32> to vector<128x128xbf16>
    %c0_14 = arith.constant 0 : index
    %c0_15 = arith.constant 0 : index
    %26 = vector.load %arg7[%c0_14, %c0_15] : memref<128x128xbf16, #tpu.memory_space<vmem>>, vector<128x128xbf16>
    %cst_16 = arith.constant dense<0.000000e+00> : vector<128x128xf32>
    %27 = tpu.matmul %25, %26, %cst_16 {dimension_numbers = #tpu.dot_dimension_numbers<[1], [0], [0], [1], [0, 0, 1, 1], [], []>} : vector<128x128xbf16>, vector<128x128xbf16>, vector<128x128xf32> -> vector<128x128xf32>
    %28 = arith.truncf %24 : vector<128x128xf32> to vector<128x128xbf16>
    %c0_17 = arith.constant 0 : index
    %c0_18 = arith.constant 0 : index
    %29 = vector.load %arg8[%c0_17, %c0_18] : memref<128x128xbf16, #tpu.memory_space<vmem>>, vector<128x128xbf16>
    %cst_19 = arith.constant dense<0.000000e+00> : vector<128x128xf32>
    %30 = tpu.matmul %28, %29, %cst_19 {dimension_numbers = #tpu.dot_dimension_numbers<[1], [0], [0], [1], [0, 0, 1, 1], [], []>} : vector<128x128xbf16>, vector<128x128xbf16>, vector<128x128xf32> -> vector<128x128xf32>
    %31 = arith.addf %27, %30 : vector<128x128xf32>
    %c0_20 = arith.constant 0 : index
    %c0_21 = arith.constant 0 : index
    %32 = vector.load %arg9[%c0_20, %c0_21] : memref<1x128xf32, #tpu.memory_space<vmem>>, vector<1x128xf32>
    %33 = vector.broadcast %32 : vector<1x128xf32> to vector<128x128xf32>
    %34 = arith.addf %31, %33 : vector<128x128xf32>
    %cst_22 = arith.constant 0.000000e+00 : f32
    %35 = vector.broadcast %cst_22 : f32 to vector<128x128xf32>
    %36 = arith.maximumf %34, %35 : vector<128x128xf32>
    %37 = arith.truncf %36 : vector<128x128xf32> to vector<128x128xbf16>
    %c0_23 = arith.constant 0 : index
    %c0_24 = arith.constant 0 : index
    %c0_25 = arith.constant 0 : index
    %38 = vector.load %arg10[%c0_23, %c0_24, %c0_25] : memref<1x128x128xbf16, #tpu.memory_space<vmem>>, vector<1x128x128xbf16>
    %39 = vector.shape_cast %38 : vector<1x128x128xbf16> to vector<128x128xbf16>
    %40 = vector.shape_cast %37 : vector<128x128xbf16> to vector<1x128x128xbf16>
    tpu.vector_store %arg10[%c0_23, %c0_24, %c0_25], %40 {strides = array<i32>} : memref<1x128x128xbf16, #tpu.memory_space<vmem>>, vector<1x128x128xbf16>,
    %41 = tpu.iota {dimensions = array<i32: 0>} : vector<128x128xi32>
    %42 = vector.broadcast %1 : i32 to vector<128x128xi32>
    %43 = arith.addi %42, %41 : vector<128x128xi32>
    %c8_i32 = arith.constant 8 : i32
    %44 = vector.broadcast %c8_i32 : i32 to vector<128x128xi32>
    %45 = arith.cmpi slt, %43, %44 : vector<128x128xi32>
    %cst_26 = arith.constant 1.000000e+00 : f32
    %cst_27 = arith.constant 0.000000e+00 : f32
    %46 = vector.broadcast %cst_26 : f32 to vector<128x128xf32>
    %47 = vector.broadcast %cst_27 : f32 to vector<128x128xf32>
    %48 = arith.select %45, %46, %47 : vector<128x128xi1>, vector<128x128xf32>
    %49 = arith.mulf %36, %48 : vector<128x128xf32>
    %cst_28 = arith.constant dense<0.000000e+00> : vector<128xf32>
    %50 = vector.multi_reduction <add>, %49, %cst_28 [0] : vector<128x128xf32> to vector<128xf32>
    %51 = vector.shape_cast %50 : vector<128xf32> to vector<1x128xf32>
    %c0_29 = arith.constant 0 : index
    %c0_30 = arith.constant 0 : index
    %c0_31 = arith.constant 0 : index
    %52 = vector.load %arg11[%c0_29, %c0_30, %c0_31] : memref<1x1x128xf32, #tpu.memory_space<vmem>>, vector<1x1x128xf32>
    %53 = vector.shape_cast %52 : vector<1x1x128xf32> to vector<1x128xf32>
    %54 = vector.shape_cast %51 : vector<1x128xf32> to vector<1x1x128xf32>
    tpu.vector_store %arg11[%c0_29, %c0_30, %c0_31], %54 {strides = array<i32>} : memref<1x1x128xf32, #tpu.memory_space<vmem>>, vector<1x1x128xf32>,
    %55 = arith.mulf %49, %36 : vector<128x128xf32>
    %cst_32 = arith.constant dense<0.000000e+00> : vector<128xf32>
    %56 = vector.multi_reduction <add>, %55, %cst_32 [0] : vector<128x128xf32> to vector<128xf32>
    %57 = vector.shape_cast %56 : vector<128xf32> to vector<1x128xf32>
    %c0_33 = arith.constant 0 : index
    %c0_34 = arith.constant 0 : index
    %c0_35 = arith.constant 0 : index
    %58 = vector.load %arg12[%c0_33, %c0_34, %c0_35] : memref<1x1x128xf32, #tpu.memory_space<vmem>>, vector<1x1x128xf32>
    %59 = vector.shape_cast %58 : vector<1x1x128xf32> to vector<1x128xf32>
    %60 = vector.shape_cast %57 : vector<1x128xf32> to vector<1x1x128xf32>
    tpu.vector_store %arg12[%c0_33, %c0_34, %c0_35], %60 {strides = array<i32>} : memref<1x1x128xf32, #tpu.memory_space<vmem>>, vector<1x1x128xf32>,
    return
  }
  func.func @transform_0(%arg0: i32, %arg1: i32) -> (i32, i32, i32) {
    %c0_i32 = arith.constant 0 : i32
    %c0_i32_0 = arith.constant 0 : i32
    return %arg0, %arg1, %c0_i32 : i32, i32, i32
  }
  func.func @transform_1(%arg0: i32, %arg1: i32) -> (i32, i32, i32) {
    %c0_i32 = arith.constant 0 : i32
    %c0_i32_0 = arith.constant 0 : i32
    return %arg0, %arg1, %c0_i32 : i32, i32, i32
  }
  func.func @transform_2(%arg0: i32, %arg1: i32) -> (i32, i32, i32) {
    %c0_i32 = arith.constant 0 : i32
    %c0_i32_0 = arith.constant 0 : i32
    %c0_i32_1 = arith.constant 0 : i32
    return %arg0, %c0_i32, %c0_i32_0 : i32, i32, i32
  }
  func.func @transform_3(%arg0: i32, %arg1: i32) -> (i32, i32) {
    %c0_i32 = arith.constant 0 : i32
    %c0_i32_0 = arith.constant 0 : i32
    %c0_i32_1 = arith.constant 0 : i32
    return %c0_i32, %c0_i32_0 : i32, i32
  }
  func.func @transform_4(%arg0: i32, %arg1: i32) -> (i32, i32) {
    %c0_i32 = arith.constant 0 : i32
    %c0_i32_0 = arith.constant 0 : i32
    %c0_i32_1 = arith.constant 0 : i32
    return %c0_i32, %c0_i32_0 : i32, i32
  }
  func.func @transform_5(%arg0: i32, %arg1: i32) -> (i32, i32) {
    %c0_i32 = arith.constant 0 : i32
    %c0_i32_0 = arith.constant 0 : i32
    %c0_i32_1 = arith.constant 0 : i32
    return %c0_i32, %c0_i32_0 : i32, i32
  }
  func.func @transform_6(%arg0: i32, %arg1: i32) -> (i32, i32) {
    %c0_i32 = arith.constant 0 : i32
    %c0_i32_0 = arith.constant 0 : i32
    %c0_i32_1 = arith.constant 0 : i32
    return %c0_i32, %c0_i32_0 : i32, i32
  }
  func.func @transform_7(%arg0: i32, %arg1: i32) -> (i32, i32) {
    %c0_i32 = arith.constant 0 : i32
    %c0_i32_0 = arith.constant 0 : i32
    %c0_i32_1 = arith.constant 0 : i32
    return %c0_i32, %c0_i32_0 : i32, i32
  }
  func.func @transform_8(%arg0: i32, %arg1: i32) -> (i32, i32, i32) {
    %c0_i32 = arith.constant 0 : i32
    %c0_i32_0 = arith.constant 0 : i32
    return %arg0, %arg1, %c0_i32 : i32, i32, i32
  }
  func.func @transform_9(%arg0: i32, %arg1: i32) -> (i32, i32, i32) {
    %c1_i32 = arith.constant 1 : i32
    %0 = arith.muli %arg0, %c1_i32 : i32
    %1 = arith.addi %0, %arg1 : i32
    %c0_i32 = arith.constant 0 : i32
    %c0_i32_0 = arith.constant 0 : i32
    %c0_i32_1 = arith.constant 0 : i32
    return %1, %c0_i32, %c0_i32_0 : i32, i32, i32
  }
  func.func @transform_10(%arg0: i32, %arg1: i32) -> (i32, i32, i32) {
    %c1_i32 = arith.constant 1 : i32
    %0 = arith.muli %arg0, %c1_i32 : i32
    %1 = arith.addi %0, %arg1 : i32
    %c0_i32 = arith.constant 0 : i32
    %c0_i32_0 = arith.constant 0 : i32
    %c0_i32_1 = arith.constant 0 : i32
    return %1, %c0_i32, %c0_i32_0 : i32, i32, i32
  }
}

module attributes {stable_mosaic.version = 11 : i64} {
  func.func @_fused_bn_linear_relu_kernel(%arg0: i32, %arg1: i32, %arg2: memref<1x128x128xbf16, #tpu.memory_space<vmem>>, %arg3: memref<1x128xf32, #tpu.memory_space<vmem>>, %arg4: memref<1x128xf32, #tpu.memory_space<vmem>>, %arg5: memref<1x128x128xbf16, #tpu.memory_space<vmem>>, %arg6: memref<1x128xf32, #tpu.memory_space<vmem>>, %arg7: memref<1x128xf32, #tpu.memory_space<vmem>>, %arg8: memref<1x128x128xbf16, #tpu.memory_space<vmem>>, %arg9: memref<1x128xf32, #tpu.memory_space<vmem>>, %arg10: memref<1x128xf32, #tpu.memory_space<vmem>>, %arg11: memref<128x128xbf16, #tpu.memory_space<vmem>>, %arg12: memref<128x128xbf16, #tpu.memory_space<vmem>>, %arg13: memref<128x128xbf16, #tpu.memory_space<vmem>>, %arg14: memref<1x128xf32, #tpu.memory_space<vmem>>, %arg15: memref<1x128x128xf32, #tpu.memory_space<vmem>>) attributes {dimension_semantics = [#tpu.dimension_semantics<parallel>, #tpu.dimension_semantics<parallel>], iteration_bounds = array<i64: 2, 1>, scalar_prefetch = 0 : i64, scratch_operands = 0 : i64, tpu.core_type = #tpu.core_type<tc>, window_params = [{transform_indices = @transform_0, window_bounds = array<i64: 1, 128, 128>}, {pipeline_mode = #tpu.pipeline_mode<synchronous>, transform_indices = @transform_1, window_bounds = array<i64: 1, 128>}, {pipeline_mode = #tpu.pipeline_mode<synchronous>, transform_indices = @transform_2, window_bounds = array<i64: 1, 128>}, {transform_indices = @transform_3, window_bounds = array<i64: 1, 128, 128>}, {pipeline_mode = #tpu.pipeline_mode<synchronous>, transform_indices = @transform_4, window_bounds = array<i64: 1, 128>}, {pipeline_mode = #tpu.pipeline_mode<synchronous>, transform_indices = @transform_5, window_bounds = array<i64: 1, 128>}, {transform_indices = @transform_6, window_bounds = array<i64: 1, 128, 128>}, {pipeline_mode = #tpu.pipeline_mode<synchronous>, transform_indices = @transform_7, window_bounds = array<i64: 1, 128>}, {pipeline_mode = #tpu.pipeline_mode<synchronous>, transform_indices = @transform_8, window_bounds = array<i64: 1, 128>}, {pipeline_mode = #tpu.pipeline_mode<synchronous>, transform_indices = @transform_9, window_bounds = array<i64: 128, 128>}, {pipeline_mode = #tpu.pipeline_mode<synchronous>, transform_indices = @transform_10, window_bounds = array<i64: 128, 128>}, {pipeline_mode = #tpu.pipeline_mode<synchronous>, transform_indices = @transform_11, window_bounds = array<i64: 128, 128>}, {pipeline_mode = #tpu.pipeline_mode<synchronous>, transform_indices = @transform_12, window_bounds = array<i64: 1, 128>}, {transform_indices = @transform_13, window_bounds = array<i64: 1, 128, 128>}]} {
    %c0 = arith.constant 0 : index
    %c0_0 = arith.constant 0 : index
    %c0_1 = arith.constant 0 : index
    %0 = vector.load %arg2[%c0, %c0_0, %c0_1] : memref<1x128x128xbf16, #tpu.memory_space<vmem>>, vector<1x128x128xbf16>
    %1 = vector.shape_cast %0 : vector<1x128x128xbf16> to vector<128x128xbf16>
    %2 = arith.extf %1 : vector<128x128xbf16> to vector<128x128xf32>
    %c0_2 = arith.constant 0 : index
    %c0_3 = arith.constant 0 : index
    %3 = vector.load %arg3[%c0_2, %c0_3] : memref<1x128xf32, #tpu.memory_space<vmem>>, vector<1x128xf32>
    %4 = vector.broadcast %3 : vector<1x128xf32> to vector<128x128xf32>
    %5 = arith.mulf %2, %4 : vector<128x128xf32>
    %c0_4 = arith.constant 0 : index
    %c0_5 = arith.constant 0 : index
    %6 = vector.load %arg4[%c0_4, %c0_5] : memref<1x128xf32, #tpu.memory_space<vmem>>, vector<1x128xf32>
    %7 = vector.broadcast %6 : vector<1x128xf32> to vector<128x128xf32>
    %8 = arith.addf %5, %7 : vector<128x128xf32>
    %9 = arith.truncf %8 : vector<128x128xf32> to vector<128x128xbf16>
    %c0_6 = arith.constant 0 : index
    %c0_7 = arith.constant 0 : index
    %10 = vector.load %arg11[%c0_6, %c0_7] : memref<128x128xbf16, #tpu.memory_space<vmem>>, vector<128x128xbf16>
    %cst = arith.constant dense<0.000000e+00> : vector<128x128xf32>
    %11 = tpu.matmul %9, %10, %cst {dimension_numbers = #tpu.dot_dimension_numbers<[1], [0], [0], [1], [0, 0, 1, 1], [], []>} : vector<128x128xbf16>, vector<128x128xbf16>, vector<128x128xf32> -> vector<128x128xf32>
    %c0_8 = arith.constant 0 : index
    %c0_9 = arith.constant 0 : index
    %c0_10 = arith.constant 0 : index
    %12 = vector.load %arg5[%c0_8, %c0_9, %c0_10] : memref<1x128x128xbf16, #tpu.memory_space<vmem>>, vector<1x128x128xbf16>
    %13 = vector.shape_cast %12 : vector<1x128x128xbf16> to vector<128x128xbf16>
    %14 = arith.extf %13 : vector<128x128xbf16> to vector<128x128xf32>
    %c0_11 = arith.constant 0 : index
    %c0_12 = arith.constant 0 : index
    %15 = vector.load %arg6[%c0_11, %c0_12] : memref<1x128xf32, #tpu.memory_space<vmem>>, vector<1x128xf32>
    %16 = vector.broadcast %15 : vector<1x128xf32> to vector<128x128xf32>
    %17 = arith.mulf %14, %16 : vector<128x128xf32>
    %c0_13 = arith.constant 0 : index
    %c0_14 = arith.constant 0 : index
    %18 = vector.load %arg7[%c0_13, %c0_14] : memref<1x128xf32, #tpu.memory_space<vmem>>, vector<1x128xf32>
    %19 = vector.broadcast %18 : vector<1x128xf32> to vector<128x128xf32>
    %20 = arith.addf %17, %19 : vector<128x128xf32>
    %21 = arith.truncf %20 : vector<128x128xf32> to vector<128x128xbf16>
    %c0_15 = arith.constant 0 : index
    %c0_16 = arith.constant 0 : index
    %22 = vector.load %arg12[%c0_15, %c0_16] : memref<128x128xbf16, #tpu.memory_space<vmem>>, vector<128x128xbf16>
    %cst_17 = arith.constant dense<0.000000e+00> : vector<128x128xf32>
    %23 = tpu.matmul %21, %22, %cst_17 {dimension_numbers = #tpu.dot_dimension_numbers<[1], [0], [0], [1], [0, 0, 1, 1], [], []>} : vector<128x128xbf16>, vector<128x128xbf16>, vector<128x128xf32> -> vector<128x128xf32>
    %24 = arith.addf %11, %23 : vector<128x128xf32>
    %c0_18 = arith.constant 0 : index
    %c0_19 = arith.constant 0 : index
    %c0_20 = arith.constant 0 : index
    %25 = vector.load %arg8[%c0_18, %c0_19, %c0_20] : memref<1x128x128xbf16, #tpu.memory_space<vmem>>, vector<1x128x128xbf16>
    %26 = vector.shape_cast %25 : vector<1x128x128xbf16> to vector<128x128xbf16>
    %27 = arith.extf %26 : vector<128x128xbf16> to vector<128x128xf32>
    %c0_21 = arith.constant 0 : index
    %c0_22 = arith.constant 0 : index
    %28 = vector.load %arg9[%c0_21, %c0_22] : memref<1x128xf32, #tpu.memory_space<vmem>>, vector<1x128xf32>
    %29 = vector.broadcast %28 : vector<1x128xf32> to vector<128x128xf32>
    %30 = arith.mulf %27, %29 : vector<128x128xf32>
    %c0_23 = arith.constant 0 : index
    %c0_24 = arith.constant 0 : index
    %31 = vector.load %arg10[%c0_23, %c0_24] : memref<1x128xf32, #tpu.memory_space<vmem>>, vector<1x128xf32>
    %32 = vector.broadcast %31 : vector<1x128xf32> to vector<128x128xf32>
    %33 = arith.addf %30, %32 : vector<128x128xf32>
    %34 = arith.truncf %33 : vector<128x128xf32> to vector<128x128xbf16>
    %c0_25 = arith.constant 0 : index
    %c0_26 = arith.constant 0 : index
    %35 = vector.load %arg13[%c0_25, %c0_26] : memref<128x128xbf16, #tpu.memory_space<vmem>>, vector<128x128xbf16>
    %cst_27 = arith.constant dense<0.000000e+00> : vector<128x128xf32>
    %36 = tpu.matmul %34, %35, %cst_27 {dimension_numbers = #tpu.dot_dimension_numbers<[1], [0], [0], [1], [0, 0, 1, 1], [], []>} : vector<128x128xbf16>, vector<128x128xbf16>, vector<128x128xf32> -> vector<128x128xf32>
    %37 = arith.addf %24, %36 : vector<128x128xf32>
    %c0_28 = arith.constant 0 : index
    %c0_29 = arith.constant 0 : index
    %38 = vector.load %arg14[%c0_28, %c0_29] : memref<1x128xf32, #tpu.memory_space<vmem>>, vector<1x128xf32>
    %39 = vector.broadcast %38 : vector<1x128xf32> to vector<128x128xf32>
    %40 = arith.addf %37, %39 : vector<128x128xf32>
    %cst_30 = arith.constant 0.000000e+00 : f32
    %41 = vector.broadcast %cst_30 : f32 to vector<128x128xf32>
    %42 = arith.maximumf %40, %41 : vector<128x128xf32>
    %c0_31 = arith.constant 0 : index
    %c0_32 = arith.constant 0 : index
    %c0_33 = arith.constant 0 : index
    %43 = vector.load %arg15[%c0_31, %c0_32, %c0_33] : memref<1x128x128xf32, #tpu.memory_space<vmem>>, vector<1x128x128xf32>
    %44 = vector.shape_cast %43 : vector<1x128x128xf32> to vector<128x128xf32>
    %45 = vector.shape_cast %42 : vector<128x128xf32> to vector<1x128x128xf32>
    tpu.vector_store %arg15[%c0_31, %c0_32, %c0_33], %45 {strides = array<i32>} : memref<1x128x128xf32, #tpu.memory_space<vmem>>, vector<1x128x128xf32>,
    return
  }
  func.func @transform_0(%arg0: i32, %arg1: i32) -> (i32, i32, i32) {
    %c0_i32 = arith.constant 0 : i32
    %c0_i32_0 = arith.constant 0 : i32
    return %arg0, %arg1, %c0_i32 : i32, i32, i32
  }
  func.func @transform_1(%arg0: i32, %arg1: i32) -> (i32, i32) {
    %c0_i32 = arith.constant 0 : i32
    %c0_i32_0 = arith.constant 0 : i32
    %c0_i32_1 = arith.constant 0 : i32
    return %c0_i32, %c0_i32_0 : i32, i32
  }
  func.func @transform_2(%arg0: i32, %arg1: i32) -> (i32, i32) {
    %c0_i32 = arith.constant 0 : i32
    %c0_i32_0 = arith.constant 0 : i32
    %c0_i32_1 = arith.constant 0 : i32
    return %c0_i32, %c0_i32_0 : i32, i32
  }
  func.func @transform_3(%arg0: i32, %arg1: i32) -> (i32, i32, i32) {
    %c0_i32 = arith.constant 0 : i32
    %c0_i32_0 = arith.constant 0 : i32
    return %arg0, %arg1, %c0_i32 : i32, i32, i32
  }
  func.func @transform_4(%arg0: i32, %arg1: i32) -> (i32, i32) {
    %c0_i32 = arith.constant 0 : i32
    %c0_i32_0 = arith.constant 0 : i32
    %c0_i32_1 = arith.constant 0 : i32
    return %c0_i32, %c0_i32_0 : i32, i32
  }
  func.func @transform_5(%arg0: i32, %arg1: i32) -> (i32, i32) {
    %c0_i32 = arith.constant 0 : i32
    %c0_i32_0 = arith.constant 0 : i32
    %c0_i32_1 = arith.constant 0 : i32
    return %c0_i32, %c0_i32_0 : i32, i32
  }
  func.func @transform_6(%arg0: i32, %arg1: i32) -> (i32, i32, i32) {
    %c0_i32 = arith.constant 0 : i32
    %c0_i32_0 = arith.constant 0 : i32
    return %arg0, %arg1, %c0_i32 : i32, i32, i32
  }
  func.func @transform_7(%arg0: i32, %arg1: i32) -> (i32, i32) {
    %c0_i32 = arith.constant 0 : i32
    %c0_i32_0 = arith.constant 0 : i32
    %c0_i32_1 = arith.constant 0 : i32
    return %c0_i32, %c0_i32_0 : i32, i32
  }
  func.func @transform_8(%arg0: i32, %arg1: i32) -> (i32, i32) {
    %c0_i32 = arith.constant 0 : i32
    %c0_i32_0 = arith.constant 0 : i32
    %c0_i32_1 = arith.constant 0 : i32
    return %c0_i32, %c0_i32_0 : i32, i32
  }
  func.func @transform_9(%arg0: i32, %arg1: i32) -> (i32, i32) {
    %c0_i32 = arith.constant 0 : i32
    %c0_i32_0 = arith.constant 0 : i32
    %c0_i32_1 = arith.constant 0 : i32
    return %c0_i32, %c0_i32_0 : i32, i32
  }
  func.func @transform_10(%arg0: i32, %arg1: i32) -> (i32, i32) {
    %c0_i32 = arith.constant 0 : i32
    %c0_i32_0 = arith.constant 0 : i32
    %c0_i32_1 = arith.constant 0 : i32
    return %c0_i32, %c0_i32_0 : i32, i32
  }
  func.func @transform_11(%arg0: i32, %arg1: i32) -> (i32, i32) {
    %c0_i32 = arith.constant 0 : i32
    %c0_i32_0 = arith.constant 0 : i32
    %c0_i32_1 = arith.constant 0 : i32
    return %c0_i32, %c0_i32_0 : i32, i32
  }
  func.func @transform_12(%arg0: i32, %arg1: i32) -> (i32, i32) {
    %c0_i32 = arith.constant 0 : i32
    %c0_i32_0 = arith.constant 0 : i32
    %c0_i32_1 = arith.constant 0 : i32
    return %c0_i32, %c0_i32_0 : i32, i32
  }
  func.func @transform_13(%arg0: i32, %arg1: i32) -> (i32, i32, i32) {
    %c0_i32 = arith.constant 0 : i32
    %c0_i32_0 = arith.constant 0 : i32
    return %arg0, %arg1, %c0_i32 : i32, i32, i32
  }
}

</mosaic_0001>

<llo_original>
// kernel: gcn_forward.7
$region0: #{gcn_forward.7}
  #allocation0 [shape = 'u32[]', space=smem, size = 0x4, offset = 0x4, fixed_abs, tag = 'smem constant byte address 0x4 - core index']
  #allocation1 [shape = 'u32[144,128]{1,0:T(1,128)}', space=vmem, size = 0x12000, scoped, tag = 'internal scratch']
  %s0 = inlined_call_operand.vmem [shape: bf16[2,128,128], index: 0, kind: input, shape index: {}]
  %s1 = inlined_call_operand.vmem [shape: f32[1,128], index: 1, kind: input, shape index: {}]
  %s2 = inlined_call_operand.vmem [shape: f32[1,128], index: 2, kind: input, shape index: {}]
  %s3 = inlined_call_operand.vmem [shape: bf16[2,128,128], index: 3, kind: input, shape index: {}]
  %s4 = inlined_call_operand.vmem [shape: f32[1,128], index: 4, kind: input, shape index: {}]
  %s5 = inlined_call_operand.vmem [shape: f32[1,128], index: 5, kind: input, shape index: {}]
  %s6 = inlined_call_operand.vmem [shape: bf16[2,128,128], index: 6, kind: input, shape index: {}]
  %s7 = inlined_call_operand.vmem [shape: f32[1,128], index: 7, kind: input, shape index: {}]
  %s8 = inlined_call_operand.vmem [shape: f32[1,128], index: 8, kind: input, shape index: {}]
  %s9 = inlined_call_operand.vmem [shape: bf16[128,128], index: 9, kind: input, shape index: {}]
  %s10 = inlined_call_operand.vmem [shape: bf16[128,128], index: 10, kind: input, shape index: {}]
  %s11 = inlined_call_operand.vmem [shape: bf16[128,128], index: 11, kind: input, shape index: {}]
  %s12 = inlined_call_operand.vmem [shape: f32[1,128], index: 12, kind: input, shape index: {}]
  %s13 = inlined_call_operand.vmem [shape: f32[2,128,128], index: 13, kind: output, shape index: {}]
  %s14 = sld [smem:[#allocation0]]
  $region85: #{gcn_forward.7} parent=0
    _
  %s16 = ssub.s32 1, %s14
  %s17 = scalar_select 0, %s16, %s14
  loop: start=0, step=1, limit=4
  $region2: #{gcn_forward.7} parent=0 // loop_pre_header
    _
  $region3: #{gcn_forward.7} parent=0 // loop_header
    %s19 = sphi 0, %s23
    %p20 = scmp.ge.s32.totalorder %s19, 4
    %s26 = sphi 0, %s38
    %s27 = sphi 0, %s34
    %s28 = sphi 0, %s26
    %s29 = sphi 0, %s27
    %s30 = sphi 0, %s28
    %s31 = sphi 0, %s29
    %s43 = sphi 0, %s45
    %s46 = sphi 0, %s43
    %s47 = sphi 0, %s46
    %s63 = sphi 0, %s47
    %s67 = sphi 0, %s67
    %s69 = sphi 0, %s67
    %s70 = sphi 0, %s69
    %s84 = sphi 0, %s70
    %s88 = sphi 0, %s88
    %s90 = sphi 0, %s88
    %s91 = sphi 0, %s90
    %s105 = sphi 0, %s91
    %s113 = sphi 0, %s115
    %s116 = sphi 0, %s113
    %s117 = sphi 0, %s116
    %s133 = sphi 0, %s117
    %s137 = sphi 0, %s137
    %s139 = sphi 0, %s137
    %s140 = sphi 0, %s139
    %s154 = sphi 0, %s140
    %s158 = sphi 0, %s158
    %s160 = sphi 0, %s158
    %s161 = sphi 0, %s160
    %s175 = sphi 0, %s161
    %s183 = sphi 0, %s185
    %s186 = sphi 0, %s183
    %s187 = sphi 0, %s186
    %s203 = sphi 0, %s187
    %s207 = sphi 0, %s207
    %s209 = sphi 0, %s207
    %s210 = sphi 0, %s209
    %s224 = sphi 0, %s210
    %s228 = sphi 0, %s228
    %s230 = sphi 0, %s228
    %s231 = sphi 0, %s230
    %s245 = sphi 0, %s231
    %s249 = sphi 0, %s249
    %s251 = sphi 0, %s249
    %s252 = sphi 0, %s251
    %s266 = sphi 0, %s252
    %s270 = sphi 0, %s270
    %s272 = sphi 0, %s270
    %s273 = sphi 0, %s272
    %s287 = sphi 0, %s273
    %s291 = sphi 0, %s291
    %s293 = sphi 0, %s291
    %s294 = sphi 0, %s293
    %s308 = sphi 0, %s294
    %s312 = sphi 0, %s312
    %s314 = sphi 0, %s312
    %s315 = sphi 0, %s314
    %s329 = sphi 0, %s315
    %s337 = sphi 0, %s339
    %s340 = sphi 0, %s337
    %s341 = sphi 0, %s340
    %s357 = sphi 0, %s341
  $region4: #{gcn_forward.7} parent=0 // loop_header_branch
    %22 = sbr.rel (%p20) target = $region8
  $region5: #{gcn_forward.7} parent=0 // loop_body
    %s24 = ssub.s32 %s19, 1
    %s25 = ssub.s32 %s19, 2
    %s32 = sadd.s32 1, %s27
    %p33 = scmp.ge.s32.totalorder %s32, 1
    %s34 = scalar_select %p33, 0, %s32
    %s35 = sadd.s32 1, %s26
    %s36 = scalar_select %p33, %s35, %s26
    %p37 = scmp.ge.s32.totalorder %s36, 2
    %s38 = scalar_select %p37, 0, %s36
    %s39 = ssub.s32 %s26, %s38
    %s40 = ssub.s32 %s27, %s34
    %s41 = sor.u32 %s39, %s40
    %p42 = scmp.eq.s32.totalorder %s41, 0
    %s44 = sadd.s32 %s43, 1
    %s45 = scalar_select %p42, %s43, %s44
    %p48 = pneg %p42
    %p49 = scmp.eq.s32.totalorder %s19, 1
    %p50 = por %p48, %p49
    %p51 = scmp.ne.s32.totalorder %s43, %s46
    %p52 = scmp.eq.s32.totalorder %s19, 0
    %p53 = por %p51, %p52
    %p54 = scmp.ne.s32.totalorder %s43, %s46
    %p55 = scmp.eq.s32.totalorder %s24, 1
    %p56 = por %p54, %p55
    %p57 = scmp.ne.s32.totalorder %s46, %s47
    %p58 = scmp.eq.s32.totalorder %s24, 0
    %p59 = por %p57, %p58
    %p60 = scmp.ne.s32.totalorder %s46, %s47
    %p61 = scmp.eq.s32.totalorder %s25, 1
    %p62 = por %p60, %p61
    %p64 = scmp.ne.s32.totalorder %s47, %s63
    %p65 = scmp.eq.s32.totalorder %s25, 0
    %p66 = por %p64, %p65
    %s68 = sadd.s32 %s67, 1
    %p71 = scmp.eq.s32.totalorder %s19, 1
    %p72 = scmp.ne.s32.totalorder %s67, %s69
    %p73 = scmp.eq.s32.totalorder %s19, 0
    %p74 = por %p72, %p73
    %p75 = scmp.ne.s32.totalorder %s67, %s69
    %p76 = scmp.eq.s32.totalorder %s24, 1
    %p77 = por %p75, %p76
    %p78 = scmp.ne.s32.totalorder %s69, %s70
    %p79 = scmp.eq.s32.totalorder %s24, 0
    %p80 = por %p78, %p79
    %p81 = scmp.ne.s32.totalorder %s69, %s70
    %p82 = scmp.eq.s32.totalorder %s25, 1
    %p83 = por %p81, %p82
    %p85 = scmp.ne.s32.totalorder %s70, %s84
    %p86 = scmp.eq.s32.totalorder %s25, 0
    %p87 = por %p85, %p86
    %s89 = sadd.s32 %s88, 1
    %p92 = scmp.eq.s32.totalorder %s19, 1
    %p93 = scmp.ne.s32.totalorder %s88, %s90
    %p94 = scmp.eq.s32.totalorder %s19, 0
    %p95 = por %p93, %p94
    %p96 = scmp.ne.s32.totalorder %s88, %s90
    %p97 = scmp.eq.s32.totalorder %s24, 1
    %p98 = por %p96, %p97
    %p99 = scmp.ne.s32.totalorder %s90, %s91
    %p100 = scmp.eq.s32.totalorder %s24, 0
    %p101 = por %p99, %p100
    %p102 = scmp.ne.s32.totalorder %s90, %s91
    %p103 = scmp.eq.s32.totalorder %s25, 1
    %p104 = por %p102, %p103
    %p106 = scmp.ne.s32.totalorder %s91, %s105
    %p107 = scmp.eq.s32.totalorder %s25, 0
    %p108 = por %p106, %p107
    %s109 = ssub.s32 %s26, %s38
    %s110 = ssub.s32 %s27, %s34
    %s111 = sor.u32 %s109, %s110
    %p112 = scmp.eq.s32.totalorder %s111, 0
    %s114 = sadd.s32 %s113, 1
    %s115 = scalar_select %p112, %s113, %s114
    %p118 = pneg %p112
    %p119 = scmp.eq.s32.totalorder %s19, 1
    %p120 = por %p118, %p119
    %p121 = scmp.ne.s32.totalorder %s113, %s116
    %p122 = scmp.eq.s32.totalorder %s19, 0
    %p123 = por %p121, %p122
    %p124 = scmp.ne.s32.totalorder %s113, %s116
    %p125 = scmp.eq.s32.totalorder %s24, 1
    %p126 = por %p124, %p125
    %p127 = scmp.ne.s32.totalorder %s116, %s117
    %p128 = scmp.eq.s32.totalorder %s24, 0
    %p129 = por %p127, %p128
    %p130 = scmp.ne.s32.totalorder %s116, %s117
    %p131 = scmp.eq.s32.totalorder %s25, 1
    %p132 = por %p130, %p131
    %p134 = scmp.ne.s32.totalorder %s117, %s133
    %p135 = scmp.eq.s32.totalorder %s25, 0
    %p136 = por %p134, %p135
    %s138 = sadd.s32 %s137, 1
    %p141 = scmp.eq.s32.totalorder %s19, 1
    %p142 = scmp.ne.s32.totalorder %s137, %s139
    %p143 = scmp.eq.s32.totalorder %s19, 0
    %p144 = por %p142, %p143
    %p145 = scmp.ne.s32.totalorder %s137, %s139
    %p146 = scmp.eq.s32.totalorder %s24, 1
    %p147 = por %p145, %p146
    %p148 = scmp.ne.s32.totalorder %s139, %s140
    %p149 = scmp.eq.s32.totalorder %s24, 0
    %p150 = por %p148, %p149
    %p151 = scmp.ne.s32.totalorder %s139, %s140
    %p152 = scmp.eq.s32.totalorder %s25, 1
    %p153 = por %p151, %p152
    %p155 = scmp.ne.s32.totalorder %s140, %s154
    %p156 = scmp.eq.s32.totalorder %s25, 0
    %p157 = por %p155, %p156
    %s159 = sadd.s32 %s158, 1
    %p162 = scmp.eq.s32.totalorder %s19, 1
    %p163 = scmp.ne.s32.totalorder %s158, %s160
    %p164 = scmp.eq.s32.totalorder %s19, 0
    %p165 = por %p163, %p164
    %p166 = scmp.ne.s32.totalorder %s158, %s160
    %p167 = scmp.eq.s32.totalorder %s24, 1
    %p168 = por %p166, %p167
    %p169 = scmp.ne.s32.totalorder %s160, %s161
    %p170 = scmp.eq.s32.totalorder %s24, 0
    %p171 = por %p169, %p170
    %p172 = scmp.ne.s32.totalorder %s160, %s161
    %p173 = scmp.eq.s32.totalorder %s25, 1
    %p174 = por %p172, %p173
    %p176 = scmp.ne.s32.totalorder %s161, %s175
    %p177 = scmp.eq.s32.totalorder %s25, 0
    %p178 = por %p176, %p177
    %s179 = ssub.s32 %s26, %s38
    %s180 = ssub.s32 %s27, %s34
    %s181 = sor.u32 %s179, %s180
    %p182 = scmp.eq.s32.totalorder %s181, 0
    %s184 = sadd.s32 %s183, 1
    %s185 = scalar_select %p182, %s183, %s184
    %p188 = pneg %p182
    %p189 = scmp.eq.s32.totalorder %s19, 1
    %p190 = por %p188, %p189
    %p191 = scmp.ne.s32.totalorder %s183, %s186
    %p192 = scmp.eq.s32.totalorder %s19, 0
    %p193 = por %p191, %p192
    %p194 = scmp.ne.s32.totalorder %s183, %s186
    %p195 = scmp.eq.s32.totalorder %s24, 1
    %p196 = por %p194, %p195
    %p197 = scmp.ne.s32.totalorder %s186, %s187
    %p198 = scmp.eq.s32.totalorder %s24, 0
    %p199 = por %p197, %p198
    %p200 = scmp.ne.s32.totalorder %s186, %s187
    %p201 = scmp.eq.s32.totalorder %s25, 1
    %p202 = por %p200, %p201
    %p204 = scmp.ne.s32.totalorder %s187, %s203
    %p205 = scmp.eq.s32.totalorder %s25, 0
    %p206 = por %p204, %p205
    %s208 = sadd.s32 %s207, 1
    %p211 = scmp.eq.s32.totalorder %s19, 1
    %p212 = scmp.ne.s32.totalorder %s207, %s209
    %p213 = scmp.eq.s32.totalorder %s19, 0
    %p214 = por %p212, %p213
    %p215 = scmp.ne.s32.totalorder %s207, %s209
    %p216 = scmp.eq.s32.totalorder %s24, 1
    %p217 = por %p215, %p216
    %p218 = scmp.ne.s32.totalorder %s209, %s210
    %p219 = scmp.eq.s32.totalorder %s24, 0
    %p220 = por %p218, %p219
    %p221 = scmp.ne.s32.totalorder %s209, %s210
    %p222 = scmp.eq.s32.totalorder %s25, 1
    %p223 = por %p221, %p222
    %p225 = scmp.ne.s32.totalorder %s210, %s224
    %p226 = scmp.eq.s32.totalorder %s25, 0
    %p227 = por %p225, %p226
    %s229 = sadd.s32 %s228, 1
    %p232 = scmp.eq.s32.totalorder %s19, 1
    %p233 = scmp.ne.s32.totalorder %s228, %s230
    %p234 = scmp.eq.s32.totalorder %s19, 0
    %p235 = por %p233, %p234
    %p236 = scmp.ne.s32.totalorder %s228, %s230
    %p237 = scmp.eq.s32.totalorder %s24, 1
    %p238 = por %p236, %p237
    %p239 = scmp.ne.s32.totalorder %s230, %s231
    %p240 = scmp.eq.s32.totalorder %s24, 0
    %p241 = por %p239, %p240
    %p242 = scmp.ne.s32.totalorder %s230, %s231
    %p243 = scmp.eq.s32.totalorder %s25, 1
    %p244 = por %p242, %p243
    %p246 = scmp.ne.s32.totalorder %s231, %s245
    %p247 = scmp.eq.s32.totalorder %s25, 0
    %p248 = por %p246, %p247
    %s250 = sadd.s32 %s249, 1
    %p253 = scmp.eq.s32.totalorder %s19, 1
    %p254 = scmp.ne.s32.totalorder %s249, %s251
    %p255 = scmp.eq.s32.totalorder %s19, 0
    %p256 = por %p254, %p255
    %p257 = scmp.ne.s32.totalorder %s249, %s251
    %p258 = scmp.eq.s32.totalorder %s24, 1
    %p259 = por %p257, %p258
    %p260 = scmp.ne.s32.totalorder %s251, %s252
    %p261 = scmp.eq.s32.totalorder %s24, 0
    %p262 = por %p260, %p261
    %p263 = scmp.ne.s32.totalorder %s251, %s252
    %p264 = scmp.eq.s32.totalorder %s25, 1
    %p265 = por %p263, %p264
    %p267 = scmp.ne.s32.totalorder %s252, %s266
    %p268 = scmp.eq.s32.totalorder %s25, 0
    %p269 = por %p267, %p268
    %s271 = sadd.s32 %s270, 1
    %p274 = scmp.eq.s32.totalorder %s19, 1
    %p275 = scmp.ne.s32.totalorder %s270, %s272
    %p276 = scmp.eq.s32.totalorder %s19, 0
    %p277 = por %p275, %p276
    %p278 = scmp.ne.s32.totalorder %s270, %s272
    %p279 = scmp.eq.s32.totalorder %s24, 1
    %p280 = por %p278, %p279
    %p281 = scmp.ne.s32.totalorder %s272, %s273
    %p282 = scmp.eq.s32.totalorder %s24, 0
    %p283 = por %p281, %p282
    %p284 = scmp.ne.s32.totalorder %s272, %s273
    %p285 = scmp.eq.s32.totalorder %s25, 1
    %p286 = por %p284, %p285
    %p288 = scmp.ne.s32.totalorder %s273, %s287
    %p289 = scmp.eq.s32.totalorder %s25, 0
    %p290 = por %p288, %p289
    %s292 = sadd.s32 %s291, 1
    %p295 = scmp.eq.s32.totalorder %s19, 1
    %p296 = scmp.ne.s32.totalorder %s291, %s293
    %p297 = scmp.eq.s32.totalorder %s19, 0
    %p298 = por %p296, %p297
    %p299 = scmp.ne.s32.totalorder %s291, %s293
    %p300 = scmp.eq.s32.totalorder %s24, 1
    %p301 = por %p299, %p300
    %p302 = scmp.ne.s32.totalorder %s293, %s294
    %p303 = scmp.eq.s32.totalorder %s24, 0
    %p304 = por %p302, %p303
    %p305 = scmp.ne.s32.totalorder %s293, %s294
    %p306 = scmp.eq.s32.totalorder %s25, 1
    %p307 = por %p305, %p306
    %p309 = scmp.ne.s32.totalorder %s294, %s308
    %p310 = scmp.eq.s32.totalorder %s25, 0
    %p311 = por %p309, %p310
    %s313 = sadd.s32 %s312, 1
    %p316 = scmp.eq.s32.totalorder %s19, 1
    %p317 = scmp.ne.s32.totalorder %s312, %s314
    %p318 = scmp.eq.s32.totalorder %s19, 0
    %p319 = por %p317, %p318
    %p320 = scmp.ne.s32.totalorder %s312, %s314
    %p321 = scmp.eq.s32.totalorder %s24, 1
    %p322 = por %p320, %p321
    %p323 = scmp.ne.s32.totalorder %s314, %s315
    %p324 = scmp.eq.s32.totalorder %s24, 0
    %p325 = por %p323, %p324
    %p326 = scmp.ne.s32.totalorder %s314, %s315
    %p327 = scmp.eq.s32.totalorder %s25, 1
    %p328 = por %p326, %p327
    %p330 = scmp.ne.s32.totalorder %s315, %s329
    %p331 = scmp.eq.s32.totalorder %s25, 0
    %p332 = por %p330, %p331
    %s333 = ssub.s32 %s26, %s38
    %s334 = ssub.s32 %s27, %s34
    %s335 = sor.u32 %s333, %s334
    %p336 = scmp.eq.s32.totalorder %s335, 0
    %s338 = sadd.s32 %s337, 1
    %s339 = scalar_select %p336, %s337, %s338
    %p342 = pneg %p336
    %p343 = scmp.eq.s32.totalorder %s19, 1
    %p344 = por %p342, %p343
    %p345 = scmp.ne.s32.totalorder %s337, %s340
    %p346 = scmp.eq.s32.totalorder %s19, 0
    %p347 = por %p345, %p346
    %p348 = scmp.ne.s32.totalorder %s337, %s340
    %p349 = scmp.eq.s32.totalorder %s24, 1
    %p350 = por %p348, %p349
    %p351 = scmp.ne.s32.totalorder %s340, %s341
    %p352 = scmp.eq.s32.totalorder %s24, 0
    %p353 = por %p351, %p352
    %p354 = scmp.ne.s32.totalorder %s340, %s341
    %p355 = scmp.eq.s32.totalorder %s25, 1
    %p356 = por %p354, %p355
    %p358 = scmp.ne.s32.totalorder %s341, %s357
    %p359 = scmp.eq.s32.totalorder %s25, 0
    %p360 = por %p358, %p359
    %p361 = scmp.le.s32.totalorder 1, %s19
    %p362 = scmp.lt.s32.totalorder %s19, 3
    %p363 = pnand %p361, %p362
    %p364 = pneg %p363
    // Predicated region
    $region9: #{gcn_forward.7} parent=5 // pred_check
      _
    $region10: #{gcn_forward.7} parent=5 // pred_check_branch
      %366 = sbr.rel (%p363) target = $region12
    $region11: #{gcn_forward.7} parent=5 // pred_region
      %s367 = ssub.s32 %s19, 1
      // Predicated region
      $region13: #{gcn_forward.7} parent=11 // pred_check
        %p368 = pneg %p80
      $region14: #{gcn_forward.7} parent=11 // pred_check_branch
        %370 = sbr.rel (%p368) target = $region16
      $region15: #{gcn_forward.7} parent=11 // pred_region
        _
      $region16: #{gcn_forward.7} parent=11 // pred_fallthru
        _
      // Predicated region
      $region17: #{gcn_forward.7} parent=11 // pred_check
        %p371 = pneg %p101
      $region18: #{gcn_forward.7} parent=11 // pred_check_branch
        %373 = sbr.rel (%p371) target = $region20
      $region19: #{gcn_forward.7} parent=11 // pred_region
        _
      $region20: #{gcn_forward.7} parent=11 // pred_fallthru
        _
      // Predicated region
      $region21: #{gcn_forward.7} parent=11 // pred_check
        %p374 = pneg %p150
      $region22: #{gcn_forward.7} parent=11 // pred_check_branch
        %376 = sbr.rel (%p374) target = $region24
      $region23: #{gcn_forward.7} parent=11 // pred_region
        _
      $region24: #{gcn_forward.7} parent=11 // pred_fallthru
        _
      // Predicated region
      $region25: #{gcn_forward.7} parent=11 // pred_check
        %p377 = pneg %p171
      $region26: #{gcn_forward.7} parent=11 // pred_check_branch
        %379 = sbr.rel (%p377) target = $region28
      $region27: #{gcn_forward.7} parent=11 // pred_region
        _
      $region28: #{gcn_forward.7} parent=11 // pred_fallthru
        _
      // Predicated region
      $region29: #{gcn_forward.7} parent=11 // pred_check
        %p380 = pneg %p220
      $region30: #{gcn_forward.7} parent=11 // pred_check_branch
        %382 = sbr.rel (%p380) target = $region32
      $region31: #{gcn_forward.7} parent=11 // pred_region
        _
      $region32: #{gcn_forward.7} parent=11 // pred_fallthru
        _
      // Predicated region
      $region33: #{gcn_forward.7} parent=11 // pred_check
        %p383 = pneg %p241
      $region34: #{gcn_forward.7} parent=11 // pred_check_branch
        %385 = sbr.rel (%p383) target = $region36
      $region35: #{gcn_forward.7} parent=11 // pred_region
        _
      $region36: #{gcn_forward.7} parent=11 // pred_fallthru
        _
      // Predicated region
      $region37: #{gcn_forward.7} parent=11 // pred_check
        %p386 = pneg %p262
      $region38: #{gcn_forward.7} parent=11 // pred_check_branch
        %388 = sbr.rel (%p386) target = $region40
      $region39: #{gcn_forward.7} parent=11 // pred_region
        _
      $region40: #{gcn_forward.7} parent=11 // pred_fallthru
        _
      // Predicated region
      $region41: #{gcn_forward.7} parent=11 // pred_check
        %p389 = pneg %p283
      $region42: #{gcn_forward.7} parent=11 // pred_check_branch
        %391 = sbr.rel (%p389) target = $region44
      $region43: #{gcn_forward.7} parent=11 // pred_region
        _
      $region44: #{gcn_forward.7} parent=11 // pred_fallthru
        _
      // Predicated region
      $region45: #{gcn_forward.7} parent=11 // pred_check
        %p392 = pneg %p304
      $region46: #{gcn_forward.7} parent=11 // pred_check_branch
        %394 = sbr.rel (%p392) target = $region48
      $region47: #{gcn_forward.7} parent=11 // pred_region
        _
      $region48: #{gcn_forward.7} parent=11 // pred_fallthru
        _
      // Predicated region
      $region49: #{gcn_forward.7} parent=11 // pred_check
        %p395 = pneg %p325
      $region50: #{gcn_forward.7} parent=11 // pred_check_branch
        %397 = sbr.rel (%p395) target = $region52
      $region51: #{gcn_forward.7} parent=11 // pred_region
        _
      $region52: #{gcn_forward.7} parent=11 // pred_fallthru
        _
    $region12: #{gcn_forward.7} parent=5 // pred_fallthru
      _
    %p398 = scmp.lt.s32.totalorder %s19, 2
    // Predicated region
    $region53: #{gcn_forward.7} parent=5 // pred_check
      %p399 = pneg %p398
    $region54: #{gcn_forward.7} parent=5 // pred_check_branch
      %401 = sbr.rel (%p399) target = $region56
    $region55: #{gcn_forward.7} parent=5 // pred_region
      // Predicated region
      $region57: #{gcn_forward.7} parent=55 // pred_check
        %p402 = pneg %p53
      $region58: #{gcn_forward.7} parent=55 // pred_check_branch
        %404 = sbr.rel (%p402) target = $region60
      $region59: #{gcn_forward.7} parent=55 // pred_region
        %s405 = smul.u32 16, %s27
        %p406 = scmp.lt.s32.totalorder %s26, 1
        %s407 = scalar_select %p406, %s26, 1
        %p408 = scmp.lt.s32.totalorder %s405, 15
        %s409 = scalar_select %p408, %s405, 15
        %s410 = smul.addr %s407, 16
        %s411 = sadd.s32 %s409, %s410
        %s412 = smul.addr %s411, 4
        %s413 = scalar_lea.vmem %s0, %s412
        %s414 = smul.u32 16, %s27
      $region60: #{gcn_forward.7} parent=55 // pred_fallthru
        _
      // Predicated region
      $region61: #{gcn_forward.7} parent=55 // pred_check
        %p415 = pneg %p123
      $region62: #{gcn_forward.7} parent=55 // pred_check_branch
        %417 = sbr.rel (%p415) target = $region64
      $region63: #{gcn_forward.7} parent=55 // pred_region
        %s418 = smul.u32 16, %s27
        %p419 = scmp.lt.s32.totalorder %s26, 1
        %s420 = scalar_select %p419, %s26, 1
        %p421 = scmp.lt.s32.totalorder %s418, 15
        %s422 = scalar_select %p421, %s418, 15
        %s423 = smul.addr %s420, 16
        %s424 = sadd.s32 %s422, %s423
        %s425 = smul.addr %s424, 4
        %s426 = scalar_lea.vmem %s3, %s425
        %s427 = smul.u32 16, %s27
      $region64: #{gcn_forward.7} parent=55 // pred_fallthru
        _
      // Predicated region
      $region65: #{gcn_forward.7} parent=55 // pred_check
        %p428 = pneg %p193
      $region66: #{gcn_forward.7} parent=55 // pred_check_branch
        %430 = sbr.rel (%p428) target = $region68
      $region67: #{gcn_forward.7} parent=55 // pred_region
        %s431 = smul.u32 16, %s27
        %p432 = scmp.lt.s32.totalorder %s26, 1
        %s433 = scalar_select %p432, %s26, 1
        %p434 = scmp.lt.s32.totalorder %s431, 15
        %s435 = scalar_select %p434, %s431, 15
        %s436 = smul.addr %s433, 16
        %s437 = sadd.s32 %s435, %s436
        %s438 = smul.addr %s437, 4
        %s439 = scalar_lea.vmem %s6, %s438
        %s440 = smul.u32 16, %s27
      $region68: #{gcn_forward.7} parent=55 // pred_fallthru
        _
    $region56: #{gcn_forward.7} parent=5 // pred_fallthru
      _
    %p441 = scmp.le.s32.totalorder 1, %s19
    %p442 = scmp.lt.s32.totalorder %s19, 3
    %p443 = pnand %p441, %p442
    %p444 = pneg %p443
    // Predicated region
    $region69: #{gcn_forward.7} parent=5 // pred_check
      _
    $region70: #{gcn_forward.7} parent=5 // pred_check_branch
      %446 = sbr.rel (%p443) target = $region72
    $region71: #{gcn_forward.7} parent=5 // pred_region
      %s447 = ssub.s32 %s19, 1
      %s448 = smul.u32 16, %s29
      %p449 = scmp.lt.s32.totalorder %s28, 1
      %s450 = scalar_select %p449, %s28, 1
      %p451 = scmp.lt.s32.totalorder %s448, 15
      %s452 = scalar_select %p451, %s448, 15
      %s453 = smul.addr %s450, 16
      %s454 = sadd.s32 %s452, %s453
      %s455 = smul.addr %s454, 4
      %s456 = scalar_lea.vmem %s0, %s455
      %p457 = pneg %p59
      %p458 = pneg %p56
      %p459 = pneg %p80
      %p460 = pneg %p77
      %p461 = pneg %p101
      %p462 = pneg %p98
      %s463 = smul.u32 16, %s29
      %p464 = scmp.lt.s32.totalorder %s28, 1
      %s465 = scalar_select %p464, %s28, 1
      %p466 = scmp.lt.s32.totalorder %s463, 15
      %s467 = scalar_select %p466, %s463, 15
      %s468 = smul.addr %s465, 16
      %s469 = sadd.s32 %s467, %s468
      %s470 = smul.addr %s469, 4
      %s471 = scalar_lea.vmem %s3, %s470
      %p472 = pneg %p129
      %p473 = pneg %p126
      %p474 = pneg %p150
      %p475 = pneg %p147
      %p476 = pneg %p171
      %p477 = pneg %p168
      %s478 = smul.u32 16, %s29
      %p479 = scmp.lt.s32.totalorder %s28, 1
      %s480 = scalar_select %p479, %s28, 1
      %p481 = scmp.lt.s32.totalorder %s478, 15
      %s482 = scalar_select %p481, %s478, 15
      %s483 = smul.addr %s480, 16
      %s484 = sadd.s32 %s482, %s483
      %s485 = smul.addr %s484, 4
      %s486 = scalar_lea.vmem %s6, %s485
      %p487 = pneg %p199
      %p488 = pneg %p196
      %p489 = pneg %p220
      %p490 = pneg %p217
      %p491 = pneg %p241
      %p492 = pneg %p238
      %p493 = pneg %p262
      %p494 = pneg %p259
      %p495 = pneg %p283
      %p496 = pneg %p280
      %p497 = pneg %p304
      %p498 = pneg %p301
      %p499 = pneg %p325
      %p500 = pneg %p322
      %p501 = pneg %p353
      %p502 = pneg %p350
      %s503 = smul.u32 16, %s29
      %p504 = scmp.lt.s32.totalorder %s28, 1
      %s505 = scalar_select %p504, %s28, 1
      %p506 = scmp.lt.s32.totalorder %s503, 15
      %s507 = scalar_select %p506, %s503, 15
      %s508 = smul.addr %s505, 16
      %s509 = sadd.s32 %s507, %s508
      %s510 = smul.addr %s509, 8
      %s511 = scalar_lea.vmem %s13, %s510
      %s512 = smul.u32 16, %s29
      %p513 = scmp.lt.s32.totalorder %s28, 1
      %s514 = scalar_select %p513, %s28, 1
      %p515 = scmp.lt.s32.totalorder %s512, 15
      %s516 = scalar_select %p515, %s512, 15
      %s517 = smul.addr %s514, 16
      %s518 = sadd.s32 %s516, %s517
      %s519 = smul.addr %s518, 4
      %s520 = scalar_lea.vmem %s0, %s519
      %s521 = smul.u32 16, %s29
      %s522 = smul.u32 16, %s29
      %p523 = scmp.lt.s32.totalorder %s28, 1
      %s524 = scalar_select %p523, %s28, 1
      %p525 = scmp.lt.s32.totalorder %s522, 15
      %s526 = scalar_select %p525, %s522, 15
      %s527 = smul.addr %s524, 16
      %s528 = sadd.s32 %s526, %s527
      %s529 = smul.addr %s528, 4
      %s530 = scalar_lea.vmem %s3, %s529
      %s531 = smul.u32 16, %s29
      %s532 = smul.u32 16, %s29
      %p533 = scmp.lt.s32.totalorder %s28, 1
      %s534 = scalar_select %p533, %s28, 1
      %p535 = scmp.lt.s32.totalorder %s532, 15
      %s536 = scalar_select %p535, %s532, 15
      %s537 = smul.addr %s534, 16
      %s538 = sadd.s32 %s536, %s537
      %s539 = smul.addr %s538, 4
      %s540 = scalar_lea.vmem %s6, %s539
      %s541 = smul.u32 16, %s29
      %s542 = smul.u32 16, %s29
      %p543 = scmp.lt.s32.totalorder %s28, 1
      %s544 = scalar_select %p543, %s28, 1
      %p545 = scmp.lt.s32.totalorder %s542, 15
      %s546 = scalar_select %p545, %s542, 15
      %s547 = smul.addr %s544, 16
      %s548 = sadd.s32 %s546, %s547
      %s549 = smul.addr %s548, 8
      %s550 = scalar_lea.vmem %s13, %s549
      %s551 = smul.u32 16, %s29
      %v553 = vld [vmem:[%s520] sm:$0xf]
      %v554 = vld [vmem:[%s520 + $0x4] sm:$0xf]
      %v555 = vld [vmem:[%s520 + $0x8] sm:$0xf]
      %v556 = vld [vmem:[%s520 + $0xc] sm:$0xf]
      %v557 = vld [vmem:[%s520 + $0x10] sm:$0xf]
      %v558 = vld [vmem:[%s520 + $0x14] sm:$0xf]
      %v559 = vld [vmem:[%s520 + $0x18] sm:$0xf]
      %v560 = vld [vmem:[%s520 + $0x1c] sm:$0xf]
      %v561 = vld [vmem:[%s520 + $0x20] sm:$0xf]
      %v562 = vld [vmem:[%s520 + $0x24] sm:$0xf]
      %v563 = vld [vmem:[%s520 + $0x28] sm:$0xf]
      %v564 = vld [vmem:[%s520 + $0x2c] sm:$0xf]
      %v565 = vld [vmem:[%s520 + $0x30] sm:$0xf]
      %v566 = vld [vmem:[%s520 + $0x34] sm:$0xf]
      %v567 = vld [vmem:[%s520 + $0x38] sm:$0xf]
      %v568 = vld [vmem:[%s520 + $0x3c] sm:$0xf]
      %v569 = vunpack.c.l.bf16 %v553
      %v570 = vunpack.c.l.bf16 %v554
      %v571 = vunpack.c.l.bf16 %v555
      %v572 = vunpack.c.l.bf16 %v556
      %v573 = vunpack.c.l.bf16 %v557
      %v574 = vunpack.c.l.bf16 %v558
      %v575 = vunpack.c.l.bf16 %v559
      %v576 = vunpack.c.l.bf16 %v560
      %v577 = vunpack.c.l.bf16 %v561
      %v578 = vunpack.c.l.bf16 %v562
      %v579 = vunpack.c.l.bf16 %v563
      %v580 = vunpack.c.l.bf16 %v564
      %v581 = vunpack.c.l.bf16 %v565
      %v582 = vunpack.c.l.bf16 %v566
      %v583 = vunpack.c.l.bf16 %v567
      %v584 = vunpack.c.l.bf16 %v568
      %v585 = vld [vmem:[%s1] sm:$0x1]
      %v587 = vlaneseq
      %v588 = vshrl.u32 %v587, 7
      %v589 = vsub.s32 0, %v588
      %v590 = vrot.slane %v585, %v589
      %v592 = vmul.f32 %v569, %v590
      %v593 = vmul.f32 %v570, %v590
      %v594 = vmul.f32 %v571, %v590
      %v595 = vmul.f32 %v572, %v590
      %v596 = vmul.f32 %v573, %v590
      %v597 = vmul.f32 %v574, %v590
      %v598 = vmul.f32 %v575, %v590
      %v599 = vmul.f32 %v576, %v590
      %v600 = vmul.f32 %v577, %v590
      %v601 = vmul.f32 %v578, %v590
      %v602 = vmul.f32 %v579, %v590
      %v603 = vmul.f32 %v580, %v590
      %v604 = vmul.f32 %v581, %v590
      %v605 = vmul.f32 %v582, %v590
      %v606 = vmul.f32 %v583, %v590
      %v607 = vmul.f32 %v584, %v590
      %v608 = vld [vmem:[%s2] sm:$0x1]
      %v610 = vlaneseq
      %v611 = vshrl.u32 %v610, 7
      %v612 = vsub.s32 0, %v611
      %v613 = vrot.slane %v608, %v612
      %v615 = vadd.f32 %v592, %v613
      %v616 = vadd.f32 %v593, %v613
      %v617 = vadd.f32 %v594, %v613
      %v618 = vadd.f32 %v595, %v613
      %v619 = vadd.f32 %v596, %v613
      %v620 = vadd.f32 %v597, %v613
      %v621 = vadd.f32 %v598, %v613
      %v622 = vadd.f32 %v599, %v613
      %v623 = vadd.f32 %v600, %v613
      %v624 = vadd.f32 %v601, %v613
      %v625 = vadd.f32 %v602, %v613
      %v626 = vadd.f32 %v603, %v613
      %v627 = vadd.f32 %v604, %v613
      %v628 = vadd.f32 %v605, %v613
      %v629 = vadd.f32 %v606, %v613
      %v630 = vadd.f32 %v607, %v613
      %v631 = vpack.c.bf16 %v616, %v615
      %v632 = vpack.c.bf16 %v618, %v617
      %v633 = vpack.c.bf16 %v620, %v619
      %v634 = vpack.c.bf16 %v622, %v621
      %v635 = vpack.c.bf16 %v624, %v623
      %v636 = vpack.c.bf16 %v626, %v625
      %v637 = vpack.c.bf16 %v628, %v627
      %v638 = vpack.c.bf16 %v630, %v629
      %v639 = vld [vmem:[%s9] sm:$0xf]
      %v640 = vld [vmem:[%s9 + $0x4] sm:$0xf]
      %v641 = vld [vmem:[%s9 + $0x8] sm:$0xf]
      %v642 = vld [vmem:[%s9 + $0xc] sm:$0xf]
      %v643 = vld [vmem:[%s9 + $0x10] sm:$0xf]
      %v644 = vld [vmem:[%s9 + $0x14] sm:$0xf]
      %v645 = vld [vmem:[%s9 + $0x18] sm:$0xf]
      %v646 = vld [vmem:[%s9 + $0x1c] sm:$0xf]
      %v647 = vld [vmem:[%s9 + $0x20] sm:$0xf]
      %v648 = vld [vmem:[%s9 + $0x24] sm:$0xf]
      %v649 = vld [vmem:[%s9 + $0x28] sm:$0xf]
      %v650 = vld [vmem:[%s9 + $0x2c] sm:$0xf]
      %v651 = vld [vmem:[%s9 + $0x30] sm:$0xf]
      %v652 = vld [vmem:[%s9 + $0x34] sm:$0xf]
      %v653 = vld [vmem:[%s9 + $0x38] sm:$0xf]
      %v654 = vld [vmem:[%s9 + $0x3c] sm:$0xf]
      %v655 = vld [vmem:[%s530] sm:$0xf]
      %v656 = vld [vmem:[%s530 + $0x4] sm:$0xf]
      %v657 = vld [vmem:[%s530 + $0x8] sm:$0xf]
      %v658 = vld [vmem:[%s530 + $0xc] sm:$0xf]
      %v659 = vld [vmem:[%s530 + $0x10] sm:$0xf]
      %v660 = vld [vmem:[%s530 + $0x14] sm:$0xf]
      %v661 = vld [vmem:[%s530 + $0x18] sm:$0xf]
      %v662 = vld [vmem:[%s530 + $0x1c] sm:$0xf]
      %v663 = vld [vmem:[%s530 + $0x20] sm:$0xf]
      %v664 = vld [vmem:[%s530 + $0x24] sm:$0xf]
      %v665 = vld [vmem:[%s530 + $0x28] sm:$0xf]
      %v666 = vld [vmem:[%s530 + $0x2c] sm:$0xf]
      %v667 = vld [vmem:[%s530 + $0x30] sm:$0xf]
      %v668 = vld [vmem:[%s530 + $0x34] sm:$0xf]
      %v669 = vld [vmem:[%s530 + $0x38] sm:$0xf]
      %v670 = vld [vmem:[%s530 + $0x3c] sm:$0xf]
      %v671 = vunpack.c.l.bf16 %v655
      %v672 = vunpack.c.l.bf16 %v656
      %v673 = vunpack.c.l.bf16 %v657
      %v674 = vunpack.c.l.bf16 %v658
      %v675 = vunpack.c.l.bf16 %v659
      %v676 = vunpack.c.l.bf16 %v660
      %v677 = vunpack.c.l.bf16 %v661
      %v678 = vunpack.c.l.bf16 %v662
      %v679 = vunpack.c.l.bf16 %v663
      %v680 = vunpack.c.l.bf16 %v664
      %v681 = vunpack.c.l.bf16 %v665
      %v682 = vunpack.c.l.bf16 %v666
      %v683 = vunpack.c.l.bf16 %v667
      %v684 = vunpack.c.l.bf16 %v668
      %v685 = vunpack.c.l.bf16 %v669
      %v686 = vunpack.c.l.bf16 %v670
      %v687 = vld [vmem:[%s4] sm:$0x1]
      %v689 = vlaneseq
      %v690 = vshrl.u32 %v689, 7
      %v691 = vsub.s32 0, %v690
      %v692 = vrot.slane %v687, %v691
      %v694 = vmul.f32 %v671, %v692
      %v695 = vmul.f32 %v672, %v692
      %v696 = vmul.f32 %v673, %v692
      %v697 = vmul.f32 %v674, %v692
      %v698 = vmul.f32 %v675, %v692
      %v699 = vmul.f32 %v676, %v692
      %v700 = vmul.f32 %v677, %v692
      %v701 = vmul.f32 %v678, %v692
      %v702 = vmul.f32 %v679, %v692
      %v703 = vmul.f32 %v680, %v692
      %v704 = vmul.f32 %v681, %v692
      %v705 = vmul.f32 %v682, %v692
      %v706 = vmul.f32 %v683, %v692
      %v707 = vmul.f32 %v684, %v692
      %v708 = vmul.f32 %v685, %v692
      %v709 = vmul.f32 %v686, %v692
      %v710 = vld [vmem:[%s5] sm:$0x1]
      %v712 = vlaneseq
      %v713 = vshrl.u32 %v712, 7
      %v714 = vsub.s32 0, %v713
      %v715 = vrot.slane %v710, %v714
      %v717 = vadd.f32 %v694, %v715
      %v718 = vadd.f32 %v695, %v715
      %v719 = vadd.f32 %v696, %v715
      %v720 = vadd.f32 %v697, %v715
      %v721 = vadd.f32 %v698, %v715
      %v722 = vadd.f32 %v699, %v715
      %v723 = vadd.f32 %v700, %v715
      %v724 = vadd.f32 %v701, %v715
      %v725 = vadd.f32 %v702, %v715
      %v726 = vadd.f32 %v703, %v715
      %v727 = vadd.f32 %v704, %v715
      %v728 = vadd.f32 %v705, %v715
      %v729 = vadd.f32 %v706, %v715
      %v730 = vadd.f32 %v707, %v715
      %v731 = vadd.f32 %v708, %v715
      %v732 = vadd.f32 %v709, %v715
      %v733 = vpack.c.bf16 %v718, %v717
      %v734 = vpack.c.bf16 %v720, %v719
      %v735 = vpack.c.bf16 %v722, %v721
      %v736 = vpack.c.bf16 %v724, %v723
      %v737 = vpack.c.bf16 %v726, %v725
      %v738 = vpack.c.bf16 %v728, %v727
      %v739 = vpack.c.bf16 %v730, %v729
      %v740 = vpack.c.bf16 %v732, %v731
      %v741 = vld [vmem:[%s10] sm:$0xf]
      %v742 = vld [vmem:[%s10 + $0x4] sm:$0xf]
      %v743 = vld [vmem:[%s10 + $0x8] sm:$0xf]
      %v744 = vld [vmem:[%s10 + $0xc] sm:$0xf]
      %v745 = vld [vmem:[%s10 + $0x10] sm:$0xf]
      %v746 = vld [vmem:[%s10 + $0x14] sm:$0xf]
      %v747 = vld [vmem:[%s10 + $0x18] sm:$0xf]
      %v748 = vld [vmem:[%s10 + $0x1c] sm:$0xf]
      %v749 = vld [vmem:[%s10 + $0x20] sm:$0xf]
      %v750 = vld [vmem:[%s10 + $0x24] sm:$0xf]
      %v751 = vld [vmem:[%s10 + $0x28] sm:$0xf]
      %v752 = vld [vmem:[%s10 + $0x2c] sm:$0xf]
      %v753 = vld [vmem:[%s10 + $0x30] sm:$0xf]
      %v754 = vld [vmem:[%s10 + $0x34] sm:$0xf]
      %v755 = vld [vmem:[%s10 + $0x38] sm:$0xf]
      %v756 = vld [vmem:[%s10 + $0x3c] sm:$0xf]
      %v773 = vunpack.c.l.b16 %v741
      %v774 = vunpack.c.l.b16 %v742
      %v775 = vunpack.c.l.b16 %v743
      %v776 = vunpack.c.l.b16 %v744
      %v777 = vunpack.c.l.b16 %v745
      %v778 = vunpack.c.l.b16 %v746
      %v779 = vunpack.c.l.b16 %v747
      %v780 = vunpack.c.l.b16 %v748
      %v781 = vunpack.c.l.b16 %v749
      %v782 = vunpack.c.l.b16 %v750
      %v783 = vunpack.c.l.b16 %v751
      %v784 = vunpack.c.l.b16 %v752
      %v785 = vunpack.c.l.b16 %v753
      %v786 = vunpack.c.l.b16 %v754
      %v787 = vunpack.c.l.b16 %v755
      %v788 = vunpack.c.l.b16 %v756
      %v789 = vpack.c.b16 %v774, %v773
      %v790 = vpack.c.b16 %v776, %v775
      %v791 = vpack.c.b16 %v778, %v777
      %v792 = vpack.c.b16 %v780, %v779
      %v793 = vpack.c.b16 %v782, %v781
      %v794 = vpack.c.b16 %v784, %v783
      %v795 = vpack.c.b16 %v786, %v785
      %v796 = vpack.c.b16 %v788, %v787
      %805 = vmatprep.subr.bf16.mxu0 0
      %806 = vmatpush1.bf16.msra.mxu0 %v789
      %807 = vmatprep.subr.bf16.mxu0 0
      %808 = vmatpush1.bf16.msra.mxu0 %v790
      %809 = vmatprep.subr.bf16.mxu0 0
      %810 = vmatpush1.bf16.msra.mxu0 %v791
      %811 = vmatprep.subr.bf16.mxu0 0
      %812 = vmatpush1.bf16.msra.mxu0 %v792
      %813 = vmatprep.subr.bf16.mxu0 0
      %814 = vmatpush1.bf16.msra.mxu0 %v793
      %815 = vmatprep.subr.bf16.mxu0 0
      %816 = vmatpush1.bf16.msra.mxu0 %v794
      %817 = vmatprep.subr.bf16.mxu0 0
      %818 = vmatpush1.bf16.msra.mxu0 %v795
      %819 = vmatprep.subr.bf16.mxu0 0
      %820 = vmatpush1.bf16.msra.mxu0 %v796
      %821 = vmatprep.subr.bf16.mxu0 0
      %822 = vmatpush1.bf16.msra.mxu0 0
      %823 = vmatprep.subr.bf16.mxu0 0
      %824 = vmatpush1.bf16.msra.mxu0 0
      %825 = vmatprep.subr.bf16.mxu0 0
      %826 = vmatpush1.bf16.msra.mxu0 0
      %827 = vmatprep.subr.bf16.mxu0 0
      %828 = vmatpush1.bf16.msra.mxu0 0
      %829 = vmatprep.subr.bf16.mxu0 0
      %830 = vmatpush1.bf16.msra.mxu0 0
      %831 = vmatprep.subr.bf16.mxu0 0
      %832 = vmatpush1.bf16.msra.mxu0 0
      %833 = vmatprep.subr.bf16.mxu0 0
      %834 = vmatpush1.bf16.msra.mxu0 0
      %835 = vmatprep.subr.bf16.mxu0 0
      %836 = vmatpush1.bf16.msra.mxu0 0
      %837 = vmatprep.mubr.bf16.mxu0 0
      %838 = vmatmul.mubr.bf16.gmra.mrb[0].mxu0 %v733
      %v839 = vpop.f32.mrb[0].mxu0
      %v840 = vadd.f32 0.0, %v839
      %v841 = vpop.f32.mrb[0].mxu0
      %v842 = vpop.f32.mrb[0].mxu0
      %v843 = vadd.f32 0.0, %v842
      %v844 = vpop.f32.mrb[0].mxu0
      %845 = vmatprep.mubr.bf16.mxu0 0
      %846 = vmatmul.mubr.bf16.gmra.mrb[0].mxu0 %v734
      %v847 = vpop.f32.mrb[0].mxu0
      %v848 = vadd.f32 0.0, %v847
      %v849 = vpop.f32.mrb[0].mxu0
      %v850 = vpop.f32.mrb[0].mxu0
      %v851 = vadd.f32 0.0, %v850
      %v852 = vpop.f32.mrb[0].mxu0
      %853 = vmatprep.mubr.bf16.mxu0 0
      %854 = vmatmul.mubr.bf16.gmra.mrb[0].mxu0 %v735
      %v855 = vpop.f32.mrb[0].mxu0
      %v856 = vadd.f32 0.0, %v855
      %v857 = vpop.f32.mrb[0].mxu0
      %v858 = vpop.f32.mrb[0].mxu0
      %v859 = vadd.f32 0.0, %v858
      %v860 = vpop.f32.mrb[0].mxu0
      %861 = vmatprep.mubr.bf16.mxu0 0
      %862 = vmatmul.mubr.bf16.gmra.mrb[0].mxu0 %v736
      %v863 = vpop.f32.mrb[0].mxu0
      %v864 = vadd.f32 0.0, %v863
      %v865 = vpop.f32.mrb[0].mxu0
      %v866 = vpop.f32.mrb[0].mxu0
      %v867 = vadd.f32 0.0, %v866
      %v868 = vpop.f32.mrb[0].mxu0
      %869 = vmatprep.mubr.bf16.mxu0 0
      %870 = vmatmul.mubr.bf16.gmra.mrb[0].mxu0 %v737
      %v871 = vpop.f32.mrb[0].mxu0
      %v872 = vadd.f32 0.0, %v871
      %v873 = vpop.f32.mrb[0].mxu0
      %v874 = vpop.f32.mrb[0].mxu0
      %v875 = vadd.f32 0.0, %v874
      %v876 = vpop.f32.mrb[0].mxu0
      %877 = vmatprep.mubr.bf16.mxu0 0
      %878 = vmatmul.mubr.bf16.gmra.mrb[0].mxu0 %v738
      %v879 = vpop.f32.mrb[0].mxu0
      %v880 = vadd.f32 0.0, %v879
      %v881 = vpop.f32.mrb[0].mxu0
      %v882 = vpop.f32.mrb[0].mxu0
      %v883 = vadd.f32 0.0, %v882
      %v884 = vpop.f32.mrb[0].mxu0
      %885 = vmatprep.mubr.bf16.mxu0 0
      %886 = vmatmul.mubr.bf16.gmra.mrb[0].mxu0 %v739
      %v887 = vpop.f32.mrb[0].mxu0
      %v888 = vadd.f32 0.0, %v887
      %v889 = vpop.f32.mrb[0].mxu0
      %v890 = vpop.f32.mrb[0].mxu0
      %v891 = vadd.f32 0.0, %v890
      %v892 = vpop.f32.mrb[0].mxu0
      %893 = vmatprep.mubr.bf16.mxu0 0
      %894 = vmatmul.mubr.bf16.gmra.mrb[0].mxu0 %v740
      %v895 = vpop.f32.mrb[0].mxu0
      %v896 = vadd.f32 0.0, %v895
      %v897 = vpop.f32.mrb[0].mxu0
      %v898 = vpop.f32.mrb[0].mxu0
      %v899 = vadd.f32 0.0, %v898
      %v900 = vpop.f32.mrb[0].mxu0
      %901 = vdwg.mxu0
      %v918 = vunpack.c.l.b16 %v639
      %v919 = vunpack.c.l.b16 %v640
      %v920 = vunpack.c.l.b16 %v641
      %v921 = vunpack.c.l.b16 %v642
      %v922 = vunpack.c.l.b16 %v643
      %v923 = vunpack.c.l.b16 %v644
      %v924 = vunpack.c.l.b16 %v645
      %v925 = vunpack.c.l.b16 %v646
      %v926 = vunpack.c.l.b16 %v647
      %v927 = vunpack.c.l.b16 %v648
      %v928 = vunpack.c.l.b16 %v649
      %v929 = vunpack.c.l.b16 %v650
      %v930 = vunpack.c.l.b16 %v651
      %v931 = vunpack.c.l.b16 %v652
      %v932 = vunpack.c.l.b16 %v653
      %v933 = vunpack.c.l.b16 %v654
      %v934 = vpack.c.b16 %v919, %v918
      %v935 = vpack.c.b16 %v921, %v920
      %v936 = vpack.c.b16 %v923, %v922
      %v937 = vpack.c.b16 %v925, %v924
      %v938 = vpack.c.b16 %v927, %v926
      %v939 = vpack.c.b16 %v929, %v928
      %v940 = vpack.c.b16 %v931, %v930
      %v941 = vpack.c.b16 %v933, %v932
      %950 = vmatprep.subr.bf16.mxu0 0
      %951 = vmatpush1.bf16.msra.mxu0 %v934
      %952 = vmatprep.subr.bf16.mxu0 0
      %953 = vmatpush1.bf16.msra.mxu0 %v935
      %954 = vmatprep.subr.bf16.mxu0 0
      %955 = vmatpush1.bf16.msra.mxu0 %v936
      %956 = vmatprep.subr.bf16.mxu0 0
      %957 = vmatpush1.bf16.msra.mxu0 %v937
      %958 = vmatprep.subr.bf16.mxu0 0
      %959 = vmatpush1.bf16.msra.mxu0 %v938
      %960 = vmatprep.subr.bf16.mxu0 0
      %961 = vmatpush1.bf16.msra.mxu0 %v939
      %962 = vmatprep.subr.bf16.mxu0 0
      %963 = vmatpush1.bf16.msra.mxu0 %v940
      %964 = vmatprep.subr.bf16.mxu0 0
      %965 = vmatpush1.bf16.msra.mxu0 %v941
      %966 = vmatprep.subr.bf16.mxu0 0
      %967 = vmatpush1.bf16.msra.mxu0 0
      %968 = vmatprep.subr.bf16.mxu0 0
      %969 = vmatpush1.bf16.msra.mxu0 0
      %970 = vmatprep.subr.bf16.mxu0 0
      %971 = vmatpush1.bf16.msra.mxu0 0
      %972 = vmatprep.subr.bf16.mxu0 0
      %973 = vmatpush1.bf16.msra.mxu0 0
      %974 = vmatprep.subr.bf16.mxu0 0
      %975 = vmatpush1.bf16.msra.mxu0 0
      %976 = vmatprep.subr.bf16.mxu0 0
      %977 = vmatpush1.bf16.msra.mxu0 0
      %978 = vmatprep.subr.bf16.mxu0 0
      %979 = vmatpush1.bf16.msra.mxu0 0
      %980 = vmatprep.subr.bf16.mxu0 0
      %981 = vmatpush1.bf16.msra.mxu0 0
      %982 = vmatprep.mubr.bf16.mxu0 0
      %983 = vmatmul.mubr.bf16.gmra.mrb[0].mxu0 %v631
      %v984 = vpop.f32.mrb[0].mxu0
      %v985 = vadd.f32 %v840, %v984
      %v986 = vpop.f32.mrb[0].mxu0
      %v987 = vpop.f32.mrb[0].mxu0
      %v988 = vadd.f32 %v843, %v987
      %v989 = vpop.f32.mrb[0].mxu0
      %990 = vmatprep.mubr.bf16.mxu0 0
      %991 = vmatmul.mubr.bf16.gmra.mrb[0].mxu0 %v632
      %v992 = vpop.f32.mrb[0].mxu0
      %v993 = vadd.f32 %v848, %v992
      %v994 = vpop.f32.mrb[0].mxu0
      %v995 = vpop.f32.mrb[0].mxu0
      %v996 = vadd.f32 %v851, %v995
      %v997 = vpop.f32.mrb[0].mxu0
      %998 = vmatprep.mubr.bf16.mxu0 0
      %999 = vmatmul.mubr.bf16.gmra.mrb[0].mxu0 %v633
      %v1000 = vpop.f32.mrb[0].mxu0
      %v1001 = vadd.f32 %v856, %v1000
      %v1002 = vpop.f32.mrb[0].mxu0
      %v1003 = vpop.f32.mrb[0].mxu0
      %v1004 = vadd.f32 %v859, %v1003
      %v1005 = vpop.f32.mrb[0].mxu0
      %1006 = vmatprep.mubr.bf16.mxu0 0
      %1007 = vmatmul.mubr.bf16.gmra.mrb[0].mxu0 %v634
      %v1008 = vpop.f32.mrb[0].mxu0
      %v1009 = vadd.f32 %v864, %v1008
      %v1010 = vpop.f32.mrb[0].mxu0
      %v1011 = vpop.f32.mrb[0].mxu0
      %v1012 = vadd.f32 %v867, %v1011
      %v1013 = vpop.f32.mrb[0].mxu0
      %1014 = vmatprep.mubr.bf16.mxu0 0
      %1015 = vmatmul.mubr.bf16.gmra.mrb[0].mxu0 %v635
      %v1016 = vpop.f32.mrb[0].mxu0
      %v1017 = vadd.f32 %v872, %v1016
      %v1018 = vpop.f32.mrb[0].mxu0
      %v1019 = vpop.f32.mrb[0].mxu0
      %v1020 = vadd.f32 %v875, %v1019
      %v1021 = vpop.f32.mrb[0].mxu0
      %1022 = vmatprep.mubr.bf16.mxu0 0
      %1023 = vmatmul.mubr.bf16.gmra.mrb[0].mxu0 %v636
      %v1024 = vpop.f32.mrb[0].mxu0
      %v1025 = vadd.f32 %v880, %v1024
      %v1026 = vpop.f32.mrb[0].mxu0
      %v1027 = vpop.f32.mrb[0].mxu0
      %v1028 = vadd.f32 %v883, %v1027
      %v1029 = vpop.f32.mrb[0].mxu0
      %1030 = vmatprep.mubr.bf16.mxu0 0
      %1031 = vmatmul.mubr.bf16.gmra.mrb[0].mxu0 %v637
      %v1032 = vpop.f32.mrb[0].mxu0
      %v1033 = vadd.f32 %v888, %v1032
      %v1034 = vpop.f32.mrb[0].mxu0
      %v1035 = vpop.f32.mrb[0].mxu0
      %v1036 = vadd.f32 %v891, %v1035
      %v1037 = vpop.f32.mrb[0].mxu0
      %1038 = vmatprep.mubr.bf16.mxu0 0
      %1039 = vmatmul.mubr.bf16.gmra.mrb[0].mxu0 %v638
      %v1040 = vpop.f32.mrb[0].mxu0
      %v1041 = vadd.f32 %v896, %v1040
      %v1042 = vpop.f32.mrb[0].mxu0
      %v1043 = vpop.f32.mrb[0].mxu0
      %v1044 = vadd.f32 %v899, %v1043
      %v1045 = vpop.f32.mrb[0].mxu0
      %1046 = vdwg.mxu0
      %v1047 = vld [vmem:[%s540] sm:$0xf]
      %v1048 = vld [vmem:[%s540 + $0x4] sm:$0xf]
      %v1049 = vld [vmem:[%s540 + $0x8] sm:$0xf]
      %v1050 = vld [vmem:[%s540 + $0xc] sm:$0xf]
      %v1051 = vld [vmem:[%s540 + $0x10] sm:$0xf]
      %v1052 = vld [vmem:[%s540 + $0x14] sm:$0xf]
      %v1053 = vld [vmem:[%s540 + $0x18] sm:$0xf]
      %v1054 = vld [vmem:[%s540 + $0x1c] sm:$0xf]
      %v1055 = vld [vmem:[%s540 + $0x20] sm:$0xf]
      %v1056 = vld [vmem:[%s540 + $0x24] sm:$0xf]
      %v1057 = vld [vmem:[%s540 + $0x28] sm:$0xf]
      %v1058 = vld [vmem:[%s540 + $0x2c] sm:$0xf]
      %v1059 = vld [vmem:[%s540 + $0x30] sm:$0xf]
      %v1060 = vld [vmem:[%s540 + $0x34] sm:$0xf]
      %v1061 = vld [vmem:[%s540 + $0x38] sm:$0xf]
      %v1062 = vld [vmem:[%s540 + $0x3c] sm:$0xf]
      %v1063 = vunpack.c.l.bf16 %v1047
      %v1064 = vunpack.c.l.bf16 %v1048
      %v1065 = vunpack.c.l.bf16 %v1049
      %v1066 = vunpack.c.l.bf16 %v1050
      %v1067 = vunpack.c.l.bf16 %v1051
      %v1068 = vunpack.c.l.bf16 %v1052
      %v1069 = vunpack.c.l.bf16 %v1053
      %v1070 = vunpack.c.l.bf16 %v1054
      %v1071 = vunpack.c.l.bf16 %v1055
      %v1072 = vunpack.c.l.bf16 %v1056
      %v1073 = vunpack.c.l.bf16 %v1057
      %v1074 = vunpack.c.l.bf16 %v1058
      %v1075 = vunpack.c.l.bf16 %v1059
      %v1076 = vunpack.c.l.bf16 %v1060
      %v1077 = vunpack.c.l.bf16 %v1061
      %v1078 = vunpack.c.l.bf16 %v1062
      %v1079 = vld [vmem:[%s7] sm:$0x1]
      %v1081 = vlaneseq
      %v1082 = vshrl.u32 %v1081, 7
      %v1083 = vsub.s32 0, %v1082
      %v1084 = vrot.slane %v1079, %v1083
      %v1086 = vmul.f32 %v1063, %v1084
      %v1087 = vmul.f32 %v1064, %v1084
      %v1088 = vmul.f32 %v1065, %v1084
      %v1089 = vmul.f32 %v1066, %v1084
      %v1090 = vmul.f32 %v1067, %v1084
      %v1091 = vmul.f32 %v1068, %v1084
      %v1092 = vmul.f32 %v1069, %v1084
      %v1093 = vmul.f32 %v1070, %v1084
      %v1094 = vmul.f32 %v1071, %v1084
      %v1095 = vmul.f32 %v1072, %v1084
      %v1096 = vmul.f32 %v1073, %v1084
      %v1097 = vmul.f32 %v1074, %v1084
      %v1098 = vmul.f32 %v1075, %v1084
      %v1099 = vmul.f32 %v1076, %v1084
      %v1100 = vmul.f32 %v1077, %v1084
      %v1101 = vmul.f32 %v1078, %v1084
      %v1102 = vld [vmem:[%s8] sm:$0x1]
      %v1104 = vlaneseq
      %v1105 = vshrl.u32 %v1104, 7
      %v1106 = vsub.s32 0, %v1105
      %v1107 = vrot.slane %v1102, %v1106
      %v1109 = vadd.f32 %v1086, %v1107
      %v1110 = vadd.f32 %v1087, %v1107
      %v1111 = vadd.f32 %v1088, %v1107
      %v1112 = vadd.f32 %v1089, %v1107
      %v1113 = vadd.f32 %v1090, %v1107
      %v1114 = vadd.f32 %v1091, %v1107
      %v1115 = vadd.f32 %v1092, %v1107
      %v1116 = vadd.f32 %v1093, %v1107
      %v1117 = vadd.f32 %v1094, %v1107
      %v1118 = vadd.f32 %v1095, %v1107
      %v1119 = vadd.f32 %v1096, %v1107
      %v1120 = vadd.f32 %v1097, %v1107
      %v1121 = vadd.f32 %v1098, %v1107
      %v1122 = vadd.f32 %v1099, %v1107
      %v1123 = vadd.f32 %v1100, %v1107
      %v1124 = vadd.f32 %v1101, %v1107
      %v1125 = vpack.c.bf16 %v1110, %v1109
      %v1126 = vpack.c.bf16 %v1112, %v1111
      %v1127 = vpack.c.bf16 %v1114, %v1113
      %v1128 = vpack.c.bf16 %v1116, %v1115
      %v1129 = vpack.c.bf16 %v1118, %v1117
      %v1130 = vpack.c.bf16 %v1120, %v1119
      %v1131 = vpack.c.bf16 %v1122, %v1121
      %v1132 = vpack.c.bf16 %v1124, %v1123
      %v1133 = vld [vmem:[%s11] sm:$0xf]
      %v1134 = vld [vmem:[%s11 + $0x4] sm:$0xf]
      %v1135 = vld [vmem:[%s11 + $0x8] sm:$0xf]
      %v1136 = vld [vmem:[%s11 + $0xc] sm:$0xf]
      %v1137 = vld [vmem:[%s11 + $0x10] sm:$0xf]
      %v1138 = vld [vmem:[%s11 + $0x14] sm:$0xf]
      %v1139 = vld [vmem:[%s11 + $0x18] sm:$0xf]
      %v1140 = vld [vmem:[%s11 + $0x1c] sm:$0xf]
      %v1141 = vld [vmem:[%s11 + $0x20] sm:$0xf]
      %v1142 = vld [vmem:[%s11 + $0x24] sm:$0xf]
      %v1143 = vld [vmem:[%s11 + $0x28] sm:$0xf]
      %v1144 = vld [vmem:[%s11 + $0x2c] sm:$0xf]
      %v1145 = vld [vmem:[%s11 + $0x30] sm:$0xf]
      %v1146 = vld [vmem:[%s11 + $0x34] sm:$0xf]
      %v1147 = vld [vmem:[%s11 + $0x38] sm:$0xf]
      %v1148 = vld [vmem:[%s11 + $0x3c] sm:$0xf]
      %v1165 = vunpack.c.l.b16 %v1133
      %v1166 = vunpack.c.l.b16 %v1134
      %v1167 = vunpack.c.l.b16 %v1135
      %v1168 = vunpack.c.l.b16 %v1136
      %v1169 = vunpack.c.l.b16 %v1137
      %v1170 = vunpack.c.l.b16 %v1138
      %v1171 = vunpack.c.l.b16 %v1139
      %v1172 = vunpack.c.l.b16 %v1140
      %v1173 = vunpack.c.l.b16 %v1141
      %v1174 = vunpack.c.l.b16 %v1142
      %v1175 = vunpack.c.l.b16 %v1143
      %v1176 = vunpack.c.l.b16 %v1144
      %v1177 = vunpack.c.l.b16 %v1145
      %v1178 = vunpack.c.l.b16 %v1146
      %v1179 = vunpack.c.l.b16 %v1147
      %v1180 = vunpack.c.l.b16 %v1148
      %v1181 = vpack.c.b16 %v1166, %v1165
      %v1182 = vpack.c.b16 %v1168, %v1167
      %v1183 = vpack.c.b16 %v1170, %v1169
      %v1184 = vpack.c.b16 %v1172, %v1171
      %v1185 = vpack.c.b16 %v1174, %v1173
      %v1186 = vpack.c.b16 %v1176, %v1175
      %v1187 = vpack.c.b16 %v1178, %v1177
      %v1188 = vpack.c.b16 %v1180, %v1179
      %1197 = vmatprep.subr.bf16.mxu0 0
      %1198 = vmatpush1.bf16.msra.mxu0 %v1181
      %1199 = vmatprep.subr.bf16.mxu0 0
      %1200 = vmatpush1.bf16.msra.mxu0 %v1182
      %1201 = vmatprep.subr.bf16.mxu0 0
      %1202 = vmatpush1.bf16.msra.mxu0 %v1183
      %1203 = vmatprep.subr.bf16.mxu0 0
      %1204 = vmatpush1.bf16.msra.mxu0 %v1184
      %1205 = vmatprep.subr.bf16.mxu0 0
      %1206 = vmatpush1.bf16.msra.mxu0 %v1185
      %1207 = vmatprep.subr.bf16.mxu0 0
      %1208 = vmatpush1.bf16.msra.mxu0 %v1186
      %1209 = vmatprep.subr.bf16.mxu0 0
      %1210 = vmatpush1.bf16.msra.mxu0 %v1187
      %1211 = vmatprep.subr.bf16.mxu0 0
      %1212 = vmatpush1.bf16.msra.mxu0 %v1188
      %1213 = vmatprep.subr.bf16.mxu0 0
      %1214 = vmatpush1.bf16.msra.mxu0 0
      %1215 = vmatprep.subr.bf16.mxu0 0
      %1216 = vmatpush1.bf16.msra.mxu0 0
      %1217 = vmatprep.subr.bf16.mxu0 0
      %1218 = vmatpush1.bf16.msra.mxu0 0
      %1219 = vmatprep.subr.bf16.mxu0 0
      %1220 = vmatpush1.bf16.msra.mxu0 0
      %1221 = vmatprep.subr.bf16.mxu0 0
      %1222 = vmatpush1.bf16.msra.mxu0 0
      %1223 = vmatprep.subr.bf16.mxu0 0
      %1224 = vmatpush1.bf16.msra.mxu0 0
      %1225 = vmatprep.subr.bf16.mxu0 0
      %1226 = vmatpush1.bf16.msra.mxu0 0
      %1227 = vmatprep.subr.bf16.mxu0 0
      %1228 = vmatpush1.bf16.msra.mxu0 0
      %1229 = vmatprep.mubr.bf16.mxu0 0
      %1230 = vmatmul.mubr.bf16.gmra.mrb[0].mxu0 %v1125
      %v1231 = vpop.f32.mrb[0].mxu0
      %v1232 = vadd.f32 0.0, %v1231
      %v1233 = vpop.f32.mrb[0].mxu0
      %v1234 = vpop.f32.mrb[0].mxu0
      %v1235 = vadd.f32 0.0, %v1234
      %v1236 = vpop.f32.mrb[0].mxu0
      %1237 = vmatprep.mubr.bf16.mxu0 0
      %1238 = vmatmul.mubr.bf16.gmra.mrb[0].mxu0 %v1126
      %v1239 = vpop.f32.mrb[0].mxu0
      %v1240 = vadd.f32 0.0, %v1239
      %v1241 = vpop.f32.mrb[0].mxu0
      %v1242 = vpop.f32.mrb[0].mxu0
      %v1243 = vadd.f32 0.0, %v1242
      %v1244 = vpop.f32.mrb[0].mxu0
      %1245 = vmatprep.mubr.bf16.mxu0 0
      %1246 = vmatmul.mubr.bf16.gmra.mrb[0].mxu0 %v1127
      %v1247 = vpop.f32.mrb[0].mxu0
      %v1248 = vadd.f32 0.0, %v1247
      %v1249 = vpop.f32.mrb[0].mxu0
      %v1250 = vpop.f32.mrb[0].mxu0
      %v1251 = vadd.f32 0.0, %v1250
      %v1252 = vpop.f32.mrb[0].mxu0
      %1253 = vmatprep.mubr.bf16.mxu0 0
      %1254 = vmatmul.mubr.bf16.gmra.mrb[0].mxu0 %v1128
      %v1255 = vpop.f32.mrb[0].mxu0
      %v1256 = vadd.f32 0.0, %v1255
      %v1257 = vpop.f32.mrb[0].mxu0
      %v1258 = vpop.f32.mrb[0].mxu0
      %v1259 = vadd.f32 0.0, %v1258
      %v1260 = vpop.f32.mrb[0].mxu0
      %1261 = vmatprep.mubr.bf16.mxu0 0
      %1262 = vmatmul.mubr.bf16.gmra.mrb[0].mxu0 %v1129
      %v1263 = vpop.f32.mrb[0].mxu0
      %v1264 = vadd.f32 0.0, %v1263
      %v1265 = vpop.f32.mrb[0].mxu0
      %v1266 = vpop.f32.mrb[0].mxu0
      %v1267 = vadd.f32 0.0, %v1266
      %v1268 = vpop.f32.mrb[0].mxu0
      %1269 = vmatprep.mubr.bf16.mxu0 0
      %1270 = vmatmul.mubr.bf16.gmra.mrb[0].mxu0 %v1130
      %v1271 = vpop.f32.mrb[0].mxu0
      %v1272 = vadd.f32 0.0, %v1271
      %v1273 = vpop.f32.mrb[0].mxu0
      %v1274 = vpop.f32.mrb[0].mxu0
      %v1275 = vadd.f32 0.0, %v1274
      %v1276 = vpop.f32.mrb[0].mxu0
      %1277 = vmatprep.mubr.bf16.mxu0 0
      %1278 = vmatmul.mubr.bf16.gmra.mrb[0].mxu0 %v1131
      %v1279 = vpop.f32.mrb[0].mxu0
      %v1280 = vadd.f32 0.0, %v1279
      %v1281 = vpop.f32.mrb[0].mxu0
      %v1282 = vpop.f32.mrb[0].mxu0
      %v1283 = vadd.f32 0.0, %v1282
      %v1284 = vpop.f32.mrb[0].mxu0
      %1285 = vmatprep.mubr.bf16.mxu0 0
      %1286 = vmatmul.mubr.bf16.gmra.mrb[0].mxu0 %v1132
      %v1287 = vpop.f32.mrb[0].mxu0
      %v1288 = vadd.f32 0.0, %v1287
      %v1289 = vpop.f32.mrb[0].mxu0
      %v1290 = vpop.f32.mrb[0].mxu0
      %v1291 = vadd.f32 0.0, %v1290
      %v1292 = vpop.f32.mrb[0].mxu0
      %1293 = vdwg.mxu0
      %v1294 = vadd.f32 %v985, %v1232
      %v1295 = vadd.f32 %v988, %v1235
      %v1296 = vadd.f32 %v993, %v1240
      %v1297 = vadd.f32 %v996, %v1243
      %v1298 = vadd.f32 %v1001, %v1248
      %v1299 = vadd.f32 %v1004, %v1251
      %v1300 = vadd.f32 %v1009, %v1256
      %v1301 = vadd.f32 %v1012, %v1259
      %v1302 = vadd.f32 %v1017, %v1264
      %v1303 = vadd.f32 %v1020, %v1267
      %v1304 = vadd.f32 %v1025, %v1272
      %v1305 = vadd.f32 %v1028, %v1275
      %v1306 = vadd.f32 %v1033, %v1280
      %v1307 = vadd.f32 %v1036, %v1283
      %v1308 = vadd.f32 %v1041, %v1288
      %v1309 = vadd.f32 %v1044, %v1291
      %v1310 = vld [vmem:[%s12] sm:$0x1]
      %v1312 = vlaneseq
      %v1313 = vshrl.u32 %v1312, 7
      %v1314 = vsub.s32 0, %v1313
      %v1315 = vrot.slane %v1310, %v1314
      %v1317 = vadd.f32 %v1294, %v1315
      %v1318 = vadd.f32 %v1295, %v1315
      %v1319 = vadd.f32 %v1296, %v1315
      %v1320 = vadd.f32 %v1297, %v1315
      %v1321 = vadd.f32 %v1298, %v1315
      %v1322 = vadd.f32 %v1299, %v1315
      %v1323 = vadd.f32 %v1300, %v1315
      %v1324 = vadd.f32 %v1301, %v1315
      %v1325 = vadd.f32 %v1302, %v1315
      %v1326 = vadd.f32 %v1303, %v1315
      %v1327 = vadd.f32 %v1304, %v1315
      %v1328 = vadd.f32 %v1305, %v1315
      %v1329 = vadd.f32 %v1306, %v1315
      %v1330 = vadd.f32 %v1307, %v1315
      %v1331 = vadd.f32 %v1308, %v1315
      %v1332 = vadd.f32 %v1309, %v1315
      %v1333 = vmax.f32 %v1317, 0.0
      %v1334 = vmax.f32 %v1318, 0.0
      %v1335 = vmax.f32 %v1319, 0.0
      %v1336 = vmax.f32 %v1320, 0.0
      %v1337 = vmax.f32 %v1321, 0.0
      %v1338 = vmax.f32 %v1322, 0.0
      %v1339 = vmax.f32 %v1323, 0.0
      %v1340 = vmax.f32 %v1324, 0.0
      %v1341 = vmax.f32 %v1325, 0.0
      %v1342 = vmax.f32 %v1326, 0.0
      %v1343 = vmax.f32 %v1327, 0.0
      %v1344 = vmax.f32 %v1328, 0.0
      %v1345 = vmax.f32 %v1329, 0.0
      %v1346 = vmax.f32 %v1330, 0.0
      %v1347 = vmax.f32 %v1331, 0.0
      %v1348 = vmax.f32 %v1332, 0.0
      %1349 = vst [vmem:[%s550] sm:$0xff] %v1333
      %1350 = vst [vmem:[%s550 + $0x8] sm:$0xff] %v1334
      %1351 = vst [vmem:[%s550 + $0x10] sm:$0xff] %v1335
      %1352 = vst [vmem:[%s550 + $0x18] sm:$0xff] %v1336
      %1353 = vst [vmem:[%s550 + $0x20] sm:$0xff] %v1337
      %1354 = vst [vmem:[%s550 + $0x28] sm:$0xff] %v1338
      %1355 = vst [vmem:[%s550 + $0x30] sm:$0xff] %v1339
      %1356 = vst [vmem:[%s550 + $0x38] sm:$0xff] %v1340
      %1357 = vst [vmem:[%s550 + $0x40] sm:$0xff] %v1341
      %1358 = vst [vmem:[%s550 + $0x48] sm:$0xff] %v1342
      %1359 = vst [vmem:[%s550 + $0x50] sm:$0xff] %v1343
      %1360 = vst [vmem:[%s550 + $0x58] sm:$0xff] %v1344
      %1361 = vst [vmem:[%s550 + $0x60] sm:$0xff] %v1345
      %1362 = vst [vmem:[%s550 + $0x68] sm:$0xff] %v1346
      %1363 = vst [vmem:[%s550 + $0x70] sm:$0xff] %v1347
      %1364 = vst [vmem:[%s550 + $0x78] sm:$0xff] %v1348
      %s1365 = smul.u32 16, %s29
      %p1366 = scmp.lt.s32.totalorder %s28, 1
      %s1367 = scalar_select %p1366, %s28, 1
      %p1368 = scmp.lt.s32.totalorder %s1365, 15
      %s1369 = scalar_select %p1368, %s1365, 15
      %s1370 = smul.addr %s1367, 16
      %s1371 = sadd.s32 %s1369, %s1370
      %s1372 = smul.addr %s1371, 8
      %s1373 = scalar_lea.vmem %s13, %s1372
      // Predicated region
      $region73: #{gcn_forward.7} parent=71 // pred_check
        %p1374 = pneg %p350
      $region74: #{gcn_forward.7} parent=71 // pred_check_branch
        %1376 = sbr.rel (%p1374) target = $region76
      $region75: #{gcn_forward.7} parent=71 // pred_region
        %s1377 = smul.u32 16, %s29
      $region76: #{gcn_forward.7} parent=71 // pred_fallthru
        _
    $region72: #{gcn_forward.7} parent=5 // pred_fallthru
      _
    %p1378 = scmp.le.s32.totalorder 2, %s19
    // Predicated region
    $region77: #{gcn_forward.7} parent=5 // pred_check
      %p1379 = pneg %p1378
    $region78: #{gcn_forward.7} parent=5 // pred_check_branch
      %1381 = sbr.rel (%p1379) target = $region80
    $region79: #{gcn_forward.7} parent=5 // pred_region
      %s1382 = ssub.s32 %s19, 2
      // Predicated region
      $region81: #{gcn_forward.7} parent=79 // pred_check
        %p1383 = pneg %p356
      $region82: #{gcn_forward.7} parent=79 // pred_check_branch
        %1385 = sbr.rel (%p1383) target = $region84
      $region83: #{gcn_forward.7} parent=79 // pred_region
        %s1386 = smul.u32 16, %s31
        %p1387 = scmp.lt.s32.totalorder %s30, 1
        %s1388 = scalar_select %p1387, %s30, 1
        %p1389 = scmp.lt.s32.totalorder %s1386, 15
        %s1390 = scalar_select %p1389, %s1386, 15
        %s1391 = smul.addr %s1388, 16
        %s1392 = sadd.s32 %s1390, %s1391
        %s1393 = smul.addr %s1392, 8
        %s1394 = scalar_lea.vmem %s13, %s1393
      $region84: #{gcn_forward.7} parent=79 // pred_fallthru
        _
    $region80: #{gcn_forward.7} parent=5 // pred_fallthru
      _
  $region6: #{gcn_forward.7} parent=0 // loop_footer
    %s23 = sadd.s32 1, %s19
  $region7: #{gcn_forward.7} parent=0 // loop_footer_branch
    %18 = sbr.rel target = $region3
  $region8: #{gcn_forward.7} parent=0 // loop_exit
    _

// kernel: gcn_forward.4
$region0: #{gcn_forward.4}
  #allocation0 [shape = 'u32[]', space=smem, size = 0x4, offset = 0x4, fixed_abs, tag = 'smem constant byte address 0x4 - core index']
  #allocation1 [shape = 'u32[144,128]{1,0:T(1,128)}', space=vmem, size = 0x12000, scoped, tag = 'internal scratch']
  %s0 = inlined_call_operand.vmem [shape: bf16[2,128,128], index: 0, kind: input, shape index: {}]
  %s1 = inlined_call_operand.vmem [shape: f32[2,128,1], index: 1, kind: input, shape index: {}]
  %s2 = inlined_call_operand.vmem [shape: bf16[2,128,128], index: 2, kind: input, shape index: {}]
  %s3 = inlined_call_operand.vmem [shape: f32[1,128], index: 3, kind: input, shape index: {}]
  %s4 = inlined_call_operand.vmem [shape: f32[1,128], index: 4, kind: input, shape index: {}]
  %s5 = inlined_call_operand.vmem [shape: bf16[128,128], index: 5, kind: input, shape index: {}]
  %s6 = inlined_call_operand.vmem [shape: bf16[128,128], index: 6, kind: input, shape index: {}]
  %s7 = inlined_call_operand.vmem [shape: f32[1,128], index: 7, kind: input, shape index: {}]
  %s8 = inlined_call_operand.vmem [shape: bf16[2,128,128], index: 8, kind: output, shape index: {0}]
  %s9 = inlined_call_operand.vmem [shape: f32[2,1,128], index: 9, kind: output, shape index: {1}]
  %s10 = inlined_call_operand.vmem [shape: f32[2,1,128], index: 10, kind: output, shape index: {2}]
  %11 = xla_tuple %s8, %s9, %s10
  %s12 = sld [smem:[#allocation0]]
  $region81: #{gcn_forward.4} parent=0
    _
  %s14 = ssub.s32 1, %s12
  %s15 = scalar_select 0, %s14, %s12
  loop: start=0, step=1, limit=4
  $region2: #{gcn_forward.4} parent=0 // loop_pre_header
    _
  $region3: #{gcn_forward.4} parent=0 // loop_header
    %s17 = sphi 0, %s21
    %p18 = scmp.ge.s32.totalorder %s17, 4
    %s24 = sphi 0, %s36
    %s25 = sphi 0, %s32
    %s26 = sphi 0, %s24
    %s27 = sphi 0, %s25
    %s28 = sphi 0, %s26
    %s29 = sphi 0, %s27
    %s41 = sphi 0, %s43
    %s44 = sphi 0, %s41
    %s45 = sphi 0, %s44
    %s61 = sphi 0, %s45
    %s69 = sphi 0, %s71
    %s72 = sphi 0, %s69
    %s73 = sphi 0, %s72
    %s89 = sphi 0, %s73
    %s95 = sphi 0, %s97
    %s98 = sphi 0, %s95
    %s99 = sphi 0, %s98
    %s115 = sphi 0, %s99
    %s119 = sphi 0, %s119
    %s121 = sphi 0, %s119
    %s122 = sphi 0, %s121
    %s136 = sphi 0, %s122
    %s140 = sphi 0, %s140
    %s142 = sphi 0, %s140
    %s143 = sphi 0, %s142
    %s157 = sphi 0, %s143
    %s161 = sphi 0, %s161
    %s163 = sphi 0, %s161
    %s164 = sphi 0, %s163
    %s178 = sphi 0, %s164
    %s182 = sphi 0, %s182
    %s184 = sphi 0, %s182
    %s185 = sphi 0, %s184
    %s199 = sphi 0, %s185
    %s203 = sphi 0, %s203
    %s205 = sphi 0, %s203
    %s206 = sphi 0, %s205
    %s220 = sphi 0, %s206
    %s228 = sphi 0, %s230
    %s231 = sphi 0, %s228
    %s232 = sphi 0, %s231
    %s248 = sphi 0, %s232
    %s256 = sphi 0, %s258
    %s259 = sphi 0, %s256
    %s260 = sphi 0, %s259
    %s276 = sphi 0, %s260
    %s284 = sphi 0, %s286
    %s287 = sphi 0, %s284
    %s288 = sphi 0, %s287
    %s304 = sphi 0, %s288
  $region4: #{gcn_forward.4} parent=0 // loop_header_branch
    %20 = sbr.rel (%p18) target = $region8
  $region5: #{gcn_forward.4} parent=0 // loop_body
    %s22 = ssub.s32 %s17, 1
    %s23 = ssub.s32 %s17, 2
    %s30 = sadd.s32 1, %s25
    %p31 = scmp.ge.s32.totalorder %s30, 1
    %s32 = scalar_select %p31, 0, %s30
    %s33 = sadd.s32 1, %s24
    %s34 = scalar_select %p31, %s33, %s24
    %p35 = scmp.ge.s32.totalorder %s34, 2
    %s36 = scalar_select %p35, 0, %s34
    %s37 = ssub.s32 %s24, %s36
    %s38 = ssub.s32 %s25, %s32
    %s39 = sor.u32 %s37, %s38
    %p40 = scmp.eq.s32.totalorder %s39, 0
    %s42 = sadd.s32 %s41, 1
    %s43 = scalar_select %p40, %s41, %s42
    %p46 = pneg %p40
    %p47 = scmp.eq.s32.totalorder %s17, 1
    %p48 = por %p46, %p47
    %p49 = scmp.ne.s32.totalorder %s41, %s44
    %p50 = scmp.eq.s32.totalorder %s17, 0
    %p51 = por %p49, %p50
    %p52 = scmp.ne.s32.totalorder %s41, %s44
    %p53 = scmp.eq.s32.totalorder %s22, 1
    %p54 = por %p52, %p53
    %p55 = scmp.ne.s32.totalorder %s44, %s45
    %p56 = scmp.eq.s32.totalorder %s22, 0
    %p57 = por %p55, %p56
    %p58 = scmp.ne.s32.totalorder %s44, %s45
    %p59 = scmp.eq.s32.totalorder %s23, 1
    %p60 = por %p58, %p59
    %p62 = scmp.ne.s32.totalorder %s45, %s61
    %p63 = scmp.eq.s32.totalorder %s23, 0
    %p64 = por %p62, %p63
    %s65 = ssub.s32 %s24, %s36
    %s66 = ssub.s32 %s25, %s32
    %s67 = sor.u32 %s65, %s66
    %p68 = scmp.eq.s32.totalorder %s67, 0
    %s70 = sadd.s32 %s69, 1
    %s71 = scalar_select %p68, %s69, %s70
    %p74 = pneg %p68
    %p75 = scmp.eq.s32.totalorder %s17, 1
    %p76 = por %p74, %p75
    %p77 = scmp.ne.s32.totalorder %s69, %s72
    %p78 = scmp.eq.s32.totalorder %s17, 0
    %p79 = por %p77, %p78
    %p80 = scmp.ne.s32.totalorder %s69, %s72
    %p81 = scmp.eq.s32.totalorder %s22, 1
    %p82 = por %p80, %p81
    %p83 = scmp.ne.s32.totalorder %s72, %s73
    %p84 = scmp.eq.s32.totalorder %s22, 0
    %p85 = por %p83, %p84
    %p86 = scmp.ne.s32.totalorder %s72, %s73
    %p87 = scmp.eq.s32.totalorder %s23, 1
    %p88 = por %p86, %p87
    %p90 = scmp.ne.s32.totalorder %s73, %s89
    %p91 = scmp.eq.s32.totalorder %s23, 0
    %p92 = por %p90, %p91
    %s93 = ssub.s32 %s24, %s36
    %p94 = scmp.eq.s32.totalorder %s93, 0
    %s96 = sadd.s32 %s95, 1
    %s97 = scalar_select %p94, %s95, %s96
    %p100 = pneg %p94
    %p101 = scmp.eq.s32.totalorder %s17, 1
    %p102 = por %p100, %p101
    %p103 = scmp.ne.s32.totalorder %s95, %s98
    %p104 = scmp.eq.s32.totalorder %s17, 0
    %p105 = por %p103, %p104
    %p106 = scmp.ne.s32.totalorder %s95, %s98
    %p107 = scmp.eq.s32.totalorder %s22, 1
    %p108 = por %p106, %p107
    %p109 = scmp.ne.s32.totalorder %s98, %s99
    %p110 = scmp.eq.s32.totalorder %s22, 0
    %p111 = por %p109, %p110
    %p112 = scmp.ne.s32.totalorder %s98, %s99
    %p113 = scmp.eq.s32.totalorder %s23, 1
    %p114 = por %p112, %p113
    %p116 = scmp.ne.s32.totalorder %s99, %s115
    %p117 = scmp.eq.s32.totalorder %s23, 0
    %p118 = por %p116, %p117
    %s120 = sadd.s32 %s119, 1
    %p123 = scmp.eq.s32.totalorder %s17, 1
    %p124 = scmp.ne.s32.totalorder %s119, %s121
    %p125 = scmp.eq.s32.totalorder %s17, 0
    %p126 = por %p124, %p125
    %p127 = scmp.ne.s32.totalorder %s119, %s121
    %p128 = scmp.eq.s32.totalorder %s22, 1
    %p129 = por %p127, %p128
    %p130 = scmp.ne.s32.totalorder %s121, %s122
    %p131 = scmp.eq.s32.totalorder %s22, 0
    %p132 = por %p130, %p131
    %p133 = scmp.ne.s32.totalorder %s121, %s122
    %p134 = scmp.eq.s32.totalorder %s23, 1
    %p135 = por %p133, %p134
    %p137 = scmp.ne.s32.totalorder %s122, %s136
    %p138 = scmp.eq.s32.totalorder %s23, 0
    %p139 = por %p137, %p138
    %s141 = sadd.s32 %s140, 1
    %p144 = scmp.eq.s32.totalorder %s17, 1
    %p145 = scmp.ne.s32.totalorder %s140, %s142
    %p146 = scmp.eq.s32.totalorder %s17, 0
    %p147 = por %p145, %p146
    %p148 = scmp.ne.s32.totalorder %s140, %s142
    %p149 = scmp.eq.s32.totalorder %s22, 1
    %p150 = por %p148, %p149
    %p151 = scmp.ne.s32.totalorder %s142, %s143
    %p152 = scmp.eq.s32.totalorder %s22, 0
    %p153 = por %p151, %p152
    %p154 = scmp.ne.s32.totalorder %s142, %s143
    %p155 = scmp.eq.s32.totalorder %s23, 1
    %p156 = por %p154, %p155
    %p158 = scmp.ne.s32.totalorder %s143, %s157
    %p159 = scmp.eq.s32.totalorder %s23, 0
    %p160 = por %p158, %p159
    %s162 = sadd.s32 %s161, 1
    %p165 = scmp.eq.s32.totalorder %s17, 1
    %p166 = scmp.ne.s32.totalorder %s161, %s163
    %p167 = scmp.eq.s32.totalorder %s17, 0
    %p168 = por %p166, %p167
    %p169 = scmp.ne.s32.totalorder %s161, %s163
    %p170 = scmp.eq.s32.totalorder %s22, 1
    %p171 = por %p169, %p170
    %p172 = scmp.ne.s32.totalorder %s163, %s164
    %p173 = scmp.eq.s32.totalorder %s22, 0
    %p174 = por %p172, %p173
    %p175 = scmp.ne.s32.totalorder %s163, %s164
    %p176 = scmp.eq.s32.totalorder %s23, 1
    %p177 = por %p175, %p176
    %p179 = scmp.ne.s32.totalorder %s164, %s178
    %p180 = scmp.eq.s32.totalorder %s23, 0
    %p181 = por %p179, %p180
    %s183 = sadd.s32 %s182, 1
    %p186 = scmp.eq.s32.totalorder %s17, 1
    %p187 = scmp.ne.s32.totalorder %s182, %s184
    %p188 = scmp.eq.s32.totalorder %s17, 0
    %p189 = por %p187, %p188
    %p190 = scmp.ne.s32.totalorder %s182, %s184
    %p191 = scmp.eq.s32.totalorder %s22, 1
    %p192 = por %p190, %p191
    %p193 = scmp.ne.s32.totalorder %s184, %s185
    %p194 = scmp.eq.s32.totalorder %s22, 0
    %p195 = por %p193, %p194
    %p196 = scmp.ne.s32.totalorder %s184, %s185
    %p197 = scmp.eq.s32.totalorder %s23, 1
    %p198 = por %p196, %p197
    %p200 = scmp.ne.s32.totalorder %s185, %s199
    %p201 = scmp.eq.s32.totalorder %s23, 0
    %p202 = por %p200, %p201
    %s204 = sadd.s32 %s203, 1
    %p207 = scmp.eq.s32.totalorder %s17, 1
    %p208 = scmp.ne.s32.totalorder %s203, %s205
    %p209 = scmp.eq.s32.totalorder %s17, 0
    %p210 = por %p208, %p209
    %p211 = scmp.ne.s32.totalorder %s203, %s205
    %p212 = scmp.eq.s32.totalorder %s22, 1
    %p213 = por %p211, %p212
    %p214 = scmp.ne.s32.totalorder %s205, %s206
    %p215 = scmp.eq.s32.totalorder %s22, 0
    %p216 = por %p214, %p215
    %p217 = scmp.ne.s32.totalorder %s205, %s206
    %p218 = scmp.eq.s32.totalorder %s23, 1
    %p219 = por %p217, %p218
    %p221 = scmp.ne.s32.totalorder %s206, %s220
    %p222 = scmp.eq.s32.totalorder %s23, 0
    %p223 = por %p221, %p222
    %s224 = ssub.s32 %s24, %s36
    %s225 = ssub.s32 %s25, %s32
    %s226 = sor.u32 %s224, %s225
    %p227 = scmp.eq.s32.totalorder %s226, 0
    %s229 = sadd.s32 %s228, 1
    %s230 = scalar_select %p227, %s228, %s229
    %p233 = pneg %p227
    %p234 = scmp.eq.s32.totalorder %s17, 1
    %p235 = por %p233, %p234
    %p236 = scmp.ne.s32.totalorder %s228, %s231
    %p237 = scmp.eq.s32.totalorder %s17, 0
    %p238 = por %p236, %p237
    %p239 = scmp.ne.s32.totalorder %s228, %s231
    %p240 = scmp.eq.s32.totalorder %s22, 1
    %p241 = por %p239, %p240
    %p242 = scmp.ne.s32.totalorder %s231, %s232
    %p243 = scmp.eq.s32.totalorder %s22, 0
    %p244 = por %p242, %p243
    %p245 = scmp.ne.s32.totalorder %s231, %s232
    %p246 = scmp.eq.s32.totalorder %s23, 1
    %p247 = por %p245, %p246
    %p249 = scmp.ne.s32.totalorder %s232, %s248
    %p250 = scmp.eq.s32.totalorder %s23, 0
    %p251 = por %p249, %p250
    %s252 = sadd.s32 %s24, %s25
    %s253 = sadd.s32 %s36, %s32
    %s254 = ssub.s32 %s252, %s253
    %p255 = scmp.eq.s32.totalorder %s254, 0
    %s257 = sadd.s32 %s256, 1
    %s258 = scalar_select %p255, %s256, %s257
    %p261 = pneg %p255
    %p262 = scmp.eq.s32.totalorder %s17, 1
    %p263 = por %p261, %p262
    %p264 = scmp.ne.s32.totalorder %s256, %s259
    %p265 = scmp.eq.s32.totalorder %s17, 0
    %p266 = por %p264, %p265
    %p267 = scmp.ne.s32.totalorder %s256, %s259
    %p268 = scmp.eq.s32.totalorder %s22, 1
    %p269 = por %p267, %p268
    %p270 = scmp.ne.s32.totalorder %s259, %s260
    %p271 = scmp.eq.s32.totalorder %s22, 0
    %p272 = por %p270, %p271
    %p273 = scmp.ne.s32.totalorder %s259, %s260
    %p274 = scmp.eq.s32.totalorder %s23, 1
    %p275 = por %p273, %p274
    %p277 = scmp.ne.s32.totalorder %s260, %s276
    %p278 = scmp.eq.s32.totalorder %s23, 0
    %p279 = por %p277, %p278
    %s280 = sadd.s32 %s24, %s25
    %s281 = sadd.s32 %s36, %s32
    %s282 = ssub.s32 %s280, %s281
    %p283 = scmp.eq.s32.totalorder %s282, 0
    %s285 = sadd.s32 %s284, 1
    %s286 = scalar_select %p283, %s284, %s285
    %p289 = pneg %p283
    %p290 = scmp.eq.s32.totalorder %s17, 1
    %p291 = por %p289, %p290
    %p292 = scmp.ne.s32.totalorder %s284, %s287
    %p293 = scmp.eq.s32.totalorder %s17, 0
    %p294 = por %p292, %p293
    %p295 = scmp.ne.s32.totalorder %s284, %s287
    %p296 = scmp.eq.s32.totalorder %s22, 1
    %p297 = por %p295, %p296
    %p298 = scmp.ne.s32.totalorder %s287, %s288
    %p299 = scmp.eq.s32.totalorder %s22, 0
    %p300 = por %p298, %p299
    %p301 = scmp.ne.s32.totalorder %s287, %s288
    %p302 = scmp.eq.s32.totalorder %s23, 1
    %p303 = por %p301, %p302
    %p305 = scmp.ne.s32.totalorder %s288, %s304
    %p306 = scmp.eq.s32.totalorder %s23, 0
    %p307 = por %p305, %p306
    %p308 = scmp.le.s32.totalorder 1, %s17
    %p309 = scmp.lt.s32.totalorder %s17, 3
    %p310 = pnand %p308, %p309
    %p311 = pneg %p310
    // Predicated region
    $region9: #{gcn_forward.4} parent=5 // pred_check
      _
    $region10: #{gcn_forward.4} parent=5 // pred_check_branch
      %313 = sbr.rel (%p310) target = $region12
    $region11: #{gcn_forward.4} parent=5 // pred_region
      %s314 = ssub.s32 %s17, 1
      // Predicated region
      $region13: #{gcn_forward.4} parent=11 // pred_check
        %p315 = pneg %p132
      $region14: #{gcn_forward.4} parent=11 // pred_check_branch
        %317 = sbr.rel (%p315) target = $region16
      $region15: #{gcn_forward.4} parent=11 // pred_region
        _
      $region16: #{gcn_forward.4} parent=11 // pred_fallthru
        _
      // Predicated region
      $region17: #{gcn_forward.4} parent=11 // pred_check
        %p318 = pneg %p153
      $region18: #{gcn_forward.4} parent=11 // pred_check_branch
        %320 = sbr.rel (%p318) target = $region20
      $region19: #{gcn_forward.4} parent=11 // pred_region
        _
      $region20: #{gcn_forward.4} parent=11 // pred_fallthru
        _
      // Predicated region
      $region21: #{gcn_forward.4} parent=11 // pred_check
        %p321 = pneg %p174
      $region22: #{gcn_forward.4} parent=11 // pred_check_branch
        %323 = sbr.rel (%p321) target = $region24
      $region23: #{gcn_forward.4} parent=11 // pred_region
        _
      $region24: #{gcn_forward.4} parent=11 // pred_fallthru
        _
      // Predicated region
      $region25: #{gcn_forward.4} parent=11 // pred_check
        %p324 = pneg %p195
      $region26: #{gcn_forward.4} parent=11 // pred_check_branch
        %326 = sbr.rel (%p324) target = $region28
      $region27: #{gcn_forward.4} parent=11 // pred_region
        _
      $region28: #{gcn_forward.4} parent=11 // pred_fallthru
        _
      // Predicated region
      $region29: #{gcn_forward.4} parent=11 // pred_check
        %p327 = pneg %p216
      $region30: #{gcn_forward.4} parent=11 // pred_check_branch
        %329 = sbr.rel (%p327) target = $region32
      $region31: #{gcn_forward.4} parent=11 // pred_region
        _
      $region32: #{gcn_forward.4} parent=11 // pred_fallthru
        _
    $region12: #{gcn_forward.4} parent=5 // pred_fallthru
      _
    %p330 = scmp.lt.s32.totalorder %s17, 2
    // Predicated region
    $region33: #{gcn_forward.4} parent=5 // pred_check
      %p331 = pneg %p330
    $region34: #{gcn_forward.4} parent=5 // pred_check_branch
      %333 = sbr.rel (%p331) target = $region36
    $region35: #{gcn_forward.4} parent=5 // pred_region
      // Predicated region
      $region37: #{gcn_forward.4} parent=35 // pred_check
        %p334 = pneg %p51
      $region38: #{gcn_forward.4} parent=35 // pred_check_branch
        %336 = sbr.rel (%p334) target = $region40
      $region39: #{gcn_forward.4} parent=35 // pred_region
        %s337 = smul.u32 16, %s25
        %p338 = scmp.lt.s32.totalorder %s24, 1
        %s339 = scalar_select %p338, %s24, 1
        %p340 = scmp.lt.s32.totalorder %s337, 15
        %s341 = scalar_select %p340, %s337, 15
        %s342 = smul.addr %s339, 16
        %s343 = sadd.s32 %s341, %s342
        %s344 = smul.addr %s343, 4
        %s345 = scalar_lea.vmem %s0, %s344
        %s346 = smul.u32 16, %s25
      $region40: #{gcn_forward.4} parent=35 // pred_fallthru
        _
      // Predicated region
      $region41: #{gcn_forward.4} parent=35 // pred_check
        %p347 = pneg %p79
      $region42: #{gcn_forward.4} parent=35 // pred_check_branch
        %349 = sbr.rel (%p347) target = $region44
      $region43: #{gcn_forward.4} parent=35 // pred_region
        %s350 = smul.u32 16, %s25
        %p351 = scmp.lt.s32.totalorder %s24, 1
        %s352 = scalar_select %p351, %s24, 1
        %p353 = scmp.lt.s32.totalorder %s350, 15
        %s354 = scalar_select %p353, %s350, 15
        %s355 = smul.addr %s352, 16
        %s356 = sadd.s32 %s354, %s355
        %s357 = smul.addr %s356, 8
        %s358 = scalar_lea.vmem %s1, %s357
        %s359 = smul.u32 16, %s25
      $region44: #{gcn_forward.4} parent=35 // pred_fallthru
        _
      // Predicated region
      $region45: #{gcn_forward.4} parent=35 // pred_check
        %p360 = pneg %p105
      $region46: #{gcn_forward.4} parent=35 // pred_check_branch
        %362 = sbr.rel (%p360) target = $region48
      $region47: #{gcn_forward.4} parent=35 // pred_region
        %p363 = scmp.lt.s32.totalorder %s24, 1
        %s364 = scalar_select %p363, %s24, 1
        %s365 = smul.addr %s364, 16
        %s366 = smul.addr %s365, 4
        %s367 = scalar_lea.vmem %s2, %s366
      $region48: #{gcn_forward.4} parent=35 // pred_fallthru
        _
    $region36: #{gcn_forward.4} parent=5 // pred_fallthru
      _
    %p368 = scmp.le.s32.totalorder 1, %s17
    %p369 = scmp.lt.s32.totalorder %s17, 3
    %p370 = pnand %p368, %p369
    %p371 = pneg %p370
    // Predicated region
    $region49: #{gcn_forward.4} parent=5 // pred_check
      _
    $region50: #{gcn_forward.4} parent=5 // pred_check_branch
      %373 = sbr.rel (%p370) target = $region52
    $region51: #{gcn_forward.4} parent=5 // pred_region
      %s374 = ssub.s32 %s17, 1
      %s375 = smul.u32 16, %s27
      %p376 = scmp.lt.s32.totalorder %s26, 1
      %s377 = scalar_select %p376, %s26, 1
      %p378 = scmp.lt.s32.totalorder %s375, 15
      %s379 = scalar_select %p378, %s375, 15
      %s380 = smul.addr %s377, 16
      %s381 = sadd.s32 %s379, %s380
      %s382 = smul.addr %s381, 4
      %s383 = scalar_lea.vmem %s0, %s382
      %p384 = pneg %p57
      %p385 = pneg %p54
      %s386 = smul.u32 16, %s27
      %p387 = scmp.lt.s32.totalorder %s26, 1
      %s388 = scalar_select %p387, %s26, 1
      %p389 = scmp.lt.s32.totalorder %s386, 15
      %s390 = scalar_select %p389, %s386, 15
      %s391 = smul.addr %s388, 16
      %s392 = sadd.s32 %s390, %s391
      %s393 = smul.addr %s392, 8
      %s394 = scalar_lea.vmem %s1, %s393
      %p395 = pneg %p85
      %p396 = pneg %p82
      %p397 = scmp.lt.s32.totalorder %s26, 1
      %s398 = scalar_select %p397, %s26, 1
      %s399 = smul.addr %s398, 16
      %s400 = smul.addr %s399, 4
      %s401 = scalar_lea.vmem %s2, %s400
      %p402 = pneg %p111
      %p403 = pneg %p108
      %p404 = pneg %p132
      %p405 = pneg %p129
      %p406 = pneg %p153
      %p407 = pneg %p150
      %p408 = pneg %p174
      %p409 = pneg %p171
      %p410 = pneg %p195
      %p411 = pneg %p192
      %p412 = pneg %p216
      %p413 = pneg %p213
      %p414 = pneg %p244
      %p415 = pneg %p241
      %s416 = smul.u32 16, %s27
      %p417 = scmp.lt.s32.totalorder %s26, 1
      %s418 = scalar_select %p417, %s26, 1
      %p419 = scmp.lt.s32.totalorder %s416, 15
      %s420 = scalar_select %p419, %s416, 15
      %s421 = smul.addr %s418, 16
      %s422 = sadd.s32 %s420, %s421
      %s423 = smul.addr %s422, 4
      %s424 = scalar_lea.vmem %s8, %s423
      %p425 = pneg %p272
      %p426 = pneg %p269
      %s427 = sadd.s32 %s26, %s27
      %p428 = scmp.lt.s32.totalorder %s427, 1
      %s429 = scalar_select %p428, %s427, 1
      %s430 = scalar_lea.vmem %s9, %s429
      %p431 = pneg %p300
      %p432 = pneg %p297
      %s433 = sadd.s32 %s26, %s27
      %p434 = scmp.lt.s32.totalorder %s433, 1
      %s435 = scalar_select %p434, %s433, 1
      %s436 = scalar_lea.vmem %s10, %s435
      %s437 = smul.u32 16, %s27
      %p438 = scmp.lt.s32.totalorder %s26, 1
      %s439 = scalar_select %p438, %s26, 1
      %p440 = scmp.lt.s32.totalorder %s437, 15
      %s441 = scalar_select %p440, %s437, 15
      %s442 = smul.addr %s439, 16
      %s443 = sadd.s32 %s441, %s442
      %s444 = smul.addr %s443, 4
      %s445 = scalar_lea.vmem %s0, %s444
      %s446 = smul.u32 16, %s27
      %s447 = smul.u32 16, %s27
      %p448 = scmp.lt.s32.totalorder %s26, 1
      %s449 = scalar_select %p448, %s26, 1
      %p450 = scmp.lt.s32.totalorder %s447, 15
      %s451 = scalar_select %p450, %s447, 15
      %s452 = smul.addr %s449, 16
      %s453 = sadd.s32 %s451, %s452
      %s454 = smul.addr %s453, 8
      %s455 = scalar_lea.vmem %s1, %s454
      %s456 = smul.u32 16, %s27
      %p457 = scmp.lt.s32.totalorder %s26, 1
      %s458 = scalar_select %p457, %s26, 1
      %s459 = smul.addr %s458, 16
      %s460 = smul.addr %s459, 4
      %s461 = scalar_lea.vmem %s2, %s460
      %s462 = smul.u32 16, %s27
      %p463 = scmp.lt.s32.totalorder %s26, 1
      %s464 = scalar_select %p463, %s26, 1
      %p465 = scmp.lt.s32.totalorder %s462, 15
      %s466 = scalar_select %p465, %s462, 15
      %s467 = smul.addr %s464, 16
      %s468 = sadd.s32 %s466, %s467
      %s469 = smul.addr %s468, 4
      %s470 = scalar_lea.vmem %s8, %s469
      %s471 = smul.u32 16, %s27
      %s472 = sadd.s32 %s26, %s27
      %p473 = scmp.lt.s32.totalorder %s472, 1
      %s474 = scalar_select %p473, %s472, 1
      %s475 = scalar_lea.vmem %s9, %s474
      %s476 = sadd.s32 %s26, %s27
      %s477 = sadd.s32 %s26, %s27
      %p478 = scmp.lt.s32.totalorder %s477, 1
      %s479 = scalar_select %p478, %s477, 1
      %s480 = scalar_lea.vmem %s10, %s479
      %s481 = sadd.s32 %s26, %s27
      %s483 = smul.u32 %s27, 128
      %v484 = vld [vmem:[%s3] sm:$0x1]
      %v485 = vld [vmem:[%s4] sm:$0x1]
      %v486 = vld [vmem:[%s445] sm:$0xf]
      %v487 = vld [vmem:[%s445 + $0x4] sm:$0xf]
      %v488 = vld [vmem:[%s445 + $0x8] sm:$0xf]
      %v489 = vld [vmem:[%s445 + $0xc] sm:$0xf]
      %v490 = vld [vmem:[%s445 + $0x10] sm:$0xf]
      %v491 = vld [vmem:[%s445 + $0x14] sm:$0xf]
      %v492 = vld [vmem:[%s445 + $0x18] sm:$0xf]
      %v493 = vld [vmem:[%s445 + $0x1c] sm:$0xf]
      %v494 = vld [vmem:[%s445 + $0x20] sm:$0xf]
      %v495 = vld [vmem:[%s445 + $0x24] sm:$0xf]
      %v496 = vld [vmem:[%s445 + $0x28] sm:$0xf]
      %v497 = vld [vmem:[%s445 + $0x2c] sm:$0xf]
      %v498 = vld [vmem:[%s445 + $0x30] sm:$0xf]
      %v499 = vld [vmem:[%s445 + $0x34] sm:$0xf]
      %v500 = vld [vmem:[%s445 + $0x38] sm:$0xf]
      %v501 = vld [vmem:[%s445 + $0x3c] sm:$0xf]
      %v502 = vld [vmem:[%s461] sm:$0xf]
      %v503 = vld [vmem:[%s461 + $0x4] sm:$0xf]
      %v504 = vld [vmem:[%s461 + $0x8] sm:$0xf]
      %v505 = vld [vmem:[%s461 + $0xc] sm:$0xf]
      %v506 = vld [vmem:[%s461 + $0x10] sm:$0xf]
      %v507 = vld [vmem:[%s461 + $0x14] sm:$0xf]
      %v508 = vld [vmem:[%s461 + $0x18] sm:$0xf]
      %v509 = vld [vmem:[%s461 + $0x1c] sm:$0xf]
      %v510 = vld [vmem:[%s461 + $0x20] sm:$0xf]
      %v511 = vld [vmem:[%s461 + $0x24] sm:$0xf]
      %v512 = vld [vmem:[%s461 + $0x28] sm:$0xf]
      %v513 = vld [vmem:[%s461 + $0x2c] sm:$0xf]
      %v514 = vld [vmem:[%s461 + $0x30] sm:$0xf]
      %v515 = vld [vmem:[%s461 + $0x34] sm:$0xf]
      %v516 = vld [vmem:[%s461 + $0x38] sm:$0xf]
      %v517 = vld [vmem:[%s461 + $0x3c] sm:$0xf]
      %v534 = vunpack.c.l.b16 %v486
      %v535 = vunpack.c.l.b16 %v487
      %v536 = vunpack.c.l.b16 %v488
      %v537 = vunpack.c.l.b16 %v489
      %v538 = vunpack.c.l.b16 %v490
      %v539 = vunpack.c.l.b16 %v491
      %v540 = vunpack.c.l.b16 %v492
      %v541 = vunpack.c.l.b16 %v493
      %v542 = vunpack.c.l.b16 %v494
      %v543 = vunpack.c.l.b16 %v495
      %v544 = vunpack.c.l.b16 %v496
      %v545 = vunpack.c.l.b16 %v497
      %v546 = vunpack.c.l.b16 %v498
      %v547 = vunpack.c.l.b16 %v499
      %v548 = vunpack.c.l.b16 %v500
      %v549 = vunpack.c.l.b16 %v501
      %v550 = vpack.c.b16 %v535, %v534
      %v551 = vpack.c.b16 %v537, %v536
      %v552 = vpack.c.b16 %v539, %v538
      %v553 = vpack.c.b16 %v541, %v540
      %v554 = vpack.c.b16 %v543, %v542
      %v555 = vpack.c.b16 %v545, %v544
      %v556 = vpack.c.b16 %v547, %v546
      %v557 = vpack.c.b16 %v549, %v548
      %v582 = vunpack.c.l.b16 %v502
      %v583 = vunpack.c.l.b16 %v503
      %v584 = vunpack.c.l.b16 %v504
      %v585 = vunpack.c.l.b16 %v505
      %v586 = vunpack.c.l.b16 %v506
      %v587 = vunpack.c.l.b16 %v507
      %v588 = vunpack.c.l.b16 %v508
      %v589 = vunpack.c.l.b16 %v509
      %v590 = vunpack.c.l.b16 %v510
      %v591 = vunpack.c.l.b16 %v511
      %v592 = vunpack.c.l.b16 %v512
      %v593 = vunpack.c.l.b16 %v513
      %v594 = vunpack.c.l.b16 %v514
      %v595 = vunpack.c.l.b16 %v515
      %v596 = vunpack.c.l.b16 %v516
      %v597 = vunpack.c.l.b16 %v517
      %v598 = vpack.c.b16 %v583, %v582
      %v599 = vpack.c.b16 %v585, %v584
      %v600 = vpack.c.b16 %v587, %v586
      %v601 = vpack.c.b16 %v589, %v588
      %v602 = vpack.c.b16 %v591, %v590
      %v603 = vpack.c.b16 %v593, %v592
      %v604 = vpack.c.b16 %v595, %v594
      %v605 = vpack.c.b16 %v597, %v596
      %614 = vmatprep.subr.bf16.mxu0 0
      %615 = vmatpush1.bf16.msra.mxu0 %v598
      %616 = vmatprep.subr.bf16.mxu0 0
      %617 = vmatpush1.bf16.msra.mxu0 %v599
      %618 = vmatprep.subr.bf16.mxu0 0
      %619 = vmatpush1.bf16.msra.mxu0 %v600
      %620 = vmatprep.subr.bf16.mxu0 0
      %621 = vmatpush1.bf16.msra.mxu0 %v601
      %622 = vmatprep.subr.bf16.mxu0 0
      %623 = vmatpush1.bf16.msra.mxu0 %v602
      %624 = vmatprep.subr.bf16.mxu0 0
      %625 = vmatpush1.bf16.msra.mxu0 %v603
      %626 = vmatprep.subr.bf16.mxu0 0
      %627 = vmatpush1.bf16.msra.mxu0 %v604
      %628 = vmatprep.subr.bf16.mxu0 0
      %629 = vmatpush1.bf16.msra.mxu0 %v605
      %630 = vmatprep.subr.bf16.mxu0 0
      %631 = vmatpush1.bf16.msra.mxu0 0
      %632 = vmatprep.subr.bf16.mxu0 0
      %633 = vmatpush1.bf16.msra.mxu0 0
      %634 = vmatprep.subr.bf16.mxu0 0
      %635 = vmatpush1.bf16.msra.mxu0 0
      %636 = vmatprep.subr.bf16.mxu0 0
      %637 = vmatpush1.bf16.msra.mxu0 0
      %638 = vmatprep.subr.bf16.mxu0 0
      %639 = vmatpush1.bf16.msra.mxu0 0
      %640 = vmatprep.subr.bf16.mxu0 0
      %641 = vmatpush1.bf16.msra.mxu0 0
      %642 = vmatprep.subr.bf16.mxu0 0
      %643 = vmatpush1.bf16.msra.mxu0 0
      %644 = vmatprep.subr.bf16.mxu0 0
      %645 = vmatpush1.bf16.msra.mxu0 0
      %646 = vmatprep.mubr.bf16.mxu0 0
      %647 = vmatmul.mubr.bf16.gmra.mrb[0].mxu0 %v550
      %v648 = vpop.f32.mrb[0].mxu0
      %v649 = vadd.f32 0.0, %v648
      %v650 = vpop.f32.mrb[0].mxu0
      %v651 = vpop.f32.mrb[0].mxu0
      %v652 = vadd.f32 0.0, %v651
      %v653 = vpop.f32.mrb[0].mxu0
      %654 = vmatprep.mubr.bf16.mxu0 0
      %655 = vmatmul.mubr.bf16.gmra.mrb[0].mxu0 %v551
      %v656 = vpop.f32.mrb[0].mxu0
      %v657 = vadd.f32 0.0, %v656
      %v658 = vpop.f32.mrb[0].mxu0
      %v659 = vpop.f32.mrb[0].mxu0
      %v660 = vadd.f32 0.0, %v659
      %v661 = vpop.f32.mrb[0].mxu0
      %662 = vmatprep.mubr.bf16.mxu0 0
      %663 = vmatmul.mubr.bf16.gmra.mrb[0].mxu0 %v552
      %v664 = vpop.f32.mrb[0].mxu0
      %v665 = vadd.f32 0.0, %v664
      %v666 = vpop.f32.mrb[0].mxu0
      %v667 = vpop.f32.mrb[0].mxu0
      %v668 = vadd.f32 0.0, %v667
      %v669 = vpop.f32.mrb[0].mxu0
      %670 = vmatprep.mubr.bf16.mxu0 0
      %671 = vmatmul.mubr.bf16.gmra.mrb[0].mxu0 %v553
      %v672 = vpop.f32.mrb[0].mxu0
      %v673 = vadd.f32 0.0, %v672
      %v674 = vpop.f32.mrb[0].mxu0
      %v675 = vpop.f32.mrb[0].mxu0
      %v676 = vadd.f32 0.0, %v675
      %v677 = vpop.f32.mrb[0].mxu0
      %678 = vmatprep.mubr.bf16.mxu0 0
      %679 = vmatmul.mubr.bf16.gmra.mrb[0].mxu0 %v554
      %v680 = vpop.f32.mrb[0].mxu0
      %v681 = vadd.f32 0.0, %v680
      %v682 = vpop.f32.mrb[0].mxu0
      %v683 = vpop.f32.mrb[0].mxu0
      %v684 = vadd.f32 0.0, %v683
      %v685 = vpop.f32.mrb[0].mxu0
      %686 = vmatprep.mubr.bf16.mxu0 0
      %687 = vmatmul.mubr.bf16.gmra.mrb[0].mxu0 %v555
      %v688 = vpop.f32.mrb[0].mxu0
      %v689 = vadd.f32 0.0, %v688
      %v690 = vpop.f32.mrb[0].mxu0
      %v691 = vpop.f32.mrb[0].mxu0
      %v692 = vadd.f32 0.0, %v691
      %v693 = vpop.f32.mrb[0].mxu0
      %694 = vmatprep.mubr.bf16.mxu0 0
      %695 = vmatmul.mubr.bf16.gmra.mrb[0].mxu0 %v556
      %v696 = vpop.f32.mrb[0].mxu0
      %v697 = vadd.f32 0.0, %v696
      %v698 = vpop.f32.mrb[0].mxu0
      %v699 = vpop.f32.mrb[0].mxu0
      %v700 = vadd.f32 0.0, %v699
      %v701 = vpop.f32.mrb[0].mxu0
      %702 = vmatprep.mubr.bf16.mxu0 0
      %703 = vmatmul.mubr.bf16.gmra.mrb[0].mxu0 %v557
      %v704 = vpop.f32.mrb[0].mxu0
      %v705 = vadd.f32 0.0, %v704
      %v706 = vpop.f32.mrb[0].mxu0
      %v707 = vpop.f32.mrb[0].mxu0
      %v708 = vadd.f32 0.0, %v707
      %v709 = vpop.f32.mrb[0].mxu0
      %710 = vdwg.mxu0
      %v712 = vlaneseq
      %v713 = vshrl.u32 %v712, 7
      %v714 = vsub.s32 0, %v713
      %v715 = vrot.slane %v484, %v714
      %v717 = vmul.f32 %v649, %v715
      %v718 = vmul.f32 %v652, %v715
      %v719 = vmul.f32 %v657, %v715
      %v720 = vmul.f32 %v660, %v715
      %v721 = vmul.f32 %v665, %v715
      %v722 = vmul.f32 %v668, %v715
      %v723 = vmul.f32 %v673, %v715
      %v724 = vmul.f32 %v676, %v715
      %v725 = vmul.f32 %v681, %v715
      %v726 = vmul.f32 %v684, %v715
      %v727 = vmul.f32 %v689, %v715
      %v728 = vmul.f32 %v692, %v715
      %v729 = vmul.f32 %v697, %v715
      %v730 = vmul.f32 %v700, %v715
      %v731 = vmul.f32 %v705, %v715
      %v732 = vmul.f32 %v708, %v715
      %v733 = vld [vmem:[%s455] sm:$0xff]
      %v734 = vld [vmem:[%s455 + $0x8] sm:$0xff]
      %v735 = vld [vmem:[%s455 + $0x10] sm:$0xff]
      %v736 = vld [vmem:[%s455 + $0x18] sm:$0xff]
      %v737 = vld [vmem:[%s455 + $0x20] sm:$0xff]
      %v738 = vld [vmem:[%s455 + $0x28] sm:$0xff]
      %v739 = vld [vmem:[%s455 + $0x30] sm:$0xff]
      %v740 = vld [vmem:[%s455 + $0x38] sm:$0xff]
      %v741 = vld [vmem:[%s455 + $0x40] sm:$0xff]
      %v742 = vld [vmem:[%s455 + $0x48] sm:$0xff]
      %v743 = vld [vmem:[%s455 + $0x50] sm:$0xff]
      %v744 = vld [vmem:[%s455 + $0x58] sm:$0xff]
      %v745 = vld [vmem:[%s455 + $0x60] sm:$0xff]
      %v746 = vld [vmem:[%s455 + $0x68] sm:$0xff]
      %v747 = vld [vmem:[%s455 + $0x70] sm:$0xff]
      %v748 = vld [vmem:[%s455 + $0x78] sm:$0xff]
      %750 = vset.pattern.permute.xlu0 0
      %751 = vperm.xlu0 %750, %v733
      %v752 = vpop.permute.xlu0 %751
      %755 = vset.pattern.permute.xlu0 0
      %756 = vperm.xlu0 %755, %v734
      %v757 = vpop.permute.xlu0 %756
      %760 = vset.pattern.permute.xlu0 0
      %761 = vperm.xlu0 %760, %v735
      %v762 = vpop.permute.xlu0 %761
      %765 = vset.pattern.permute.xlu0 0
      %766 = vperm.xlu0 %765, %v736
      %v767 = vpop.permute.xlu0 %766
      %770 = vset.pattern.permute.xlu0 0
      %771 = vperm.xlu0 %770, %v737
      %v772 = vpop.permute.xlu0 %771
      %775 = vset.pattern.permute.xlu0 0
      %776 = vperm.xlu0 %775, %v738
      %v777 = vpop.permute.xlu0 %776
      %780 = vset.pattern.permute.xlu0 0
      %781 = vperm.xlu0 %780, %v739
      %v782 = vpop.permute.xlu0 %781
      %785 = vset.pattern.permute.xlu0 0
      %786 = vperm.xlu0 %785, %v740
      %v787 = vpop.permute.xlu0 %786
      %790 = vset.pattern.permute.xlu0 0
      %791 = vperm.xlu0 %790, %v741
      %v792 = vpop.permute.xlu0 %791
      %795 = vset.pattern.permute.xlu0 0
      %796 = vperm.xlu0 %795, %v742
      %v797 = vpop.permute.xlu0 %796
      %800 = vset.pattern.permute.xlu0 0
      %801 = vperm.xlu0 %800, %v743
      %v802 = vpop.permute.xlu0 %801
      %805 = vset.pattern.permute.xlu0 0
      %806 = vperm.xlu0 %805, %v744
      %v807 = vpop.permute.xlu0 %806
      %810 = vset.pattern.permute.xlu0 0
      %811 = vperm.xlu0 %810, %v745
      %v812 = vpop.permute.xlu0 %811
      %815 = vset.pattern.permute.xlu0 0
      %816 = vperm.xlu0 %815, %v746
      %v817 = vpop.permute.xlu0 %816
      %820 = vset.pattern.permute.xlu0 0
      %821 = vperm.xlu0 %820, %v747
      %v822 = vpop.permute.xlu0 %821
      %825 = vset.pattern.permute.xlu0 0
      %826 = vperm.xlu0 %825, %v748
      %v827 = vpop.permute.xlu0 %826
      %v830 = vlaneseq
      %v831 = vshrl.u32 %v830, 7
      %v832 = vsub.s32 0, %v831
      %v833 = vrot.slane %v485, %v832
      %v835 = vmul.f32 %v752, %v833
      %v836 = vmul.f32 %v757, %v833
      %v837 = vmul.f32 %v762, %v833
      %v838 = vmul.f32 %v767, %v833
      %v839 = vmul.f32 %v772, %v833
      %v840 = vmul.f32 %v777, %v833
      %v841 = vmul.f32 %v782, %v833
      %v842 = vmul.f32 %v787, %v833
      %v843 = vmul.f32 %v792, %v833
      %v844 = vmul.f32 %v797, %v833
      %v845 = vmul.f32 %v802, %v833
      %v846 = vmul.f32 %v807, %v833
      %v847 = vmul.f32 %v812, %v833
      %v848 = vmul.f32 %v817, %v833
      %v849 = vmul.f32 %v822, %v833
      %v850 = vmul.f32 %v827, %v833
      %v851 = vadd.f32 %v717, %v835
      %v852 = vadd.f32 %v718, %v836
      %v853 = vadd.f32 %v719, %v837
      %v854 = vadd.f32 %v720, %v838
      %v855 = vadd.f32 %v721, %v839
      %v856 = vadd.f32 %v722, %v840
      %v857 = vadd.f32 %v723, %v841
      %v858 = vadd.f32 %v724, %v842
      %v859 = vadd.f32 %v725, %v843
      %v860 = vadd.f32 %v726, %v844
      %v861 = vadd.f32 %v727, %v845
      %v862 = vadd.f32 %v728, %v846
      %v863 = vadd.f32 %v729, %v847
      %v864 = vadd.f32 %v730, %v848
      %v865 = vadd.f32 %v731, %v849
      %v866 = vadd.f32 %v732, %v850
      %s867 = sshra.s32 %s483, 3
      %s868 = sand.u32 %s483, 7
      %s869 = smul.addr %s867, 4
      %s870 = scalar_lea.vmem %s461, %s869
      %v871 = vld [vmem:[%s870] sm:$0xf]
      %v872 = vld [vmem:[%s870 + $0x4] sm:$0xf]
      %v873 = vld [vmem:[%s870 + $0x8] sm:$0xf]
      %v874 = vld [vmem:[%s870 + $0xc] sm:$0xf]
      %v875 = vld [vmem:[%s870 + $0x10] sm:$0xf]
      %v876 = vld [vmem:[%s870 + $0x14] sm:$0xf]
      %v877 = vld [vmem:[%s870 + $0x18] sm:$0xf]
      %v878 = vld [vmem:[%s870 + $0x1c] sm:$0xf]
      %v879 = vld [vmem:[%s870 + $0x20] sm:$0xf]
      %v880 = vld [vmem:[%s870 + $0x24] sm:$0xf]
      %v881 = vld [vmem:[%s870 + $0x28] sm:$0xf]
      %v882 = vld [vmem:[%s870 + $0x2c] sm:$0xf]
      %v883 = vld [vmem:[%s870 + $0x30] sm:$0xf]
      %v884 = vld [vmem:[%s870 + $0x34] sm:$0xf]
      %v885 = vld [vmem:[%s870 + $0x38] sm:$0xf]
      %v886 = vld [vmem:[%s870 + $0x3c] sm:$0xf]
      %v887 = vunpack.c.l.bf16 %v871
      %v888 = vunpack.c.l.bf16 %v872
      %v889 = vunpack.c.l.bf16 %v873
      %v890 = vunpack.c.l.bf16 %v874
      %v891 = vunpack.c.l.bf16 %v875
      %v892 = vunpack.c.l.bf16 %v876
      %v893 = vunpack.c.l.bf16 %v877
      %v894 = vunpack.c.l.bf16 %v878
      %v895 = vunpack.c.l.bf16 %v879
      %v896 = vunpack.c.l.bf16 %v880
      %v897 = vunpack.c.l.bf16 %v881
      %v898 = vunpack.c.l.bf16 %v882
      %v899 = vunpack.c.l.bf16 %v883
      %v900 = vunpack.c.l.bf16 %v884
      %v901 = vunpack.c.l.bf16 %v885
      %v902 = vunpack.c.l.bf16 %v886
      %v903 = vmul.f32 %v887, %v715
      %v904 = vmul.f32 %v888, %v715
      %v905 = vmul.f32 %v889, %v715
      %v906 = vmul.f32 %v890, %v715
      %v907 = vmul.f32 %v891, %v715
      %v908 = vmul.f32 %v892, %v715
      %v909 = vmul.f32 %v893, %v715
      %v910 = vmul.f32 %v894, %v715
      %v911 = vmul.f32 %v895, %v715
      %v912 = vmul.f32 %v896, %v715
      %v913 = vmul.f32 %v897, %v715
      %v914 = vmul.f32 %v898, %v715
      %v915 = vmul.f32 %v899, %v715
      %v916 = vmul.f32 %v900, %v715
      %v917 = vmul.f32 %v901, %v715
      %v918 = vmul.f32 %v902, %v715
      %v919 = vadd.f32 %v903, %v833
      %v920 = vadd.f32 %v904, %v833
      %v921 = vadd.f32 %v905, %v833
      %v922 = vadd.f32 %v906, %v833
      %v923 = vadd.f32 %v907, %v833
      %v924 = vadd.f32 %v908, %v833
      %v925 = vadd.f32 %v909, %v833
      %v926 = vadd.f32 %v910, %v833
      %v927 = vadd.f32 %v911, %v833
      %v928 = vadd.f32 %v912, %v833
      %v929 = vadd.f32 %v913, %v833
      %v930 = vadd.f32 %v914, %v833
      %v931 = vadd.f32 %v915, %v833
      %v932 = vadd.f32 %v916, %v833
      %v933 = vadd.f32 %v917, %v833
      %v934 = vadd.f32 %v918, %v833
      %v935 = vpack.c.bf16 %v852, %v851
      %v936 = vpack.c.bf16 %v854, %v853
      %v937 = vpack.c.bf16 %v856, %v855
      %v938 = vpack.c.bf16 %v858, %v857
      %v939 = vpack.c.bf16 %v860, %v859
      %v940 = vpack.c.bf16 %v862, %v861
      %v941 = vpack.c.bf16 %v864, %v863
      %v942 = vpack.c.bf16 %v866, %v865
      %v943 = vld [vmem:[%s5] sm:$0xf]
      %v944 = vld [vmem:[%s5 + $0x4] sm:$0xf]
      %v945 = vld [vmem:[%s5 + $0x8] sm:$0xf]
      %v946 = vld [vmem:[%s5 + $0xc] sm:$0xf]
      %v947 = vld [vmem:[%s5 + $0x10] sm:$0xf]
      %v948 = vld [vmem:[%s5 + $0x14] sm:$0xf]
      %v949 = vld [vmem:[%s5 + $0x18] sm:$0xf]
      %v950 = vld [vmem:[%s5 + $0x1c] sm:$0xf]
      %v951 = vld [vmem:[%s5 + $0x20] sm:$0xf]
      %v952 = vld [vmem:[%s5 + $0x24] sm:$0xf]
      %v953 = vld [vmem:[%s5 + $0x28] sm:$0xf]
      %v954 = vld [vmem:[%s5 + $0x2c] sm:$0xf]
      %v955 = vld [vmem:[%s5 + $0x30] sm:$0xf]
      %v956 = vld [vmem:[%s5 + $0x34] sm:$0xf]
      %v957 = vld [vmem:[%s5 + $0x38] sm:$0xf]
      %v958 = vld [vmem:[%s5 + $0x3c] sm:$0xf]
      %v959 = vpack.c.bf16 %v920, %v919
      %v960 = vpack.c.bf16 %v922, %v921
      %v961 = vpack.c.bf16 %v924, %v923
      %v962 = vpack.c.bf16 %v926, %v925
      %v963 = vpack.c.bf16 %v928, %v927
      %v964 = vpack.c.bf16 %v930, %v929
      %v965 = vpack.c.bf16 %v932, %v931
      %v966 = vpack.c.bf16 %v934, %v933
      %v967 = vld [vmem:[%s6] sm:$0xf]
      %v968 = vld [vmem:[%s6 + $0x4] sm:$0xf]
      %v969 = vld [vmem:[%s6 + $0x8] sm:$0xf]
      %v970 = vld [vmem:[%s6 + $0xc] sm:$0xf]
      %v971 = vld [vmem:[%s6 + $0x10] sm:$0xf]
      %v972 = vld [vmem:[%s6 + $0x14] sm:$0xf]
      %v973 = vld [vmem:[%s6 + $0x18] sm:$0xf]
      %v974 = vld [vmem:[%s6 + $0x1c] sm:$0xf]
      %v975 = vld [vmem:[%s6 + $0x20] sm:$0xf]
      %v976 = vld [vmem:[%s6 + $0x24] sm:$0xf]
      %v977 = vld [vmem:[%s6 + $0x28] sm:$0xf]
      %v978 = vld [vmem:[%s6 + $0x2c] sm:$0xf]
      %v979 = vld [vmem:[%s6 + $0x30] sm:$0xf]
      %v980 = vld [vmem:[%s6 + $0x34] sm:$0xf]
      %v981 = vld [vmem:[%s6 + $0x38] sm:$0xf]
      %v982 = vld [vmem:[%s6 + $0x3c] sm:$0xf]
      %v999 = vunpack.c.l.b16 %v967
      %v1000 = vunpack.c.l.b16 %v968
      %v1001 = vunpack.c.l.b16 %v969
      %v1002 = vunpack.c.l.b16 %v970
      %v1003 = vunpack.c.l.b16 %v971
      %v1004 = vunpack.c.l.b16 %v972
      %v1005 = vunpack.c.l.b16 %v973
      %v1006 = vunpack.c.l.b16 %v974
      %v1007 = vunpack.c.l.b16 %v975
      %v1008 = vunpack.c.l.b16 %v976
      %v1009 = vunpack.c.l.b16 %v977
      %v1010 = vunpack.c.l.b16 %v978
      %v1011 = vunpack.c.l.b16 %v979
      %v1012 = vunpack.c.l.b16 %v980
      %v1013 = vunpack.c.l.b16 %v981
      %v1014 = vunpack.c.l.b16 %v982
      %v1015 = vpack.c.b16 %v1000, %v999
      %v1016 = vpack.c.b16 %v1002, %v1001
      %v1017 = vpack.c.b16 %v1004, %v1003
      %v1018 = vpack.c.b16 %v1006, %v1005
      %v1019 = vpack.c.b16 %v1008, %v1007
      %v1020 = vpack.c.b16 %v1010, %v1009
      %v1021 = vpack.c.b16 %v1012, %v1011
      %v1022 = vpack.c.b16 %v1014, %v1013
      %1031 = vmatprep.subr.bf16.mxu0 0
      %1032 = vmatpush1.bf16.msra.mxu0 %v1015
      %1033 = vmatprep.subr.bf16.mxu0 0
      %1034 = vmatpush1.bf16.msra.mxu0 %v1016
      %1035 = vmatprep.subr.bf16.mxu0 0
      %1036 = vmatpush1.bf16.msra.mxu0 %v1017
      %1037 = vmatprep.subr.bf16.mxu0 0
      %1038 = vmatpush1.bf16.msra.mxu0 %v1018
      %1039 = vmatprep.subr.bf16.mxu0 0
      %1040 = vmatpush1.bf16.msra.mxu0 %v1019
      %1041 = vmatprep.subr.bf16.mxu0 0
      %1042 = vmatpush1.bf16.msra.mxu0 %v1020
      %1043 = vmatprep.subr.bf16.mxu0 0
      %1044 = vmatpush1.bf16.msra.mxu0 %v1021
      %1045 = vmatprep.subr.bf16.mxu0 0
      %1046 = vmatpush1.bf16.msra.mxu0 %v1022
      %1047 = vmatprep.subr.bf16.mxu0 0
      %1048 = vmatpush1.bf16.msra.mxu0 0
      %1049 = vmatprep.subr.bf16.mxu0 0
      %1050 = vmatpush1.bf16.msra.mxu0 0
      %1051 = vmatprep.subr.bf16.mxu0 0
      %1052 = vmatpush1.bf16.msra.mxu0 0
      %1053 = vmatprep.subr.bf16.mxu0 0
      %1054 = vmatpush1.bf16.msra.mxu0 0
      %1055 = vmatprep.subr.bf16.mxu0 0
      %1056 = vmatpush1.bf16.msra.mxu0 0
      %1057 = vmatprep.subr.bf16.mxu0 0
      %1058 = vmatpush1.bf16.msra.mxu0 0
      %1059 = vmatprep.subr.bf16.mxu0 0
      %1060 = vmatpush1.bf16.msra.mxu0 0
      %1061 = vmatprep.subr.bf16.mxu0 0
      %1062 = vmatpush1.bf16.msra.mxu0 0
      %1063 = vmatprep.mubr.bf16.mxu0 0
      %1064 = vmatmul.mubr.bf16.gmra.mrb[0].mxu0 %v959
      %v1065 = vpop.f32.mrb[0].mxu0
      %v1066 = vadd.f32 0.0, %v1065
      %v1067 = vpop.f32.mrb[0].mxu0
      %v1068 = vpop.f32.mrb[0].mxu0
      %v1069 = vadd.f32 0.0, %v1068
      %v1070 = vpop.f32.mrb[0].mxu0
      %1071 = vmatprep.mubr.bf16.mxu0 0
      %1072 = vmatmul.mubr.bf16.gmra.mrb[0].mxu0 %v960
      %v1073 = vpop.f32.mrb[0].mxu0
      %v1074 = vadd.f32 0.0, %v1073
      %v1075 = vpop.f32.mrb[0].mxu0
      %v1076 = vpop.f32.mrb[0].mxu0
      %v1077 = vadd.f32 0.0, %v1076
      %v1078 = vpop.f32.mrb[0].mxu0
      %1079 = vmatprep.mubr.bf16.mxu0 0
      %1080 = vmatmul.mubr.bf16.gmra.mrb[0].mxu0 %v961
      %v1081 = vpop.f32.mrb[0].mxu0
      %v1082 = vadd.f32 0.0, %v1081
      %v1083 = vpop.f32.mrb[0].mxu0
      %v1084 = vpop.f32.mrb[0].mxu0
      %v1085 = vadd.f32 0.0, %v1084
      %v1086 = vpop.f32.mrb[0].mxu0
      %1087 = vmatprep.mubr.bf16.mxu0 0
      %1088 = vmatmul.mubr.bf16.gmra.mrb[0].mxu0 %v962
      %v1089 = vpop.f32.mrb[0].mxu0
      %v1090 = vadd.f32 0.0, %v1089
      %v1091 = vpop.f32.mrb[0].mxu0
      %v1092 = vpop.f32.mrb[0].mxu0
      %v1093 = vadd.f32 0.0, %v1092
      %v1094 = vpop.f32.mrb[0].mxu0
      %1095 = vmatprep.mubr.bf16.mxu0 0
      %1096 = vmatmul.mubr.bf16.gmra.mrb[0].mxu0 %v963
      %v1097 = vpop.f32.mrb[0].mxu0
      %v1098 = vadd.f32 0.0, %v1097
      %v1099 = vpop.f32.mrb[0].mxu0
      %v1100 = vpop.f32.mrb[0].mxu0
      %v1101 = vadd.f32 0.0, %v1100
      %v1102 = vpop.f32.mrb[0].mxu0
      %1103 = vmatprep.mubr.bf16.mxu0 0
      %1104 = vmatmul.mubr.bf16.gmra.mrb[0].mxu0 %v964
      %v1105 = vpop.f32.mrb[0].mxu0
      %v1106 = vadd.f32 0.0, %v1105
      %v1107 = vpop.f32.mrb[0].mxu0
      %v1108 = vpop.f32.mrb[0].mxu0
      %v1109 = vadd.f32 0.0, %v1108
      %v1110 = vpop.f32.mrb[0].mxu0
      %1111 = vmatprep.mubr.bf16.mxu0 0
      %1112 = vmatmul.mubr.bf16.gmra.mrb[0].mxu0 %v965
      %v1113 = vpop.f32.mrb[0].mxu0
      %v1114 = vadd.f32 0.0, %v1113
      %v1115 = vpop.f32.mrb[0].mxu0
      %v1116 = vpop.f32.mrb[0].mxu0
      %v1117 = vadd.f32 0.0, %v1116
      %v1118 = vpop.f32.mrb[0].mxu0
      %1119 = vmatprep.mubr.bf16.mxu0 0
      %1120 = vmatmul.mubr.bf16.gmra.mrb[0].mxu0 %v966
      %v1121 = vpop.f32.mrb[0].mxu0
      %v1122 = vadd.f32 0.0, %v1121
      %v1123 = vpop.f32.mrb[0].mxu0
      %v1124 = vpop.f32.mrb[0].mxu0
      %v1125 = vadd.f32 0.0, %v1124
      %v1126 = vpop.f32.mrb[0].mxu0
      %1127 = vdwg.mxu0
      %v1144 = vunpack.c.l.b16 %v943
      %v1145 = vunpack.c.l.b16 %v944
      %v1146 = vunpack.c.l.b16 %v945
      %v1147 = vunpack.c.l.b16 %v946
      %v1148 = vunpack.c.l.b16 %v947
      %v1149 = vunpack.c.l.b16 %v948
      %v1150 = vunpack.c.l.b16 %v949
      %v1151 = vunpack.c.l.b16 %v950
      %v1152 = vunpack.c.l.b16 %v951
      %v1153 = vunpack.c.l.b16 %v952
      %v1154 = vunpack.c.l.b16 %v953
      %v1155 = vunpack.c.l.b16 %v954
      %v1156 = vunpack.c.l.b16 %v955
      %v1157 = vunpack.c.l.b16 %v956
      %v1158 = vunpack.c.l.b16 %v957
      %v1159 = vunpack.c.l.b16 %v958
      %v1160 = vpack.c.b16 %v1145, %v1144
      %v1161 = vpack.c.b16 %v1147, %v1146
      %v1162 = vpack.c.b16 %v1149, %v1148
      %v1163 = vpack.c.b16 %v1151, %v1150
      %v1164 = vpack.c.b16 %v1153, %v1152
      %v1165 = vpack.c.b16 %v1155, %v1154
      %v1166 = vpack.c.b16 %v1157, %v1156
      %v1167 = vpack.c.b16 %v1159, %v1158
      %1176 = vmatprep.subr.bf16.mxu0 0
      %1177 = vmatpush1.bf16.msra.mxu0 %v1160
      %1178 = vmatprep.subr.bf16.mxu0 0
      %1179 = vmatpush1.bf16.msra.mxu0 %v1161
      %1180 = vmatprep.subr.bf16.mxu0 0
      %1181 = vmatpush1.bf16.msra.mxu0 %v1162
      %1182 = vmatprep.subr.bf16.mxu0 0
      %1183 = vmatpush1.bf16.msra.mxu0 %v1163
      %1184 = vmatprep.subr.bf16.mxu0 0
      %1185 = vmatpush1.bf16.msra.mxu0 %v1164
      %1186 = vmatprep.subr.bf16.mxu0 0
      %1187 = vmatpush1.bf16.msra.mxu0 %v1165
      %1188 = vmatprep.subr.bf16.mxu0 0
      %1189 = vmatpush1.bf16.msra.mxu0 %v1166
      %1190 = vmatprep.subr.bf16.mxu0 0
      %1191 = vmatpush1.bf16.msra.mxu0 %v1167
      %1192 = vmatprep.subr.bf16.mxu0 0
      %1193 = vmatpush1.bf16.msra.mxu0 0
      %1194 = vmatprep.subr.bf16.mxu0 0
      %1195 = vmatpush1.bf16.msra.mxu0 0
      %1196 = vmatprep.subr.bf16.mxu0 0
      %1197 = vmatpush1.bf16.msra.mxu0 0
      %1198 = vmatprep.subr.bf16.mxu0 0
      %1199 = vmatpush1.bf16.msra.mxu0 0
      %1200 = vmatprep.subr.bf16.mxu0 0
      %1201 = vmatpush1.bf16.msra.mxu0 0
      %1202 = vmatprep.subr.bf16.mxu0 0
      %1203 = vmatpush1.bf16.msra.mxu0 0
      %1204 = vmatprep.subr.bf16.mxu0 0
      %1205 = vmatpush1.bf16.msra.mxu0 0
      %1206 = vmatprep.subr.bf16.mxu0 0
      %1207 = vmatpush1.bf16.msra.mxu0 0
      %1208 = vmatprep.mubr.bf16.mxu0 0
      %1209 = vmatmul.mubr.bf16.gmra.mrb[0].mxu0 %v935
      %v1210 = vpop.f32.mrb[0].mxu0
      %v1211 = vadd.f32 %v1066, %v1210
      %v1212 = vpop.f32.mrb[0].mxu0
      %v1213 = vpop.f32.mrb[0].mxu0
      %v1214 = vadd.f32 %v1069, %v1213
      %v1215 = vpop.f32.mrb[0].mxu0
      %1216 = vmatprep.mubr.bf16.mxu0 0
      %1217 = vmatmul.mubr.bf16.gmra.mrb[0].mxu0 %v936
      %v1218 = vpop.f32.mrb[0].mxu0
      %v1219 = vadd.f32 %v1074, %v1218
      %v1220 = vpop.f32.mrb[0].mxu0
      %v1221 = vpop.f32.mrb[0].mxu0
      %v1222 = vadd.f32 %v1077, %v1221
      %v1223 = vpop.f32.mrb[0].mxu0
      %1224 = vmatprep.mubr.bf16.mxu0 0
      %1225 = vmatmul.mubr.bf16.gmra.mrb[0].mxu0 %v937
      %v1226 = vpop.f32.mrb[0].mxu0
      %v1227 = vadd.f32 %v1082, %v1226
      %v1228 = vpop.f32.mrb[0].mxu0
      %v1229 = vpop.f32.mrb[0].mxu0
      %v1230 = vadd.f32 %v1085, %v1229
      %v1231 = vpop.f32.mrb[0].mxu0
      %1232 = vmatprep.mubr.bf16.mxu0 0
      %1233 = vmatmul.mubr.bf16.gmra.mrb[0].mxu0 %v938
      %v1234 = vpop.f32.mrb[0].mxu0
      %v1235 = vadd.f32 %v1090, %v1234
      %v1236 = vpop.f32.mrb[0].mxu0
      %v1237 = vpop.f32.mrb[0].mxu0
      %v1238 = vadd.f32 %v1093, %v1237
      %v1239 = vpop.f32.mrb[0].mxu0
      %1240 = vmatprep.mubr.bf16.mxu0 0
      %1241 = vmatmul.mubr.bf16.gmra.mrb[0].mxu0 %v939
      %v1242 = vpop.f32.mrb[0].mxu0
      %v1243 = vadd.f32 %v1098, %v1242
      %v1244 = vpop.f32.mrb[0].mxu0
      %v1245 = vpop.f32.mrb[0].mxu0
      %v1246 = vadd.f32 %v1101, %v1245
      %v1247 = vpop.f32.mrb[0].mxu0
      %1248 = vmatprep.mubr.bf16.mxu0 0
      %1249 = vmatmul.mubr.bf16.gmra.mrb[0].mxu0 %v940
      %v1250 = vpop.f32.mrb[0].mxu0
      %v1251 = vadd.f32 %v1106, %v1250
      %v1252 = vpop.f32.mrb[0].mxu0
      %v1253 = vpop.f32.mrb[0].mxu0
      %v1254 = vadd.f32 %v1109, %v1253
      %v1255 = vpop.f32.mrb[0].mxu0
      %1256 = vmatprep.mubr.bf16.mxu0 0
      %1257 = vmatmul.mubr.bf16.gmra.mrb[0].mxu0 %v941
      %v1258 = vpop.f32.mrb[0].mxu0
      %v1259 = vadd.f32 %v1114, %v1258
      %v1260 = vpop.f32.mrb[0].mxu0
      %v1261 = vpop.f32.mrb[0].mxu0
      %v1262 = vadd.f32 %v1117, %v1261
      %v1263 = vpop.f32.mrb[0].mxu0
      %1264 = vmatprep.mubr.bf16.mxu0 0
      %1265 = vmatmul.mubr.bf16.gmra.mrb[0].mxu0 %v942
      %v1266 = vpop.f32.mrb[0].mxu0
      %v1267 = vadd.f32 %v1122, %v1266
      %v1268 = vpop.f32.mrb[0].mxu0
      %v1269 = vpop.f32.mrb[0].mxu0
      %v1270 = vadd.f32 %v1125, %v1269
      %v1271 = vpop.f32.mrb[0].mxu0
      %1272 = vdwg.mxu0
      %v1273 = vld [vmem:[%s7] sm:$0x1]
      %v1275 = vlaneseq
      %v1276 = vshrl.u32 %v1275, 7
      %v1277 = vsub.s32 0, %v1276
      %v1278 = vrot.slane %v1273, %v1277
      %v1280 = vadd.f32 %v1211, %v1278
      %v1281 = vadd.f32 %v1214, %v1278
      %v1282 = vadd.f32 %v1219, %v1278
      %v1283 = vadd.f32 %v1222, %v1278
      %v1284 = vadd.f32 %v1227, %v1278
      %v1285 = vadd.f32 %v1230, %v1278
      %v1286 = vadd.f32 %v1235, %v1278
      %v1287 = vadd.f32 %v1238, %v1278
      %v1288 = vadd.f32 %v1243, %v1278
      %v1289 = vadd.f32 %v1246, %v1278
      %v1290 = vadd.f32 %v1251, %v1278
      %v1291 = vadd.f32 %v1254, %v1278
      %v1292 = vadd.f32 %v1259, %v1278
      %v1293 = vadd.f32 %v1262, %v1278
      %v1294 = vadd.f32 %v1267, %v1278
      %v1295 = vadd.f32 %v1270, %v1278
      %v1296 = vmax.f32 %v1280, 0.0
      %v1297 = vmax.f32 %v1281, 0.0
      %v1298 = vmax.f32 %v1282, 0.0
      %v1299 = vmax.f32 %v1283, 0.0
      %v1300 = vmax.f32 %v1284, 0.0
      %v1301 = vmax.f32 %v1285, 0.0
      %v1302 = vmax.f32 %v1286, 0.0
      %v1303 = vmax.f32 %v1287, 0.0
      %v1304 = vmax.f32 %v1288, 0.0
      %v1305 = vmax.f32 %v1289, 0.0
      %v1306 = vmax.f32 %v1290, 0.0
      %v1307 = vmax.f32 %v1291, 0.0
      %v1308 = vmax.f32 %v1292, 0.0
      %v1309 = vmax.f32 %v1293, 0.0
      %v1310 = vmax.f32 %v1294, 0.0
      %v1311 = vmax.f32 %v1295, 0.0
      %v1312 = vpack.c.bf16 %v1297, %v1296
      %v1313 = vpack.c.bf16 %v1299, %v1298
      %v1314 = vpack.c.bf16 %v1301, %v1300
      %v1315 = vpack.c.bf16 %v1303, %v1302
      %v1316 = vpack.c.bf16 %v1305, %v1304
      %v1317 = vpack.c.bf16 %v1307, %v1306
      %v1318 = vpack.c.bf16 %v1309, %v1308
      %v1319 = vpack.c.bf16 %v1311, %v1310
      %v1328 = vunpack.c.l.b16 %v1312
      %v1329 = vunpack.c.h.b16 %v1312
      %v1330 = vunpack.c.l.b16 %v1313
      %v1331 = vunpack.c.h.b16 %v1313
      %v1332 = vunpack.c.l.b16 %v1314
      %v1333 = vunpack.c.h.b16 %v1314
      %v1334 = vunpack.c.l.b16 %v1315
      %v1335 = vunpack.c.h.b16 %v1315
      %v1336 = vunpack.c.l.b16 %v1316
      %v1337 = vunpack.c.h.b16 %v1316
      %v1338 = vunpack.c.l.b16 %v1317
      %v1339 = vunpack.c.h.b16 %v1317
      %v1340 = vunpack.c.l.b16 %v1318
      %v1341 = vunpack.c.h.b16 %v1318
      %v1342 = vunpack.c.l.b16 %v1319
      %v1343 = vunpack.c.h.b16 %v1319
      %v1344 = vpack.c.b16 %v1328, %v1328
      %v1345 = vpack.c.b16 %v1329, %v1329
      %v1346 = vpack.c.b16 %v1330, %v1330
      %v1347 = vpack.c.b16 %v1331, %v1331
      %v1348 = vpack.c.b16 %v1332, %v1332
      %v1349 = vpack.c.b16 %v1333, %v1333
      %v1350 = vpack.c.b16 %v1334, %v1334
      %v1351 = vpack.c.b16 %v1335, %v1335
      %v1352 = vpack.c.b16 %v1336, %v1336
      %v1353 = vpack.c.b16 %v1337, %v1337
      %v1354 = vpack.c.b16 %v1338, %v1338
      %v1355 = vpack.c.b16 %v1339, %v1339
      %v1356 = vpack.c.b16 %v1340, %v1340
      %v1357 = vpack.c.b16 %v1341, %v1341
      %v1358 = vpack.c.b16 %v1342, %v1342
      %v1359 = vpack.c.b16 %v1343, %v1343
      %1376 = vst [vmem:[%s470] sm:$0xf] %v1344
      %1377 = vst [vmem:[%s470 + $0x4] sm:$0xf] %v1345
      %1378 = vst [vmem:[%s470 + $0x8] sm:$0xf] %v1346
      %1379 = vst [vmem:[%s470 + $0xc] sm:$0xf] %v1347
      %1380 = vst [vmem:[%s470 + $0x10] sm:$0xf] %v1348
      %1381 = vst [vmem:[%s470 + $0x14] sm:$0xf] %v1349
      %1382 = vst [vmem:[%s470 + $0x18] sm:$0xf] %v1350
      %1383 = vst [vmem:[%s470 + $0x1c] sm:$0xf] %v1351
      %1384 = vst [vmem:[%s470 + $0x20] sm:$0xf] %v1352
      %1385 = vst [vmem:[%s470 + $0x24] sm:$0xf] %v1353
      %1386 = vst [vmem:[%s470 + $0x28] sm:$0xf] %v1354
      %1387 = vst [vmem:[%s470 + $0x2c] sm:$0xf] %v1355
      %1388 = vst [vmem:[%s470 + $0x30] sm:$0xf] %v1356
      %1389 = vst [vmem:[%s470 + $0x34] sm:$0xf] %v1357
      %1390 = vst [vmem:[%s470 + $0x38] sm:$0xf] %v1358
      %1391 = vst [vmem:[%s470 + $0x3c] sm:$0xf] %v1359
      %v1392 = vlaneseq
      %v1393 = vshrl.u32 %v1392, 7
      %v1394 = vadd.s32 %v1393, 8
      %v1395 = vadd.s32 %v1393, 16
      %v1396 = vadd.s32 %v1393, 24
      %v1397 = vadd.s32 %v1393, 32
      %v1398 = vadd.s32 %v1393, 40
      %v1399 = vadd.s32 %v1393, 48
      %v1400 = vadd.s32 %v1393, 56
      %v1401 = vadd.s32 %v1393, 64
      %v1402 = vadd.s32 %v1393, 72
      %v1403 = vadd.s32 %v1393, 80
      %v1404 = vadd.s32 %v1393, 88
      %v1405 = vadd.s32 %v1393, 96
      %v1406 = vadd.s32 %v1393, 104
      %v1407 = vadd.s32 %v1393, 112
      %v1408 = vadd.s32 %v1393, 120
      %v1409 = vstv %s483
      %v1410 = vadd.s32 %v1409, %v1393
      %v1411 = vadd.s32 %v1409, %v1394
      %v1412 = vadd.s32 %v1409, %v1395
      %v1413 = vadd.s32 %v1409, %v1396
      %v1414 = vadd.s32 %v1409, %v1397
      %v1415 = vadd.s32 %v1409, %v1398
      %v1416 = vadd.s32 %v1409, %v1399
      %v1417 = vadd.s32 %v1409, %v1400
      %v1418 = vadd.s32 %v1409, %v1401
      %v1419 = vadd.s32 %v1409, %v1402
      %v1420 = vadd.s32 %v1409, %v1403
      %v1421 = vadd.s32 %v1409, %v1404
      %v1422 = vadd.s32 %v1409, %v1405
      %v1423 = vadd.s32 %v1409, %v1406
      %v1424 = vadd.s32 %v1409, %v1407
      %v1425 = vadd.s32 %v1409, %v1408
      %vm1426 = vcmp.lt.s32.totalorder %v1410, 8
      %vm1427 = vcmp.lt.s32.totalorder %v1411, 8
      %vm1428 = vcmp.lt.s32.totalorder %v1412, 8
      %vm1429 = vcmp.lt.s32.totalorder %v1413, 8
      %vm1430 = vcmp.lt.s32.totalorder %v1414, 8
      %vm1431 = vcmp.lt.s32.totalorder %v1415, 8
      %vm1432 = vcmp.lt.s32.totalorder %v1416, 8
      %vm1433 = vcmp.lt.s32.totalorder %v1417, 8
      %vm1434 = vcmp.lt.s32.totalorder %v1418, 8
      %vm1435 = vcmp.lt.s32.totalorder %v1419, 8
      %vm1436 = vcmp.lt.s32.totalorder %v1420, 8
      %vm1437 = vcmp.lt.s32.totalorder %v1421, 8
      %vm1438 = vcmp.lt.s32.totalorder %v1422, 8
      %vm1439 = vcmp.lt.s32.totalorder %v1423, 8
      %vm1440 = vcmp.lt.s32.totalorder %v1424, 8
      %vm1441 = vcmp.lt.s32.totalorder %v1425, 8
      %v1442 = vsel %vm1426, 1.0, 0.0
      %v1443 = vsel %vm1427, 1.0, 0.0
      %v1444 = vsel %vm1428, 1.0, 0.0
      %v1445 = vsel %vm1429, 1.0, 0.0
      %v1446 = vsel %vm1430, 1.0, 0.0
      %v1447 = vsel %vm1431, 1.0, 0.0
      %v1448 = vsel %vm1432, 1.0, 0.0
      %v1449 = vsel %vm1433, 1.0, 0.0
      %v1450 = vsel %vm1434, 1.0, 0.0
      %v1451 = vsel %vm1435, 1.0, 0.0
      %v1452 = vsel %vm1436, 1.0, 0.0
      %v1453 = vsel %vm1437, 1.0, 0.0
      %v1454 = vsel %vm1438, 1.0, 0.0
      %v1455 = vsel %vm1439, 1.0, 0.0
      %v1456 = vsel %vm1440, 1.0, 0.0
      %v1457 = vsel %vm1441, 1.0, 0.0
      %v1458 = vmul.f32 %v1296, %v1442
      %v1459 = vmul.f32 %v1297, %v1443
      %v1460 = vmul.f32 %v1298, %v1444
      %v1461 = vmul.f32 %v1299, %v1445
      %v1462 = vmul.f32 %v1300, %v1446
      %v1463 = vmul.f32 %v1301, %v1447
      %v1464 = vmul.f32 %v1302, %v1448
      %v1465 = vmul.f32 %v1303, %v1449
      %v1466 = vmul.f32 %v1304, %v1450
      %v1467 = vmul.f32 %v1305, %v1451
      %v1468 = vmul.f32 %v1306, %v1452
      %v1469 = vmul.f32 %v1307, %v1453
      %v1470 = vmul.f32 %v1308, %v1454
      %v1471 = vmul.f32 %v1309, %v1455
      %v1472 = vmul.f32 %v1310, %v1456
      %v1473 = vmul.f32 %v1311, %v1457
      %v1474 = vadd.f32 %v1458, %v1459
      %v1475 = vadd.f32 %v1474, %v1460
      %v1476 = vadd.f32 %v1475, %v1461
      %v1477 = vadd.f32 %v1476, %v1462
      %v1478 = vadd.f32 %v1477, %v1463
      %v1479 = vadd.f32 %v1478, %v1464
      %v1480 = vadd.f32 %v1479, %v1465
      %v1481 = vadd.f32 %v1480, %v1466
      %v1482 = vadd.f32 %v1481, %v1467
      %v1483 = vadd.f32 %v1482, %v1468
      %v1484 = vadd.f32 %v1483, %v1469
      %v1485 = vadd.f32 %v1484, %v1470
      %v1486 = vadd.f32 %v1485, %v1471
      %v1487 = vadd.f32 %v1486, %v1472
      %v1488 = vadd.f32 %v1487, %v1473
      %v1489 = vrot.slane %v1488, 4
      %v1490 = vadd.f32 %v1488, %v1489
      %v1491 = vrot.slane %v1490, 2
      %v1492 = vadd.f32 %v1490, %v1491
      %v1493 = vrot.slane %v1492, 1
      %v1494 = vadd.f32 %v1492, %v1493
      %1495 = vst [vmem:[%s475] sm:$0x1] %v1494
      %v1496 = vmul.f32 %v1458, %v1296
      %v1497 = vmul.f32 %v1459, %v1297
      %v1498 = vmul.f32 %v1460, %v1298
      %v1499 = vmul.f32 %v1461, %v1299
      %v1500 = vmul.f32 %v1462, %v1300
      %v1501 = vmul.f32 %v1463, %v1301
      %v1502 = vmul.f32 %v1464, %v1302
      %v1503 = vmul.f32 %v1465, %v1303
      %v1504 = vmul.f32 %v1466, %v1304
      %v1505 = vmul.f32 %v1467, %v1305
      %v1506 = vmul.f32 %v1468, %v1306
      %v1507 = vmul.f32 %v1469, %v1307
      %v1508 = vmul.f32 %v1470, %v1308
      %v1509 = vmul.f32 %v1471, %v1309
      %v1510 = vmul.f32 %v1472, %v1310
      %v1511 = vmul.f32 %v1473, %v1311
      %v1512 = vadd.f32 %v1496, %v1497
      %v1513 = vadd.f32 %v1512, %v1498
      %v1514 = vadd.f32 %v1513, %v1499
      %v1515 = vadd.f32 %v1514, %v1500
      %v1516 = vadd.f32 %v1515, %v1501
      %v1517 = vadd.f32 %v1516, %v1502
      %v1518 = vadd.f32 %v1517, %v1503
      %v1519 = vadd.f32 %v1518, %v1504
      %v1520 = vadd.f32 %v1519, %v1505
      %v1521 = vadd.f32 %v1520, %v1506
      %v1522 = vadd.f32 %v1521, %v1507
      %v1523 = vadd.f32 %v1522, %v1508
      %v1524 = vadd.f32 %v1523, %v1509
      %v1525 = vadd.f32 %v1524, %v1510
      %v1526 = vadd.f32 %v1525, %v1511
      %v1527 = vrot.slane %v1526, 4
      %v1528 = vadd.f32 %v1526, %v1527
      %v1529 = vrot.slane %v1528, 2
      %v1530 = vadd.f32 %v1528, %v1529
      %v1531 = vrot.slane %v1530, 1
      %v1532 = vadd.f32 %v1530, %v1531
      %1533 = vst [vmem:[%s480] sm:$0x1] %v1532
      %s1534 = smul.u32 16, %s27
      %p1535 = scmp.lt.s32.totalorder %s26, 1
      %s1536 = scalar_select %p1535, %s26, 1
      %p1537 = scmp.lt.s32.totalorder %s1534, 15
      %s1538 = scalar_select %p1537, %s1534, 15
      %s1539 = smul.addr %s1536, 16
      %s1540 = sadd.s32 %s1538, %s1539
      %s1541 = smul.addr %s1540, 4
      %s1542 = scalar_lea.vmem %s8, %s1541
      %s1543 = sadd.s32 %s26, %s27
      %p1544 = scmp.lt.s32.totalorder %s1543, 1
      %s1545 = scalar_select %p1544, %s1543, 1
      %s1546 = scalar_lea.vmem %s9, %s1545
      %s1547 = sadd.s32 %s26, %s27
      %p1548 = scmp.lt.s32.totalorder %s1547, 1
      %s1549 = scalar_select %p1548, %s1547, 1
      %s1550 = scalar_lea.vmem %s10, %s1549
      // Predicated region
      $region53: #{gcn_forward.4} parent=51 // pred_check
        %p1551 = pneg %p241
      $region54: #{gcn_forward.4} parent=51 // pred_check_branch
        %1553 = sbr.rel (%p1551) target = $region56
      $region55: #{gcn_forward.4} parent=51 // pred_region
        %s1554 = smul.u32 16, %s27
      $region56: #{gcn_forward.4} parent=51 // pred_fallthru
        _
      // Predicated region
      $region57: #{gcn_forward.4} parent=51 // pred_check
        %p1555 = pneg %p269
      $region58: #{gcn_forward.4} parent=51 // pred_check_branch
        %1557 = sbr.rel (%p1555) target = $region60
      $region59: #{gcn_forward.4} parent=51 // pred_region
        %s1558 = sadd.s32 %s26, %s27
      $region60: #{gcn_forward.4} parent=51 // pred_fallthru
        _
      // Predicated region
      $region61: #{gcn_forward.4} parent=51 // pred_check
        %p1559 = pneg %p297
      $region62: #{gcn_forward.4} parent=51 // pred_check_branch
        %1561 = sbr.rel (%p1559) target = $region64
      $region63: #{gcn_forward.4} parent=51 // pred_region
        %s1562 = sadd.s32 %s26, %s27
      $region64: #{gcn_forward.4} parent=51 // pred_fallthru
        _
    $region52: #{gcn_forward.4} parent=5 // pred_fallthru
      _
    %p1563 = scmp.le.s32.totalorder 2, %s17
    // Predicated region
    $region65: #{gcn_forward.4} parent=5 // pred_check
      %p1564 = pneg %p1563
    $region66: #{gcn_forward.4} parent=5 // pred_check_branch
      %1566 = sbr.rel (%p1564) target = $region68
    $region67: #{gcn_forward.4} parent=5 // pred_region
      %s1567 = ssub.s32 %s17, 2
      // Predicated region
      $region69: #{gcn_forward.4} parent=67 // pred_check
        %p1568 = pneg %p247
      $region70: #{gcn_forward.4} parent=67 // pred_check_branch
        %1570 = sbr.rel (%p1568) target = $region72
      $region71: #{gcn_forward.4} parent=67 // pred_region
        %s1571 = smul.u32 16, %s29
        %p1572 = scmp.lt.s32.totalorder %s28, 1
        %s1573 = scalar_select %p1572, %s28, 1
        %p1574 = scmp.lt.s32.totalorder %s1571, 15
        %s1575 = scalar_select %p1574, %s1571, 15
        %s1576 = smul.addr %s1573, 16
        %s1577 = sadd.s32 %s1575, %s1576
        %s1578 = smul.addr %s1577, 4
        %s1579 = scalar_lea.vmem %s8, %s1578
      $region72: #{gcn_forward.4} parent=67 // pred_fallthru
        _
      // Predicated region
      $region73: #{gcn_forward.4} parent=67 // pred_check
        %p1580 = pneg %p275
      $region74: #{gcn_forward.4} parent=67 // pred_check_branch
        %1582 = sbr.rel (%p1580) target = $region76
      $region75: #{gcn_forward.4} parent=67 // pred_region
        %s1583 = sadd.s32 %s28, %s29
        %p1584 = scmp.lt.s32.totalorder %s1583, 1
        %s1585 = scalar_select %p1584, %s1583, 1
        %s1586 = scalar_lea.vmem %s9, %s1585
      $region76: #{gcn_forward.4} parent=67 // pred_fallthru
        _
      // Predicated region
      $region77: #{gcn_forward.4} parent=67 // pred_check
        %p1587 = pneg %p303
      $region78: #{gcn_forward.4} parent=67 // pred_check_branch
        %1589 = sbr.rel (%p1587) target = $region80
      $region79: #{gcn_forward.4} parent=67 // pred_region
        %s1590 = sadd.s32 %s28, %s29
        %p1591 = scmp.lt.s32.totalorder %s1590, 1
        %s1592 = scalar_select %p1591, %s1590, 1
        %s1593 = scalar_lea.vmem %s10, %s1592
      $region80: #{gcn_forward.4} parent=67 // pred_fallthru
        _
    $region68: #{gcn_forward.4} parent=5 // pred_fallthru
      _
  $region6: #{gcn_forward.4} parent=0 // loop_footer
    %s21 = sadd.s32 1, %s17
  $region7: #{gcn_forward.4} parent=0 // loop_footer_branch
    %16 = sbr.rel target = $region3
  $region8: #{gcn_forward.4} parent=0 // loop_exit
    _

</llo_original>
